<compile_context>
chip_gen: v7x
topology: tpu7x:2x2x1
jax: 0.10.0
libtpu: 0.0.40
codegen_flags: <defaults>
</compile_context>

<pallas_src>
import functools

import jax
import jax.numpy as jnp
from jax.experimental import pallas as pl
from jax.experimental.pallas import tpu as pltpu

# bf16 MXU inputs (f32 accumulation kept via preferred_element_type) — ~4x
# matmul throughput on v6e/v7x and half the VMEM / HBM traffic for weights.
# Set to jnp.float32 for closest bit-level parity with PyTorch.
_MATMUL_DTYPE = jnp.bfloat16

# PyTorch uses -inf for key_padding_mask (NaN for fully-masked rows); we use a
# large finite negative instead (uniform attention for fully-masked rows).
_MASK_VALUE = -1e30
_LN_EPS = 1e-5


def _default_vmem_limit():
    """Generation-aware scoped-VMEM budget (48 MiB v7x, ~96 MiB v5e/v6e)."""
    try:
        cap = getattr(pltpu.get_tpu_info(), "vmem_capacity_bytes", None)
        if cap:
            return int(min(cap * 3 // 4, 96 * 1024 * 1024))
    except Exception:
        pass
    return 48 * 1024 * 1024


_VMEM_LIMIT = _default_vmem_limit()


def _row_block(total, target):
    """Sublane (row) block: <= target and a multiple of 8, or the full dim."""
    if total <= target:
        return total
    t = (target // 8) * 8
    return t if t > 0 else total


def _lane_block(total, target):
    """Lane block: <= target and a multiple of 128, or the full dim."""
    if total <= target or total % 128 != 0:
        return total
    t = (target // 128) * 128
    return t if t > 0 else total


# ----------------------------------------------------------------------------
# Kernels
# ----------------------------------------------------------------------------
def _matmul_bias_kernel(x_ref, wt_ref, b_ref, o_ref, *, activation,
                        compute_dtype):
    # y = x @ W^T + b  (wt is pre-transposed), optional ReLU.
    x = x_ref[...].astype(compute_dtype)
    w = wt_ref[...].astype(compute_dtype)
    y = jnp.dot(x, w, preferred_element_type=jnp.float32)
    y = y + b_ref[...].astype(jnp.float32)
    if activation == "relu":
        y = jnp.maximum(y, 0.0)
    o_ref[...] = y.astype(o_ref.dtype)


def _matmul_add_ln_kernel(x_ref, wt_ref, b_ref, res_ref, g_ref, beta_ref,
                          o_ref, *, eps, compute_dtype):
    # y = LayerNorm((x @ W^T + b) + residual)   (PyTorch biased variance)
    x = x_ref[...].astype(compute_dtype)
    w = wt_ref[...].astype(compute_dtype)
    h = jnp.dot(x, w, preferred_element_type=jnp.float32)
    h = h + b_ref[...].astype(jnp.float32) + res_ref[...].astype(jnp.float32)
    mean = jnp.mean(h, axis=-1, keepdims=True)
    c = h - mean
    var = jnp.mean(c * c, axis=-1, keepdims=True)
    y = c * jax.lax.rsqrt(var + eps)
    o_ref[...] = (y * g_ref[...].astype(jnp.float32)
                  + beta_ref[...].astype(jnp.float32)).astype(o_ref.dtype)


def _ln_kernel(x_ref, g_ref, b_ref, o_ref, *, eps):
    x = x_ref[...].astype(jnp.float32)
    mean = jnp.mean(x, axis=-1, keepdims=True)
    c = x - mean
    var = jnp.mean(c * c, axis=-1, keepdims=True)
    y = c * jax.lax.rsqrt(var + eps)
    o_ref[...] = (y * g_ref[...].astype(jnp.float32)
                  + b_ref[...].astype(jnp.float32)).astype(o_ref.dtype)


def _attn_outproj_ln_kernel(*refs, n_heads, dh, scale, has_bias, eps,
                            compute_dtype):
    # Fused: multi-head attention -> out_proj -> +residual -> LayerNorm for
    # one (batch element, query tile).
    if has_bias:
        (q_ref, k_ref, v_ref, bias_ref, wout_ref, bout_ref, res_ref,
         g_ref, beta_ref, o_ref, heads_ref) = refs
        bias = bias_ref[0].astype(jnp.float32)                  # (1, Sk)
    else:
        (q_ref, k_ref, v_ref, wout_ref, bout_ref, res_ref,
         g_ref, beta_ref, o_ref, heads_ref) = refs
        bias = None

    q32 = q_ref[0].astype(jnp.float32)                          # (tq, D)
    k = k_ref[0].astype(compute_dtype)                          # (Sk, D)
    v = v_ref[0].astype(compute_dtype)                          # (Sk, D)

    for h in range(n_heads):
        sl = slice(h * dh, (h + 1) * dh)
        qh = (q32[:, sl] * scale).astype(compute_dtype)          # pre-scaled q
        # q . k^T without an explicit transpose (contracting dims (1,1)).
        s = jax.lax.dot_general(qh, k[:, sl], (((1,), (1,)), ((), ())),
                                preferred_element_type=jnp.float32)
        if bias is not None:
            s = s + bias                       # (1, Sk) broadcasts over queries
        m = jnp.max(s, axis=-1, keepdims=True)
        p = jnp.exp(s - m)
        denom = jnp.sum(p, axis=-1, keepdims=True)
        o = jnp.dot(p.astype(compute_dtype), v[:, sl],
                    preferred_element_type=jnp.float32)
        o = o * pl.reciprocal(denom, approx=True)
        heads_ref[:, sl] = o.astype(heads_ref.dtype)   # close per-head liveness

    heads = heads_ref[...].astype(compute_dtype)                # (tq, D)
    wout = wout_ref[...].astype(compute_dtype)                  # (D, D)
    h2 = jnp.dot(heads, wout, preferred_element_type=jnp.float32)
    h2 = (h2 + bout_ref[...].astype(jnp.float32)
          + res_ref[0].astype(jnp.float32))
    mean = jnp.mean(h2, axis=-1, keepdims=True)
    c = h2 - mean
    var = jnp.mean(c * c, axis=-1, keepdims=True)
    y = c * jax.lax.rsqrt(var + eps)
    o_ref[0] = (y * g_ref[...].astype(jnp.float32)
                + beta_ref[...].astype(jnp.float32)).astype(o_ref.dtype)


# ----------------------------------------------------------------------------
# pallas_call wrappers
# ----------------------------------------------------------------------------
def matmul_bias(x, wt, b, activation="none", bm=512, bn=512):
    """y = x @ wt + b ; x: (N, Din), wt: (Din, Dout) (pre-transposed W)."""
    n, d_in = x.shape
    d_out = wt.shape[1]
    bm = _row_block(n, bm)
    bn = _lane_block(d_out, bn)
    grid = (pl.cdiv(n, bm), pl.cdiv(d_out, bn))
    return pl.pallas_call(
        functools.partial(_matmul_bias_kernel, activation=activation,
                          compute_dtype=_MATMUL_DTYPE),
        grid=grid,
        out_shape=jax.ShapeDtypeStruct((n, d_out), x.dtype),
        in_specs=[
            pl.BlockSpec((bm, d_in), lambda i, j: (i, 0)),
            pl.BlockSpec((d_in, bn), lambda i, j: (0, j)),
            pl.BlockSpec((1, bn), lambda i, j: (0, j)),
        ],
        out_specs=pl.BlockSpec((bm, bn), lambda i, j: (i, j)),
        compiler_params=pltpu.CompilerParams(
            dimension_semantics=("parallel", "parallel"),
            vmem_limit_bytes=_VMEM_LIMIT),
    )(x, wt, b.reshape(1, d_out))


def matmul_add_ln(x, wt, b, residual, gamma, beta, eps=_LN_EPS, bm=512):
    """y = LayerNorm(x @ wt + b + residual); x: (N, Din), wt: (Din, D)."""
    n, d_in = x.shape
    d_out = wt.shape[1]
    bm = _row_block(n, bm)
    return pl.pallas_call(
        functools.partial(_matmul_add_ln_kernel, eps=eps,
                          compute_dtype=_MATMUL_DTYPE),
        grid=(pl.cdiv(n, bm),),
        out_shape=jax.ShapeDtypeStruct((n, d_out), x.dtype),
        in_specs=[
            pl.BlockSpec((bm, d_in), lambda i: (i, 0)),
            pl.BlockSpec((d_in, d_out), lambda i: (0, 0)),
            pl.BlockSpec((1, d_out), lambda i: (0, 0)),
            pl.BlockSpec((bm, d_out), lambda i: (i, 0)),
            pl.BlockSpec((1, d_out), lambda i: (0, 0)),
            pl.BlockSpec((1, d_out), lambda i: (0, 0)),
        ],
        out_specs=pl.BlockSpec((bm, d_out), lambda i: (i, 0)),
        compiler_params=pltpu.CompilerParams(
            dimension_semantics=("parallel",),
            vmem_limit_bytes=_VMEM_LIMIT),
    )(x, wt, b.reshape(1, d_out), residual,
      gamma.reshape(1, d_out), beta.reshape(1, d_out))


def layer_norm(x_bsd, gamma, beta, eps=_LN_EPS, bm=1024):
    """Pure LayerNorm over the last dim; x_bsd: (B, S, D)."""
    b, s, d = x_bsd.shape
    n = b * s
    bm = _row_block(n, bm)
    out = pl.pallas_call(
        functools.partial(_ln_kernel, eps=eps),
        grid=(pl.cdiv(n, bm),),
        out_shape=jax.ShapeDtypeStruct((n, d), x_bsd.dtype),
        in_specs=[
            pl.BlockSpec((bm, d), lambda i: (i, 0)),
            pl.BlockSpec((1, d), lambda i: (0, 0)),
            pl.BlockSpec((1, d), lambda i: (0, 0)),
        ],
        out_specs=pl.BlockSpec((bm, d), lambda i: (i, 0)),
        compiler_params=pltpu.CompilerParams(
            dimension_semantics=("parallel",),
            vmem_limit_bytes=_VMEM_LIMIT),
    )(x_bsd.reshape(n, d), gamma.reshape(1, d), beta.reshape(1, d))
    return out.reshape(b, s, d)


def _make_bias(key_padding_mask):
    # key_padding_mask: (B, Sk) bool, True = ignore that key.
    bias = jnp.where(key_padding_mask, _MASK_VALUE, 0.0).astype(jnp.float32)
    return bias[:, None, :]                               # (B, 1, Sk)


def attention_outproj_ln(q_arr, q_col, kv_arr, k_col, v_col, n_heads,
                         key_padding_mask, wout_t, bout, residual,
                         gamma, beta, eps=_LN_EPS, tq=256):
    """Fused MHA + out_proj + residual + LayerNorm.

    q comes from last-dim block `q_col` of q_arr; K / V come from last-dim
    blocks `k_col` / `v_col` of kv_arr (block width = d_model). For
    self-attention q_arr is the fused (B,S,3D) qkv tensor passed for all
    three; for cross-attention q_arr is (B,Sq,D) and kv_arr is (B,Sk,2D).
    """
    b, sq, d = residual.shape
    sk = kv_arr.shape[1]
    dh = d // n_heads
    scale = 1.0 / float(dh) ** 0.5
    has_bias = key_padding_mask is not None
    tq = _row_block(sq, tq)

    if d % 128 != 0:
        # Unaligned d_model: materialize the column slices so every block's
        # last dim equals the full array dim (Mosaic (8,128) block rule).
        q_arr = q_arr[:, :, q_col * d:(q_col + 1) * d]
        k_arr = kv_arr[:, :, k_col * d:(k_col + 1) * d]
        v_arr = kv_arr[:, :, v_col * d:(v_col + 1) * d]
        q_col = k_col = v_col = 0
    else:
        k_arr = kv_arr
        v_arr = kv_arr

    in_specs = [
        pl.BlockSpec((1, tq, d), lambda bi, qi, c=q_col: (bi, qi, c)),
        pl.BlockSpec((1, sk, d), lambda bi, qi, c=k_col: (bi, 0, c)),
        pl.BlockSpec((1, sk, d), lambda bi, qi, c=v_col: (bi, 0, c)),
    ]
    args = [q_arr, k_arr, v_arr]
    if has_bias:
        in_specs.append(pl.BlockSpec((1, 1, sk), lambda bi, qi: (bi, 0, 0)))
        args.append(_make_bias(key_padding_mask))
    in_specs += [
        pl.BlockSpec((d, d), lambda bi, qi: (0, 0)),      # W_out^T (resident)
        pl.BlockSpec((1, d), lambda bi, qi: (0, 0)),      # b_out
        pl.BlockSpec((1, tq, d), lambda bi, qi: (bi, qi, 0)),  # residual tile
        pl.BlockSpec((1, d), lambda bi, qi: (0, 0)),      # gamma
        pl.BlockSpec((1, d), lambda bi, qi: (0, 0)),      # beta
    ]
    args += [wout_t, bout.reshape(1, d), residual,
             gamma.reshape(1, d), beta.reshape(1, d)]

    return pl.pallas_call(
        functools.partial(_attn_outproj_ln_kernel, n_heads=n_heads, dh=dh,
                          scale=scale, has_bias=has_bias, eps=eps,
                          compute_dtype=_MATMUL_DTYPE),
        grid=(b, pl.cdiv(sq, tq)),
        out_shape=jax.ShapeDtypeStruct((b, sq, d), residual.dtype),
        in_specs=in_specs,
        out_specs=pl.BlockSpec((1, tq, d), lambda bi, qi: (bi, qi, 0)),
        scratch_shapes=[pltpu.VMEM((tq, d), _MATMUL_DTYPE)],
        compiler_params=pltpu.CompilerParams(
            dimension_semantics=("parallel", "parallel"),
            vmem_limit_bytes=_VMEM_LIMIT),
    )(*args)


# ----------------------------------------------------------------------------
# Encoder / decoder layers (post-norm, ReLU, dropout = identity)
# ----------------------------------------------------------------------------
def encoder_layer(x, p, n_heads, src_pad_mask):
    b, s, d = x.shape
    x_flat = x.reshape(b * s, d)
    # fused Q/K/V projection (3D-wide output)
    qkv = matmul_bias(x_flat, p["sa_in_w_t"], p["sa_in_b"]).reshape(b, s, 3 * d)
    # MHA + out_proj + residual + LayerNorm fused
    x = attention_outproj_ln(qkv, 0, qkv, 1, 2, n_heads, src_pad_mask,
                             p["sa_out_w_t"], p["sa_out_b"], x,
                             p["norm1_g"], p["norm1_b"])
    x_flat = x.reshape(b * s, d)
    # FFN: linear1+ReLU, then linear2 + residual + LayerNorm fused
    h = matmul_bias(x_flat, p["ff1_w_t"], p["ff1_b"], activation="relu")
    x_flat = matmul_add_ln(h, p["ff2_w_t"], p["ff2_b"],
                           x_flat, p["norm2_g"], p["norm2_b"])
    return x_flat.reshape(b, s, d)


def decoder_layer(y, memory, p, n_heads, tgt_pad_mask, memory_pad_mask):
    b, sq, d = y.shape
    sk = memory.shape[1]
    y_flat = y.reshape(b * sq, d)
    # self-attention
    qkv = matmul_bias(y_flat, p["sa_in_w_t"],
                      p["sa_in_b"]).reshape(b, sq, 3 * d)
    y = attention_outproj_ln(qkv, 0, qkv, 1, 2, n_heads, tgt_pad_mask,
                             p["sa_out_w_t"], p["sa_out_b"], y,
                             p["norm1_g"], p["norm1_b"])
    y_flat = y.reshape(b * sq, d)
    # cross-attention (K/V fused into one 2D-wide projection of memory)
    q = matmul_bias(y_flat, p["ca_q_w_t"], p["ca_q_b"]).reshape(b, sq, d)
    kv = matmul_bias(memory.reshape(b * sk, d), p["ca_kv_w_t"],
                     p["ca_kv_b"]).reshape(b, sk, 2 * d)
    y = attention_outproj_ln(q, 0, kv, 0, 1, n_heads, memory_pad_mask,
                             p["ca_out_w_t"], p["ca_out_b"], y,
                             p["norm2_g"], p["norm2_b"])
    y_flat = y.reshape(b * sq, d)
    # FFN
    h = matmul_bias(y_flat, p["ff1_w_t"], p["ff1_b"], activation="relu")
    y_flat = matmul_add_ln(h, p["ff2_w_t"], p["ff2_b"],
                           y_flat, p["norm3_g"], p["norm3_b"])
    return y_flat.reshape(b, sq, d)


def transformer_forward(params, src, tgt, src_pad_mask=None,
                        tgt_pad_mask=None, *, n_heads):
    # PyTorch batch_first=False inputs: (S, B, D).  Transpose ONCE to (B, S, D)
    # internally and back at the end (no per-layer/per-attention transposes).
    x = jnp.transpose(src, (1, 0, 2))
    y = jnp.transpose(tgt, (1, 0, 2))
    for lp in params["encoder_layers"]:
        x = encoder_layer(x, lp, n_heads, src_pad_mask)
    memory = layer_norm(x, params["encoder_norm_g"], params["encoder_norm_b"])
    for lp in params["decoder_layers"]:
        y = decoder_layer(y, memory, lp, n_heads, tgt_pad_mask, src_pad_mask)
    out = layer_norm(y, params["decoder_norm_g"], params["decoder_norm_b"])
    return jnp.transpose(out, (1, 0, 2))


# ----------------------------------------------------------------------------
# Deterministic parameter initialization (weights stored PRE-TRANSPOSED: W^T).
# When porting real PyTorch weights, transpose them once at load time.
# ----------------------------------------------------------------------------
def init_params(key, n_layers, d_model, n_heads, d_ff):
    del n_heads

    def w(key, shape, scale=0.02):
        return scale * jax.random.normal(key, shape, jnp.float32)

    def self_attn_params(key):
        k1, k2 = jax.random.split(key)
        return {
            "sa_in_w_t": w(k1, (d_model, 3 * d_model)),   # in_proj_weight.T
            "sa_in_b": jnp.zeros((3 * d_model,), jnp.float32),
            "sa_out_w_t": w(k2, (d_model, d_model)),      # out_proj.weight.T
            "sa_out_b": jnp.zeros((d_model,), jnp.float32),
        }

    def cross_attn_params(key):
        k1, k2 = jax.random.split(key)
        in_w_t = w(k1, (d_model, 3 * d_model))            # in_proj_weight.T
        in_b = jnp.zeros((3 * d_model,), jnp.float32)
        return {
            "ca_q_w_t": in_w_t[:, :d_model],
            "ca_q_b": in_b[:d_model],
            "ca_kv_w_t": in_w_t[:, d_model:],
            "ca_kv_b": in_b[d_model:],
            "ca_out_w_t": w(k2, (d_model, d_model)),
            "ca_out_b": jnp.zeros((d_model,), jnp.float32),
        }

    def ffn_params(key):
        k1, k2 = jax.random.split(key)
        return {
            "ff1_w_t": w(k1, (d_model, d_ff)),            # linear1.weight.T
            "ff1_b": jnp.zeros((d_ff,), jnp.float32),
            "ff2_w_t": w(k2, (d_ff, d_model)),            # linear2.weight.T
            "ff2_b": jnp.zeros((d_model,), jnp.float32),
        }

    def norm(prefix):
        return {prefix + "_g": jnp.ones((d_model,), jnp.float32),
                prefix + "_b": jnp.zeros((d_model,), jnp.float32)}

    def enc_layer(key):
        k1, k2 = jax.random.split(key)
        p = {}
        p.update(self_attn_params(k1))
        p.update(ffn_params(k2))
        p.update(norm("norm1"))
        p.update(norm("norm2"))
        return p

    def dec_layer(key):
        k1, k2, k3 = jax.random.split(key, 3)
        p = {}
        p.update(self_attn_params(k1))
        p.update(cross_attn_params(k2))
        p.update(ffn_params(k3))
        p.update(norm("norm1"))
        p.update(norm("norm2"))
        p.update(norm("norm3"))
        return p

    keys = jax.random.split(key, 2 * n_layers)
    return {
        "encoder_layers": [enc_layer(keys[i]) for i in range(n_layers)],
        "decoder_layers": [dec_layer(keys[n_layers + i])
                           for i in range(n_layers)],
        "encoder_norm_g": jnp.ones((d_model,), jnp.float32),
        "encoder_norm_b": jnp.zeros((d_model,), jnp.float32),
        "decoder_norm_g": jnp.ones((d_model,), jnp.float32),
        "decoder_norm_b": jnp.zeros((d_model,), jnp.float32),
    }


# ----------------------------------------------------------------------------
if __name__ == "__main__":
    # Small shapes; d_model a multiple of 128 so the lane-aligned column-split
    # fast path of the fused attention kernel is exercised.
    n_layers, d_model, n_heads, d_ff = 2, 128, 4, 256
    seq_src, seq_tgt, batch = 8, 8, 2

    key = jax.random.PRNGKey(0)
    kp, ks, kt = jax.random.split(key, 3)
    params = init_params(kp, n_layers, d_model, n_heads, d_ff)

    # src / tgt: (seq, batch, d_model) — PyTorch batch_first=False layout
    src = jax.random.normal(ks, (seq_src, batch, d_model), jnp.float32)
    tgt = jax.random.normal(kt, (seq_tgt, batch, d_model), jnp.float32)

    fwd = jax.jit(functools.partial(transformer_forward, n_heads=n_heads))
    out = fwd(params, src, tgt, None, None)
    out = jax.block_until_ready(out)

    assert out.shape == (seq_tgt, batch, d_model)
    assert bool(jnp.all(jnp.isfinite(out)))
    print("KERNEL_OK")
</pallas_src>

<mosaic_0001>
module attributes {stable_mosaic.version = 11 : i64} {
  func.func @_matmul_bias_kernel(%arg0: i32, %arg1: i32, %arg2: memref<16x128xf32, #tpu.memory_space<vmem>>, %arg3: memref<128x384xf32, #tpu.memory_space<vmem>>, %arg4: memref<1x384xf32, #tpu.memory_space<vmem>>, %arg5: memref<16x384xf32, #tpu.memory_space<vmem>>) attributes {dimension_semantics = [#tpu.dimension_semantics<parallel>, #tpu.dimension_semantics<parallel>], iteration_bounds = array<i64: 1, 1>, scalar_prefetch = 0 : i64, scratch_operands = 0 : i64, tpu.core_type = #tpu.core_type<tc>, window_params = [{transform_indices = @transform_0, window_bounds = array<i64: 16, 128>}, {transform_indices = @transform_1, window_bounds = array<i64: 128, 384>}, {transform_indices = @transform_2, window_bounds = array<i64: 1, 384>}, {transform_indices = @transform_3, window_bounds = array<i64: 16, 384>}]} {
    %c0 = arith.constant 0 : index
    %c0_0 = arith.constant 0 : index
    %0 = vector.load %arg2[%c0, %c0_0] : memref<16x128xf32, #tpu.memory_space<vmem>>, vector<16x128xf32>
    %1 = arith.truncf %0 : vector<16x128xf32> to vector<16x128xbf16>
    %c0_1 = arith.constant 0 : index
    %c0_2 = arith.constant 0 : index
    %2 = vector.load %arg3[%c0_1, %c0_2] : memref<128x384xf32, #tpu.memory_space<vmem>>, vector<128x384xf32>
    %3 = arith.truncf %2 : vector<128x384xf32> to vector<128x384xbf16>
    %cst = arith.constant dense<0.000000e+00> : vector<16x384xf32>
    %4 = tpu.matmul %1, %3, %cst {dimension_numbers = #tpu.dot_dimension_numbers<[1], [0], [0], [1], [0, 0, 1, 1], [], []>} : vector<16x128xbf16>, vector<128x384xbf16>, vector<16x384xf32> -> vector<16x384xf32>
    %c0_3 = arith.constant 0 : index
    %c0_4 = arith.constant 0 : index
    %5 = vector.load %arg4[%c0_3, %c0_4] : memref<1x384xf32, #tpu.memory_space<vmem>>, vector<1x384xf32>
    %6 = vector.broadcast %5 : vector<1x384xf32> to vector<16x384xf32>
    %7 = arith.addf %4, %6 : vector<16x384xf32>
    %c0_5 = arith.constant 0 : index
    %c0_6 = arith.constant 0 : index
    %8 = vector.load %arg5[%c0_5, %c0_6] : memref<16x384xf32, #tpu.memory_space<vmem>>, vector<16x384xf32>
    tpu.vector_store %arg5[%c0_5, %c0_6], %7 {strides = array<i32>} : memref<16x384xf32, #tpu.memory_space<vmem>>, vector<16x384xf32>,
    return
  }
  func.func @transform_0(%arg0: i32, %arg1: i32) -> (i32, i32) {
    %c0_i32 = arith.constant 0 : i32
    %c0_i32_0 = arith.constant 0 : i32
    return %arg0, %c0_i32 : i32, i32
  }
  func.func @transform_1(%arg0: i32, %arg1: i32) -> (i32, i32) {
    %c0_i32 = arith.constant 0 : i32
    %c0_i32_0 = arith.constant 0 : i32
    return %c0_i32, %arg1 : i32, i32
  }
  func.func @transform_2(%arg0: i32, %arg1: i32) -> (i32, i32) {
    %c0_i32 = arith.constant 0 : i32
    %c0_i32_0 = arith.constant 0 : i32
    return %c0_i32, %arg1 : i32, i32
  }
  func.func @transform_3(%arg0: i32, %arg1: i32) -> (i32, i32) {
    %c0_i32 = arith.constant 0 : i32
    return %arg0, %arg1 : i32, i32
  }
}

module attributes {stable_mosaic.version = 11 : i64} {
  func.func @_attn_outproj_ln_kernel(%arg0: i32, %arg1: i32, %arg2: memref<1x8x128xf32, #tpu.memory_space<vmem>>, %arg3: memref<1x8x128xf32, #tpu.memory_space<vmem>>, %arg4: memref<1x8x128xf32, #tpu.memory_space<vmem>>, %arg5: memref<128x128xf32, #tpu.memory_space<vmem>>, %arg6: memref<1x128xf32, #tpu.memory_space<vmem>>, %arg7: memref<1x8x128xf32, #tpu.memory_space<vmem>>, %arg8: memref<1x128xf32, #tpu.memory_space<vmem>>, %arg9: memref<1x128xf32, #tpu.memory_space<vmem>>, %arg10: memref<1x8x128xf32, #tpu.memory_space<vmem>>, %arg11: memref<8x128xbf16, #tpu.memory_space<vmem>>) attributes {dimension_semantics = [#tpu.dimension_semantics<parallel>, #tpu.dimension_semantics<parallel>], iteration_bounds = array<i64: 2, 1>, scalar_prefetch = 0 : i64, scratch_operands = 1 : i64, tpu.core_type = #tpu.core_type<tc>, window_params = [{transform_indices = @transform_0, window_bounds = array<i64: 1, 8, 128>}, {transform_indices = @transform_1, window_bounds = array<i64: 1, 8, 128>}, {transform_indices = @transform_2, window_bounds = array<i64: 1, 8, 128>}, {pipeline_mode = #tpu.pipeline_mode<synchronous>, transform_indices = @transform_3, window_bounds = array<i64: 128, 128>}, {pipeline_mode = #tpu.pipeline_mode<synchronous>, transform_indices = @transform_4, window_bounds = array<i64: 1, 128>}, {transform_indices = @transform_5, window_bounds = array<i64: 1, 8, 128>}, {pipeline_mode = #tpu.pipeline_mode<synchronous>, transform_indices = @transform_6, window_bounds = array<i64: 1, 128>}, {pipeline_mode = #tpu.pipeline_mode<synchronous>, transform_indices = @transform_7, window_bounds = array<i64: 1, 128>}, {transform_indices = @transform_8, window_bounds = array<i64: 1, 8, 128>}]} {
    %c0 = arith.constant 0 : index
    %c0_0 = arith.constant 0 : index
    %c0_1 = arith.constant 0 : index
    %0 = vector.load %arg2[%c0, %c0_0, %c0_1] : memref<1x8x128xf32, #tpu.memory_space<vmem>>, vector<1x8x128xf32>
    %1 = vector.shape_cast %0 : vector<1x8x128xf32> to vector<8x128xf32>
    %c0_2 = arith.constant 0 : index
    %c0_3 = arith.constant 0 : index
    %c0_4 = arith.constant 0 : index
    %2 = vector.load %arg3[%c0_2, %c0_3, %c0_4] : memref<1x8x128xf32, #tpu.memory_space<vmem>>, vector<1x8x128xf32>
    %3 = vector.shape_cast %2 : vector<1x8x128xf32> to vector<8x128xf32>
    %4 = arith.truncf %3 : vector<8x128xf32> to vector<8x128xbf16>
    %c0_5 = arith.constant 0 : index
    %c0_6 = arith.constant 0 : index
    %c0_7 = arith.constant 0 : index
    %5 = vector.load %arg4[%c0_5, %c0_6, %c0_7] : memref<1x8x128xf32, #tpu.memory_space<vmem>>, vector<1x8x128xf32>
    %6 = vector.shape_cast %5 : vector<1x8x128xf32> to vector<8x128xf32>
    %7 = arith.truncf %6 : vector<8x128xf32> to vector<8x128xbf16>
    %8 = vector.extract_strided_slice %1 {offsets = [0, 0], sizes = [8, 32], strides = [1, 1]} : vector<8x128xf32> to vector<8x32xf32>
    %cst = arith.constant 0.176776692 : f32
    %9 = vector.broadcast %cst : f32 to vector<8x32xf32>
    %10 = arith.mulf %8, %9 : vector<8x32xf32>
    %11 = arith.truncf %10 : vector<8x32xf32> to vector<8x32xbf16>
    %12 = vector.extract_strided_slice %4 {offsets = [0, 0], sizes = [8, 32], strides = [1, 1]} : vector<8x128xbf16> to vector<8x32xbf16>
    %cst_8 = arith.constant dense<0.000000e+00> : vector<8x8xf32>
    %13 = tpu.matmul %11, %12, %cst_8 {dimension_numbers = #tpu.dot_dimension_numbers<[1], [1], [0], [0], [0, 0, 1, 0], [], []>} : vector<8x32xbf16>, vector<8x32xbf16>, vector<8x8xf32> -> vector<8x8xf32>
    %cst_9 = arith.constant dense<0xFF800000> : vector<8xf32>
    %14 = vector.multi_reduction <maximumf>, %13, %cst_9 [1] : vector<8x8xf32> to vector<8xf32>
    %15 = vector.shape_cast %14 : vector<8xf32> to vector<8x1xf32>
    %16 = vector.broadcast %15 : vector<8x1xf32> to vector<8x8xf32>
    %17 = arith.subf %13, %16 : vector<8x8xf32>
    %18 = math.exp %17 : vector<8x8xf32>
    %cst_10 = arith.constant dense<0.000000e+00> : vector<8xf32>
    %19 = vector.multi_reduction <add>, %18, %cst_10 [1] : vector<8x8xf32> to vector<8xf32>
    %20 = vector.shape_cast %19 : vector<8xf32> to vector<8x1xf32>
    %21 = arith.truncf %18 : vector<8x8xf32> to vector<8x8xbf16>
    %22 = vector.extract_strided_slice %7 {offsets = [0, 0], sizes = [8, 32], strides = [1, 1]} : vector<8x128xbf16> to vector<8x32xbf16>
    %cst_11 = arith.constant dense<0.000000e+00> : vector<8x32xf32>
    %23 = tpu.matmul %21, %22, %cst_11 {dimension_numbers = #tpu.dot_dimension_numbers<[1], [0], [0], [1], [0, 0, 1, 1], [], []>} : vector<8x8xbf16>, vector<8x32xbf16>, vector<8x32xf32> -> vector<8x32xf32>
    %24 = tpu.reciprocal %20 {approx = true} : vector<8x1xf32> -> vector<8x1xf32>
    %25 = vector.broadcast %24 : vector<8x1xf32> to vector<8x32xf32>
    %26 = arith.mulf %23, %25 : vector<8x32xf32>
    %27 = arith.truncf %26 : vector<8x32xf32> to vector<8x32xbf16>
    %c0_12 = arith.constant 0 : index
    %c0_13 = arith.constant 0 : index
    %28 = vector.load %arg11[%c0_12, %c0_13] : memref<8x128xbf16, #tpu.memory_space<vmem>>, vector<8x32xbf16>
    tpu.vector_store %arg11[%c0_12, %c0_13], %27 {strides = array<i32>} : memref<8x128xbf16, #tpu.memory_space<vmem>>, vector<8x32xbf16>,
    %29 = vector.extract_strided_slice %1 {offsets = [0, 32], sizes = [8, 32], strides = [1, 1]} : vector<8x128xf32> to vector<8x32xf32>
    %cst_14 = arith.constant 0.176776692 : f32
    %30 = vector.broadcast %cst_14 : f32 to vector<8x32xf32>
    %31 = arith.mulf %29, %30 : vector<8x32xf32>
    %32 = arith.truncf %31 : vector<8x32xf32> to vector<8x32xbf16>
    %33 = vector.extract_strided_slice %4 {offsets = [0, 32], sizes = [8, 32], strides = [1, 1]} : vector<8x128xbf16> to vector<8x32xbf16>
    %cst_15 = arith.constant dense<0.000000e+00> : vector<8x8xf32>
    %34 = tpu.matmul %32, %33, %cst_15 {dimension_numbers = #tpu.dot_dimension_numbers<[1], [1], [0], [0], [0, 0, 1, 0], [], []>} : vector<8x32xbf16>, vector<8x32xbf16>, vector<8x8xf32> -> vector<8x8xf32>
    %cst_16 = arith.constant dense<0xFF800000> : vector<8xf32>
    %35 = vector.multi_reduction <maximumf>, %34, %cst_16 [1] : vector<8x8xf32> to vector<8xf32>
    %36 = vector.shape_cast %35 : vector<8xf32> to vector<8x1xf32>
    %37 = vector.broadcast %36 : vector<8x1xf32> to vector<8x8xf32>
    %38 = arith.subf %34, %37 : vector<8x8xf32>
    %39 = math.exp %38 : vector<8x8xf32>
    %cst_17 = arith.constant dense<0.000000e+00> : vector<8xf32>
    %40 = vector.multi_reduction <add>, %39, %cst_17 [1] : vector<8x8xf32> to vector<8xf32>
    %41 = vector.shape_cast %40 : vector<8xf32> to vector<8x1xf32>
    %42 = arith.truncf %39 : vector<8x8xf32> to vector<8x8xbf16>
    %43 = vector.extract_strided_slice %7 {offsets = [0, 32], sizes = [8, 32], strides = [1, 1]} : vector<8x128xbf16> to vector<8x32xbf16>
    %cst_18 = arith.constant dense<0.000000e+00> : vector<8x32xf32>
    %44 = tpu.matmul %42, %43, %cst_18 {dimension_numbers = #tpu.dot_dimension_numbers<[1], [0], [0], [1], [0, 0, 1, 1], [], []>} : vector<8x8xbf16>, vector<8x32xbf16>, vector<8x32xf32> -> vector<8x32xf32>
    %45 = tpu.reciprocal %41 {approx = true} : vector<8x1xf32> -> vector<8x1xf32>
    %46 = vector.broadcast %45 : vector<8x1xf32> to vector<8x32xf32>
    %47 = arith.mulf %44, %46 : vector<8x32xf32>
    %48 = arith.truncf %47 : vector<8x32xf32> to vector<8x32xbf16>
    %c0_19 = arith.constant 0 : index
    %c32 = arith.constant 32 : index
    %49 = vector.load %arg11[%c0_19, %c32] : memref<8x128xbf16, #tpu.memory_space<vmem>>, vector<8x32xbf16>
    tpu.vector_store %arg11[%c0_19, %c32], %48 {strides = array<i32>} : memref<8x128xbf16, #tpu.memory_space<vmem>>, vector<8x32xbf16>,
    %50 = vector.extract_strided_slice %1 {offsets = [0, 64], sizes = [8, 32], strides = [1, 1]} : vector<8x128xf32> to vector<8x32xf32>
    %cst_20 = arith.constant 0.176776692 : f32
    %51 = vector.broadcast %cst_20 : f32 to vector<8x32xf32>
    %52 = arith.mulf %50, %51 : vector<8x32xf32>
    %53 = arith.truncf %52 : vector<8x32xf32> to vector<8x32xbf16>
    %54 = vector.extract_strided_slice %4 {offsets = [0, 64], sizes = [8, 32], strides = [1, 1]} : vector<8x128xbf16> to vector<8x32xbf16>
    %cst_21 = arith.constant dense<0.000000e+00> : vector<8x8xf32>
    %55 = tpu.matmul %53, %54, %cst_21 {dimension_numbers = #tpu.dot_dimension_numbers<[1], [1], [0], [0], [0, 0, 1, 0], [], []>} : vector<8x32xbf16>, vector<8x32xbf16>, vector<8x8xf32> -> vector<8x8xf32>
    %cst_22 = arith.constant dense<0xFF800000> : vector<8xf32>
    %56 = vector.multi_reduction <maximumf>, %55, %cst_22 [1] : vector<8x8xf32> to vector<8xf32>
    %57 = vector.shape_cast %56 : vector<8xf32> to vector<8x1xf32>
    %58 = vector.broadcast %57 : vector<8x1xf32> to vector<8x8xf32>
    %59 = arith.subf %55, %58 : vector<8x8xf32>
    %60 = math.exp %59 : vector<8x8xf32>
    %cst_23 = arith.constant dense<0.000000e+00> : vector<8xf32>
    %61 = vector.multi_reduction <add>, %60, %cst_23 [1] : vector<8x8xf32> to vector<8xf32>
    %62 = vector.shape_cast %61 : vector<8xf32> to vector<8x1xf32>
    %63 = arith.truncf %60 : vector<8x8xf32> to vector<8x8xbf16>
    %64 = vector.extract_strided_slice %7 {offsets = [0, 64], sizes = [8, 32], strides = [1, 1]} : vector<8x128xbf16> to vector<8x32xbf16>
    %cst_24 = arith.constant dense<0.000000e+00> : vector<8x32xf32>
    %65 = tpu.matmul %63, %64, %cst_24 {dimension_numbers = #tpu.dot_dimension_numbers<[1], [0], [0], [1], [0, 0, 1, 1], [], []>} : vector<8x8xbf16>, vector<8x32xbf16>, vector<8x32xf32> -> vector<8x32xf32>
    %66 = tpu.reciprocal %62 {approx = true} : vector<8x1xf32> -> vector<8x1xf32>
    %67 = vector.broadcast %66 : vector<8x1xf32> to vector<8x32xf32>
    %68 = arith.mulf %65, %67 : vector<8x32xf32>
    %69 = arith.truncf %68 : vector<8x32xf32> to vector<8x32xbf16>
    %c0_25 = arith.constant 0 : index
    %c64 = arith.constant 64 : index
    %70 = vector.load %arg11[%c0_25, %c64] : memref<8x128xbf16, #tpu.memory_space<vmem>>, vector<8x32xbf16>
    tpu.vector_store %arg11[%c0_25, %c64], %69 {strides = array<i32>} : memref<8x128xbf16, #tpu.memory_space<vmem>>, vector<8x32xbf16>,
    %71 = vector.extract_strided_slice %1 {offsets = [0, 96], sizes = [8, 32], strides = [1, 1]} : vector<8x128xf32> to vector<8x32xf32>
    %cst_26 = arith.constant 0.176776692 : f32
    %72 = vector.broadcast %cst_26 : f32 to vector<8x32xf32>
    %73 = arith.mulf %71, %72 : vector<8x32xf32>
    %74 = arith.truncf %73 : vector<8x32xf32> to vector<8x32xbf16>
    %75 = vector.extract_strided_slice %4 {offsets = [0, 96], sizes = [8, 32], strides = [1, 1]} : vector<8x128xbf16> to vector<8x32xbf16>
    %cst_27 = arith.constant dense<0.000000e+00> : vector<8x8xf32>
    %76 = tpu.matmul %74, %75, %cst_27 {dimension_numbers = #tpu.dot_dimension_numbers<[1], [1], [0], [0], [0, 0, 1, 0], [], []>} : vector<8x32xbf16>, vector<8x32xbf16>, vector<8x8xf32> -> vector<8x8xf32>
    %cst_28 = arith.constant dense<0xFF800000> : vector<8xf32>
    %77 = vector.multi_reduction <maximumf>, %76, %cst_28 [1] : vector<8x8xf32> to vector<8xf32>
    %78 = vector.shape_cast %77 : vector<8xf32> to vector<8x1xf32>
    %79 = vector.broadcast %78 : vector<8x1xf32> to vector<8x8xf32>
    %80 = arith.subf %76, %79 : vector<8x8xf32>
    %81 = math.exp %80 : vector<8x8xf32>
    %cst_29 = arith.constant dense<0.000000e+00> : vector<8xf32>
    %82 = vector.multi_reduction <add>, %81, %cst_29 [1] : vector<8x8xf32> to vector<8xf32>
    %83 = vector.shape_cast %82 : vector<8xf32> to vector<8x1xf32>
    %84 = arith.truncf %81 : vector<8x8xf32> to vector<8x8xbf16>
    %85 = vector.extract_strided_slice %7 {offsets = [0, 96], sizes = [8, 32], strides = [1, 1]} : vector<8x128xbf16> to vector<8x32xbf16>
    %cst_30 = arith.constant dense<0.000000e+00> : vector<8x32xf32>
    %86 = tpu.matmul %84, %85, %cst_30 {dimension_numbers = #tpu.dot_dimension_numbers<[1], [0], [0], [1], [0, 0, 1, 1], [], []>} : vector<8x8xbf16>, vector<8x32xbf16>, vector<8x32xf32> -> vector<8x32xf32>
    %87 = tpu.reciprocal %83 {approx = true} : vector<8x1xf32> -> vector<8x1xf32>
    %88 = vector.broadcast %87 : vector<8x1xf32> to vector<8x32xf32>
    %89 = arith.mulf %86, %88 : vector<8x32xf32>
    %90 = arith.truncf %89 : vector<8x32xf32> to vector<8x32xbf16>
    %c0_31 = arith.constant 0 : index
    %c96 = arith.constant 96 : index
    %91 = vector.load %arg11[%c0_31, %c96] : memref<8x128xbf16, #tpu.memory_space<vmem>>, vector<8x32xbf16>
    tpu.vector_store %arg11[%c0_31, %c96], %90 {strides = array<i32>} : memref<8x128xbf16, #tpu.memory_space<vmem>>, vector<8x32xbf16>,
    %c0_32 = arith.constant 0 : index
    %c0_33 = arith.constant 0 : index
    %92 = vector.load %arg11[%c0_32, %c0_33] : memref<8x128xbf16, #tpu.memory_space<vmem>>, vector<8x128xbf16>
    %c0_34 = arith.constant 0 : index
    %c0_35 = arith.constant 0 : index
    %93 = vector.load %arg5[%c0_34, %c0_35] : memref<128x128xf32, #tpu.memory_space<vmem>>, vector<128x128xf32>
    %94 = arith.truncf %93 : vector<128x128xf32> to vector<128x128xbf16>
    %cst_36 = arith.constant dense<0.000000e+00> : vector<8x128xf32>
    %95 = tpu.matmul %92, %94, %cst_36 {dimension_numbers = #tpu.dot_dimension_numbers<[1], [0], [0], [1], [0, 0, 1, 1], [], []>} : vector<8x128xbf16>, vector<128x128xbf16>, vector<8x128xf32> -> vector<8x128xf32>
    %c0_37 = arith.constant 0 : index
    %c0_38 = arith.constant 0 : index
    %96 = vector.load %arg6[%c0_37, %c0_38] : memref<1x128xf32, #tpu.memory_space<vmem>>, vector<1x128xf32>
    %97 = vector.broadcast %96 : vector<1x128xf32> to vector<8x128xf32>
    %98 = arith.addf %95, %97 : vector<8x128xf32>
    %c0_39 = arith.constant 0 : index
    %c0_40 = arith.constant 0 : index
    %c0_41 = arith.constant 0 : index
    %99 = vector.load %arg7[%c0_39, %c0_40, %c0_41] : memref<1x8x128xf32, #tpu.memory_space<vmem>>, vector<1x8x128xf32>
    %100 = vector.shape_cast %99 : vector<1x8x128xf32> to vector<8x128xf32>
    %101 = arith.addf %98, %100 : vector<8x128xf32>
    %cst_42 = arith.constant dense<0.000000e+00> : vector<8xf32>
    %102 = vector.multi_reduction <add>, %101, %cst_42 [1] : vector<8x128xf32> to vector<8xf32>
    %103 = vector.shape_cast %102 : vector<8xf32> to vector<8x1xf32>
    %cst_43 = arith.constant 1.280000e+02 : f32
    %104 = vector.broadcast %cst_43 : f32 to vector<8x1xf32>
    %105 = arith.divf %103, %104 : vector<8x1xf32>
    %106 = vector.broadcast %105 : vector<8x1xf32> to vector<8x128xf32>
    %107 = arith.subf %101, %106 : vector<8x128xf32>
    %108 = arith.mulf %107, %107 : vector<8x128xf32>
    %cst_44 = arith.constant dense<0.000000e+00> : vector<8xf32>
    %109 = vector.multi_reduction <add>, %108, %cst_44 [1] : vector<8x128xf32> to vector<8xf32>
    %110 = vector.shape_cast %109 : vector<8xf32> to vector<8x1xf32>
    %cst_45 = arith.constant 1.280000e+02 : f32
    %111 = vector.broadcast %cst_45 : f32 to vector<8x1xf32>
    %112 = arith.divf %110, %111 : vector<8x1xf32>
    %cst_46 = arith.constant 9.99999974E-6 : f32
    %113 = vector.broadcast %cst_46 : f32 to vector<8x1xf32>
    %114 = arith.addf %112, %113 : vector<8x1xf32>
    %115 = math.rsqrt %114 : vector<8x1xf32>
    %116 = vector.broadcast %115 : vector<8x1xf32> to vector<8x128xf32>
    %117 = arith.mulf %107, %116 : vector<8x128xf32>
    %c0_47 = arith.constant 0 : index
    %c0_48 = arith.constant 0 : index
    %118 = vector.load %arg8[%c0_47, %c0_48] : memref<1x128xf32, #tpu.memory_space<vmem>>, vector<1x128xf32>
    %119 = vector.broadcast %118 : vector<1x128xf32> to vector<8x128xf32>
    %120 = arith.mulf %117, %119 : vector<8x128xf32>
    %c0_49 = arith.constant 0 : index
    %c0_50 = arith.constant 0 : index
    %121 = vector.load %arg9[%c0_49, %c0_50] : memref<1x128xf32, #tpu.memory_space<vmem>>, vector<1x128xf32>
    %122 = vector.broadcast %121 : vector<1x128xf32> to vector<8x128xf32>
    %123 = arith.addf %120, %122 : vector<8x128xf32>
    %c0_51 = arith.constant 0 : index
    %c0_52 = arith.constant 0 : index
    %c0_53 = arith.constant 0 : index
    %124 = vector.load %arg10[%c0_51, %c0_52, %c0_53] : memref<1x8x128xf32, #tpu.memory_space<vmem>>, vector<1x8x128xf32>
    %125 = vector.shape_cast %124 : vector<1x8x128xf32> to vector<8x128xf32>
    %126 = vector.shape_cast %123 : vector<8x128xf32> to vector<1x8x128xf32>
    tpu.vector_store %arg10[%c0_51, %c0_52, %c0_53], %126 {strides = array<i32>} : memref<1x8x128xf32, #tpu.memory_space<vmem>>, vector<1x8x128xf32>,
    return
  }
  func.func @transform_0(%arg0: i32, %arg1: i32) -> (i32, i32, i32) {
    %c0_i32 = arith.constant 0 : i32
    %c0_i32_0 = arith.constant 0 : i32
    return %arg0, %arg1, %c0_i32 : i32, i32, i32
  }
  func.func @transform_1(%arg0: i32, %arg1: i32) -> (i32, i32, i32) {
    %c0_i32 = arith.constant 0 : i32
    %c1_i32 = arith.constant 1 : i32
    %c0_i32_0 = arith.constant 0 : i32
    return %arg0, %c0_i32, %c1_i32 : i32, i32, i32
  }
  func.func @transform_2(%arg0: i32, %arg1: i32) -> (i32, i32, i32) {
    %c0_i32 = arith.constant 0 : i32
    %c2_i32 = arith.constant 2 : i32
    %c0_i32_0 = arith.constant 0 : i32
    return %arg0, %c0_i32, %c2_i32 : i32, i32, i32
  }
  func.func @transform_3(%arg0: i32, %arg1: i32) -> (i32, i32) {
    %c0_i32 = arith.constant 0 : i32
    %c0_i32_0 = arith.constant 0 : i32
    %c0_i32_1 = arith.constant 0 : i32
    return %c0_i32, %c0_i32_0 : i32, i32
  }
  func.func @transform_4(%arg0: i32, %arg1: i32) -> (i32, i32) {
    %c0_i32 = arith.constant 0 : i32
    %c0_i32_0 = arith.constant 0 : i32
    %c0_i32_1 = arith.constant 0 : i32
    return %c0_i32, %c0_i32_0 : i32, i32
  }
  func.func @transform_5(%arg0: i32, %arg1: i32) -> (i32, i32, i32) {
    %c0_i32 = arith.constant 0 : i32
    %c0_i32_0 = arith.constant 0 : i32
    return %arg0, %arg1, %c0_i32 : i32, i32, i32
  }
  func.func @transform_6(%arg0: i32, %arg1: i32) -> (i32, i32) {
    %c0_i32 = arith.constant 0 : i32
    %c0_i32_0 = arith.constant 0 : i32
    %c0_i32_1 = arith.constant 0 : i32
    return %c0_i32, %c0_i32_0 : i32, i32
  }
  func.func @transform_7(%arg0: i32, %arg1: i32) -> (i32, i32) {
    %c0_i32 = arith.constant 0 : i32
    %c0_i32_0 = arith.constant 0 : i32
    %c0_i32_1 = arith.constant 0 : i32
    return %c0_i32, %c0_i32_0 : i32, i32
  }
  func.func @transform_8(%arg0: i32, %arg1: i32) -> (i32, i32, i32) {
    %c0_i32 = arith.constant 0 : i32
    %c0_i32_0 = arith.constant 0 : i32
    return %arg0, %arg1, %c0_i32 : i32, i32, i32
  }
}

module attributes {stable_mosaic.version = 11 : i64} {
  func.func @_matmul_bias_kernel(%arg0: i32, %arg1: i32, %arg2: memref<16x128xf32, #tpu.memory_space<vmem>>, %arg3: memref<128x128xf32, #tpu.memory_space<vmem>>, %arg4: memref<1x128xf32, #tpu.memory_space<vmem>>, %arg5: memref<16x128xf32, #tpu.memory_space<vmem>>) attributes {dimension_semantics = [#tpu.dimension_semantics<parallel>, #tpu.dimension_semantics<parallel>], iteration_bounds = array<i64: 1, 1>, scalar_prefetch = 0 : i64, scratch_operands = 0 : i64, tpu.core_type = #tpu.core_type<tc>, window_params = [{transform_indices = @transform_0, window_bounds = array<i64: 16, 128>}, {transform_indices = @transform_1, window_bounds = array<i64: 128, 128>}, {transform_indices = @transform_2, window_bounds = array<i64: 1, 128>}, {transform_indices = @transform_3, window_bounds = array<i64: 16, 128>}]} {
    %c0 = arith.constant 0 : index
    %c0_0 = arith.constant 0 : index
    %0 = vector.load %arg2[%c0, %c0_0] : memref<16x128xf32, #tpu.memory_space<vmem>>, vector<16x128xf32>
    %1 = arith.truncf %0 : vector<16x128xf32> to vector<16x128xbf16>
    %c0_1 = arith.constant 0 : index
    %c0_2 = arith.constant 0 : index
    %2 = vector.load %arg3[%c0_1, %c0_2] : memref<128x128xf32, #tpu.memory_space<vmem>>, vector<128x128xf32>
    %3 = arith.truncf %2 : vector<128x128xf32> to vector<128x128xbf16>
    %cst = arith.constant dense<0.000000e+00> : vector<16x128xf32>
    %4 = tpu.matmul %1, %3, %cst {dimension_numbers = #tpu.dot_dimension_numbers<[1], [0], [0], [1], [0, 0, 1, 1], [], []>} : vector<16x128xbf16>, vector<128x128xbf16>, vector<16x128xf32> -> vector<16x128xf32>
    %c0_3 = arith.constant 0 : index
    %c0_4 = arith.constant 0 : index
    %5 = vector.load %arg4[%c0_3, %c0_4] : memref<1x128xf32, #tpu.memory_space<vmem>>, vector<1x128xf32>
    %6 = vector.broadcast %5 : vector<1x128xf32> to vector<16x128xf32>
    %7 = arith.addf %4, %6 : vector<16x128xf32>
    %c0_5 = arith.constant 0 : index
    %c0_6 = arith.constant 0 : index
    %8 = vector.load %arg5[%c0_5, %c0_6] : memref<16x128xf32, #tpu.memory_space<vmem>>, vector<16x128xf32>
    tpu.vector_store %arg5[%c0_5, %c0_6], %7 {strides = array<i32>} : memref<16x128xf32, #tpu.memory_space<vmem>>, vector<16x128xf32>,
    return
  }
  func.func @transform_0(%arg0: i32, %arg1: i32) -> (i32, i32) {
    %c0_i32 = arith.constant 0 : i32
    %c0_i32_0 = arith.constant 0 : i32
    return %arg0, %c0_i32 : i32, i32
  }
  func.func @transform_1(%arg0: i32, %arg1: i32) -> (i32, i32) {
    %c0_i32 = arith.constant 0 : i32
    %c0_i32_0 = arith.constant 0 : i32
    return %c0_i32, %arg1 : i32, i32
  }
  func.func @transform_2(%arg0: i32, %arg1: i32) -> (i32, i32) {
    %c0_i32 = arith.constant 0 : i32
    %c0_i32_0 = arith.constant 0 : i32
    return %c0_i32, %arg1 : i32, i32
  }
  func.func @transform_3(%arg0: i32, %arg1: i32) -> (i32, i32) {
    %c0_i32 = arith.constant 0 : i32
    return %arg0, %arg1 : i32, i32
  }
}

module attributes {stable_mosaic.version = 11 : i64} {
  func.func @_matmul_bias_kernel(%arg0: i32, %arg1: i32, %arg2: memref<16x128xf32, #tpu.memory_space<vmem>>, %arg3: memref<128x384xf32, #tpu.memory_space<vmem>>, %arg4: memref<1x384xf32, #tpu.memory_space<vmem>>, %arg5: memref<16x384xf32, #tpu.memory_space<vmem>>) attributes {dimension_semantics = [#tpu.dimension_semantics<parallel>, #tpu.dimension_semantics<parallel>], iteration_bounds = array<i64: 1, 1>, scalar_prefetch = 0 : i64, scratch_operands = 0 : i64, tpu.core_type = #tpu.core_type<tc>, window_params = [{transform_indices = @transform_0, window_bounds = array<i64: 16, 128>}, {transform_indices = @transform_1, window_bounds = array<i64: 128, 384>}, {transform_indices = @transform_2, window_bounds = array<i64: 1, 384>}, {transform_indices = @transform_3, window_bounds = array<i64: 16, 384>}]} {
    %c0 = arith.constant 0 : index
    %c0_0 = arith.constant 0 : index
    %0 = vector.load %arg2[%c0, %c0_0] : memref<16x128xf32, #tpu.memory_space<vmem>>, vector<16x128xf32>
    %1 = arith.truncf %0 : vector<16x128xf32> to vector<16x128xbf16>
    %c0_1 = arith.constant 0 : index
    %c0_2 = arith.constant 0 : index
    %2 = vector.load %arg3[%c0_1, %c0_2] : memref<128x384xf32, #tpu.memory_space<vmem>>, vector<128x384xf32>
    %3 = arith.truncf %2 : vector<128x384xf32> to vector<128x384xbf16>
    %cst = arith.constant dense<0.000000e+00> : vector<16x384xf32>
    %4 = tpu.matmul %1, %3, %cst {dimension_numbers = #tpu.dot_dimension_numbers<[1], [0], [0], [1], [0, 0, 1, 1], [], []>} : vector<16x128xbf16>, vector<128x384xbf16>, vector<16x384xf32> -> vector<16x384xf32>
    %c0_3 = arith.constant 0 : index
    %c0_4 = arith.constant 0 : index
    %5 = vector.load %arg4[%c0_3, %c0_4] : memref<1x384xf32, #tpu.memory_space<vmem>>, vector<1x384xf32>
    %6 = vector.broadcast %5 : vector<1x384xf32> to vector<16x384xf32>
    %7 = arith.addf %4, %6 : vector<16x384xf32>
    %c0_5 = arith.constant 0 : index
    %c0_6 = arith.constant 0 : index
    %8 = vector.load %arg5[%c0_5, %c0_6] : memref<16x384xf32, #tpu.memory_space<vmem>>, vector<16x384xf32>
    tpu.vector_store %arg5[%c0_5, %c0_6], %7 {strides = array<i32>} : memref<16x384xf32, #tpu.memory_space<vmem>>, vector<16x384xf32>,
    return
  }
  func.func @transform_0(%arg0: i32, %arg1: i32) -> (i32, i32) {
    %c0_i32 = arith.constant 0 : i32
    %c0_i32_0 = arith.constant 0 : i32
    return %arg0, %c0_i32 : i32, i32
  }
  func.func @transform_1(%arg0: i32, %arg1: i32) -> (i32, i32) {
    %c0_i32 = arith.constant 0 : i32
    %c0_i32_0 = arith.constant 0 : i32
    return %c0_i32, %arg1 : i32, i32
  }
  func.func @transform_2(%arg0: i32, %arg1: i32) -> (i32, i32) {
    %c0_i32 = arith.constant 0 : i32
    %c0_i32_0 = arith.constant 0 : i32
    return %c0_i32, %arg1 : i32, i32
  }
  func.func @transform_3(%arg0: i32, %arg1: i32) -> (i32, i32) {
    %c0_i32 = arith.constant 0 : i32
    return %arg0, %arg1 : i32, i32
  }
}

module attributes {stable_mosaic.version = 11 : i64} {
  func.func @_matmul_bias_kernel(%arg0: i32, %arg1: i32, %arg2: memref<16x128xf32, #tpu.memory_space<vmem>>, %arg3: memref<128x256xf32, #tpu.memory_space<vmem>>, %arg4: memref<1x256xf32, #tpu.memory_space<vmem>>, %arg5: memref<16x256xf32, #tpu.memory_space<vmem>>) attributes {dimension_semantics = [#tpu.dimension_semantics<parallel>, #tpu.dimension_semantics<parallel>], iteration_bounds = array<i64: 1, 1>, scalar_prefetch = 0 : i64, scratch_operands = 0 : i64, tpu.core_type = #tpu.core_type<tc>, window_params = [{transform_indices = @transform_0, window_bounds = array<i64: 16, 128>}, {transform_indices = @transform_1, window_bounds = array<i64: 128, 256>}, {transform_indices = @transform_2, window_bounds = array<i64: 1, 256>}, {transform_indices = @transform_3, window_bounds = array<i64: 16, 256>}]} {
    %c0 = arith.constant 0 : index
    %c0_0 = arith.constant 0 : index
    %0 = vector.load %arg2[%c0, %c0_0] : memref<16x128xf32, #tpu.memory_space<vmem>>, vector<16x128xf32>
    %1 = arith.truncf %0 : vector<16x128xf32> to vector<16x128xbf16>
    %c0_1 = arith.constant 0 : index
    %c0_2 = arith.constant 0 : index
    %2 = vector.load %arg3[%c0_1, %c0_2] : memref<128x256xf32, #tpu.memory_space<vmem>>, vector<128x256xf32>
    %3 = arith.truncf %2 : vector<128x256xf32> to vector<128x256xbf16>
    %cst = arith.constant dense<0.000000e+00> : vector<16x256xf32>
    %4 = tpu.matmul %1, %3, %cst {dimension_numbers = #tpu.dot_dimension_numbers<[1], [0], [0], [1], [0, 0, 1, 1], [], []>} : vector<16x128xbf16>, vector<128x256xbf16>, vector<16x256xf32> -> vector<16x256xf32>
    %c0_3 = arith.constant 0 : index
    %c0_4 = arith.constant 0 : index
    %5 = vector.load %arg4[%c0_3, %c0_4] : memref<1x256xf32, #tpu.memory_space<vmem>>, vector<1x256xf32>
    %6 = vector.broadcast %5 : vector<1x256xf32> to vector<16x256xf32>
    %7 = arith.addf %4, %6 : vector<16x256xf32>
    %cst_5 = arith.constant 0.000000e+00 : f32
    %8 = vector.broadcast %cst_5 : f32 to vector<16x256xf32>
    %9 = arith.maximumf %7, %8 : vector<16x256xf32>
    %c0_6 = arith.constant 0 : index
    %c0_7 = arith.constant 0 : index
    %10 = vector.load %arg5[%c0_6, %c0_7] : memref<16x256xf32, #tpu.memory_space<vmem>>, vector<16x256xf32>
    tpu.vector_store %arg5[%c0_6, %c0_7], %9 {strides = array<i32>} : memref<16x256xf32, #tpu.memory_space<vmem>>, vector<16x256xf32>,
    return
  }
  func.func @transform_0(%arg0: i32, %arg1: i32) -> (i32, i32) {
    %c0_i32 = arith.constant 0 : i32
    %c0_i32_0 = arith.constant 0 : i32
    return %arg0, %c0_i32 : i32, i32
  }
  func.func @transform_1(%arg0: i32, %arg1: i32) -> (i32, i32) {
    %c0_i32 = arith.constant 0 : i32
    %c0_i32_0 = arith.constant 0 : i32
    return %c0_i32, %arg1 : i32, i32
  }
  func.func @transform_2(%arg0: i32, %arg1: i32) -> (i32, i32) {
    %c0_i32 = arith.constant 0 : i32
    %c0_i32_0 = arith.constant 0 : i32
    return %c0_i32, %arg1 : i32, i32
  }
  func.func @transform_3(%arg0: i32, %arg1: i32) -> (i32, i32) {
    %c0_i32 = arith.constant 0 : i32
    return %arg0, %arg1 : i32, i32
  }
}

module attributes {stable_mosaic.version = 11 : i64} {
  func.func @_matmul_add_ln_kernel(%arg0: i32, %arg1: memref<16x256xf32, #tpu.memory_space<vmem>>, %arg2: memref<256x128xf32, #tpu.memory_space<vmem>>, %arg3: memref<1x128xf32, #tpu.memory_space<vmem>>, %arg4: memref<16x128xf32, #tpu.memory_space<vmem>>, %arg5: memref<1x128xf32, #tpu.memory_space<vmem>>, %arg6: memref<1x128xf32, #tpu.memory_space<vmem>>, %arg7: memref<16x128xf32, #tpu.memory_space<vmem>>) attributes {dimension_semantics = [#tpu.dimension_semantics<parallel>], iteration_bounds = array<i64: 1>, scalar_prefetch = 0 : i64, scratch_operands = 0 : i64, tpu.core_type = #tpu.core_type<tc>, window_params = [{transform_indices = @transform_0, window_bounds = array<i64: 16, 256>}, {pipeline_mode = #tpu.pipeline_mode<synchronous>, transform_indices = @transform_1, window_bounds = array<i64: 256, 128>}, {pipeline_mode = #tpu.pipeline_mode<synchronous>, transform_indices = @transform_2, window_bounds = array<i64: 1, 128>}, {transform_indices = @transform_3, window_bounds = array<i64: 16, 128>}, {pipeline_mode = #tpu.pipeline_mode<synchronous>, transform_indices = @transform_4, window_bounds = array<i64: 1, 128>}, {pipeline_mode = #tpu.pipeline_mode<synchronous>, transform_indices = @transform_5, window_bounds = array<i64: 1, 128>}, {transform_indices = @transform_6, window_bounds = array<i64: 16, 128>}]} {
    %c0 = arith.constant 0 : index
    %c0_0 = arith.constant 0 : index
    %0 = vector.load %arg1[%c0, %c0_0] : memref<16x256xf32, #tpu.memory_space<vmem>>, vector<16x256xf32>
    %1 = arith.truncf %0 : vector<16x256xf32> to vector<16x256xbf16>
    %c0_1 = arith.constant 0 : index
    %c0_2 = arith.constant 0 : index
    %2 = vector.load %arg2[%c0_1, %c0_2] : memref<256x128xf32, #tpu.memory_space<vmem>>, vector<256x128xf32>
    %3 = arith.truncf %2 : vector<256x128xf32> to vector<256x128xbf16>
    %cst = arith.constant dense<0.000000e+00> : vector<16x128xf32>
    %4 = tpu.matmul %1, %3, %cst {dimension_numbers = #tpu.dot_dimension_numbers<[1], [0], [0], [1], [0, 0, 1, 1], [], []>} : vector<16x256xbf16>, vector<256x128xbf16>, vector<16x128xf32> -> vector<16x128xf32>
    %c0_3 = arith.constant 0 : index
    %c0_4 = arith.constant 0 : index
    %5 = vector.load %arg3[%c0_3, %c0_4] : memref<1x128xf32, #tpu.memory_space<vmem>>, vector<1x128xf32>
    %6 = vector.broadcast %5 : vector<1x128xf32> to vector<16x128xf32>
    %7 = arith.addf %4, %6 : vector<16x128xf32>
    %c0_5 = arith.constant 0 : index
    %c0_6 = arith.constant 0 : index
    %8 = vector.load %arg4[%c0_5, %c0_6] : memref<16x128xf32, #tpu.memory_space<vmem>>, vector<16x128xf32>
    %9 = arith.addf %7, %8 : vector<16x128xf32>
    %cst_7 = arith.constant dense<0.000000e+00> : vector<16xf32>
    %10 = vector.multi_reduction <add>, %9, %cst_7 [1] : vector<16x128xf32> to vector<16xf32>
    %11 = vector.shape_cast %10 : vector<16xf32> to vector<16x1xf32>
    %cst_8 = arith.constant 1.280000e+02 : f32
    %12 = vector.broadcast %cst_8 : f32 to vector<16x1xf32>
    %13 = arith.divf %11, %12 : vector<16x1xf32>
    %14 = vector.broadcast %13 : vector<16x1xf32> to vector<16x128xf32>
    %15 = arith.subf %9, %14 : vector<16x128xf32>
    %16 = arith.mulf %15, %15 : vector<16x128xf32>
    %cst_9 = arith.constant dense<0.000000e+00> : vector<16xf32>
    %17 = vector.multi_reduction <add>, %16, %cst_9 [1] : vector<16x128xf32> to vector<16xf32>
    %18 = vector.shape_cast %17 : vector<16xf32> to vector<16x1xf32>
    %cst_10 = arith.constant 1.280000e+02 : f32
    %19 = vector.broadcast %cst_10 : f32 to vector<16x1xf32>
    %20 = arith.divf %18, %19 : vector<16x1xf32>
    %cst_11 = arith.constant 9.99999974E-6 : f32
    %21 = vector.broadcast %cst_11 : f32 to vector<16x1xf32>
    %22 = arith.addf %20, %21 : vector<16x1xf32>
    %23 = math.rsqrt %22 : vector<16x1xf32>
    %24 = vector.broadcast %23 : vector<16x1xf32> to vector<16x128xf32>
    %25 = arith.mulf %15, %24 : vector<16x128xf32>
    %c0_12 = arith.constant 0 : index
    %c0_13 = arith.constant 0 : index
    %26 = vector.load %arg5[%c0_12, %c0_13] : memref<1x128xf32, #tpu.memory_space<vmem>>, vector<1x128xf32>
    %27 = vector.broadcast %26 : vector<1x128xf32> to vector<16x128xf32>
    %28 = arith.mulf %25, %27 : vector<16x128xf32>
    %c0_14 = arith.constant 0 : index
    %c0_15 = arith.constant 0 : index
    %29 = vector.load %arg6[%c0_14, %c0_15] : memref<1x128xf32, #tpu.memory_space<vmem>>, vector<1x128xf32>
    %30 = vector.broadcast %29 : vector<1x128xf32> to vector<16x128xf32>
    %31 = arith.addf %28, %30 : vector<16x128xf32>
    %c0_16 = arith.constant 0 : index
    %c0_17 = arith.constant 0 : index
    %32 = vector.load %arg7[%c0_16, %c0_17] : memref<16x128xf32, #tpu.memory_space<vmem>>, vector<16x128xf32>
    tpu.vector_store %arg7[%c0_16, %c0_17], %31 {strides = array<i32>} : memref<16x128xf32, #tpu.memory_space<vmem>>, vector<16x128xf32>,
    return
  }
  func.func @transform_0(%arg0: i32) -> (i32, i32) {
    %c0_i32 = arith.constant 0 : i32
    %c0_i32_0 = arith.constant 0 : i32
    return %arg0, %c0_i32 : i32, i32
  }
  func.func @transform_1(%arg0: i32) -> (i32, i32) {
    %c0_i32 = arith.constant 0 : i32
    %c0_i32_0 = arith.constant 0 : i32
    %c0_i32_1 = arith.constant 0 : i32
    return %c0_i32, %c0_i32_0 : i32, i32
  }
  func.func @transform_2(%arg0: i32) -> (i32, i32) {
    %c0_i32 = arith.constant 0 : i32
    %c0_i32_0 = arith.constant 0 : i32
    %c0_i32_1 = arith.constant 0 : i32
    return %c0_i32, %c0_i32_0 : i32, i32
  }
  func.func @transform_3(%arg0: i32) -> (i32, i32) {
    %c0_i32 = arith.constant 0 : i32
    %c0_i32_0 = arith.constant 0 : i32
    return %arg0, %c0_i32 : i32, i32
  }
  func.func @transform_4(%arg0: i32) -> (i32, i32) {
    %c0_i32 = arith.constant 0 : i32
    %c0_i32_0 = arith.constant 0 : i32
    %c0_i32_1 = arith.constant 0 : i32
    return %c0_i32, %c0_i32_0 : i32, i32
  }
  func.func @transform_5(%arg0: i32) -> (i32, i32) {
    %c0_i32 = arith.constant 0 : i32
    %c0_i32_0 = arith.constant 0 : i32
    %c0_i32_1 = arith.constant 0 : i32
    return %c0_i32, %c0_i32_0 : i32, i32
  }
  func.func @transform_6(%arg0: i32) -> (i32, i32) {
    %c0_i32 = arith.constant 0 : i32
    %c0_i32_0 = arith.constant 0 : i32
    return %arg0, %c0_i32 : i32, i32
  }
}

module attributes {stable_mosaic.version = 11 : i64} {
  func.func @_ln_kernel(%arg0: i32, %arg1: memref<16x128xf32, #tpu.memory_space<vmem>>, %arg2: memref<1x128xf32, #tpu.memory_space<vmem>>, %arg3: memref<1x128xf32, #tpu.memory_space<vmem>>, %arg4: memref<16x128xf32, #tpu.memory_space<vmem>>) attributes {dimension_semantics = [#tpu.dimension_semantics<parallel>], iteration_bounds = array<i64: 1>, scalar_prefetch = 0 : i64, scratch_operands = 0 : i64, tpu.core_type = #tpu.core_type<tc>, window_params = [{transform_indices = @transform_0, window_bounds = array<i64: 16, 128>}, {pipeline_mode = #tpu.pipeline_mode<synchronous>, transform_indices = @transform_1, window_bounds = array<i64: 1, 128>}, {pipeline_mode = #tpu.pipeline_mode<synchronous>, transform_indices = @transform_2, window_bounds = array<i64: 1, 128>}, {transform_indices = @transform_3, window_bounds = array<i64: 16, 128>}]} {
    %c0 = arith.constant 0 : index
    %c0_0 = arith.constant 0 : index
    %0 = vector.load %arg1[%c0, %c0_0] : memref<16x128xf32, #tpu.memory_space<vmem>>, vector<16x128xf32>
    %cst = arith.constant dense<0.000000e+00> : vector<16xf32>
    %1 = vector.multi_reduction <add>, %0, %cst [1] : vector<16x128xf32> to vector<16xf32>
    %2 = vector.shape_cast %1 : vector<16xf32> to vector<16x1xf32>
    %cst_1 = arith.constant 1.280000e+02 : f32
    %3 = vector.broadcast %cst_1 : f32 to vector<16x1xf32>
    %4 = arith.divf %2, %3 : vector<16x1xf32>
    %5 = vector.broadcast %4 : vector<16x1xf32> to vector<16x128xf32>
    %6 = arith.subf %0, %5 : vector<16x128xf32>
    %7 = arith.mulf %6, %6 : vector<16x128xf32>
    %cst_2 = arith.constant dense<0.000000e+00> : vector<16xf32>
    %8 = vector.multi_reduction <add>, %7, %cst_2 [1] : vector<16x128xf32> to vector<16xf32>
    %9 = vector.shape_cast %8 : vector<16xf32> to vector<16x1xf32>
    %cst_3 = arith.constant 1.280000e+02 : f32
    %10 = vector.broadcast %cst_3 : f32 to vector<16x1xf32>
    %11 = arith.divf %9, %10 : vector<16x1xf32>
    %cst_4 = arith.constant 9.99999974E-6 : f32
    %12 = vector.broadcast %cst_4 : f32 to vector<16x1xf32>
    %13 = arith.addf %11, %12 : vector<16x1xf32>
    %14 = math.rsqrt %13 : vector<16x1xf32>
    %15 = vector.broadcast %14 : vector<16x1xf32> to vector<16x128xf32>
    %16 = arith.mulf %6, %15 : vector<16x128xf32>
    %c0_5 = arith.constant 0 : index
    %c0_6 = arith.constant 0 : index
    %17 = vector.load %arg2[%c0_5, %c0_6] : memref<1x128xf32, #tpu.memory_space<vmem>>, vector<1x128xf32>
    %18 = vector.broadcast %17 : vector<1x128xf32> to vector<16x128xf32>
    %19 = arith.mulf %16, %18 : vector<16x128xf32>
    %c0_7 = arith.constant 0 : index
    %c0_8 = arith.constant 0 : index
    %20 = vector.load %arg3[%c0_7, %c0_8] : memref<1x128xf32, #tpu.memory_space<vmem>>, vector<1x128xf32>
    %21 = vector.broadcast %20 : vector<1x128xf32> to vector<16x128xf32>
    %22 = arith.addf %19, %21 : vector<16x128xf32>
    %c0_9 = arith.constant 0 : index
    %c0_10 = arith.constant 0 : index
    %23 = vector.load %arg4[%c0_9, %c0_10] : memref<16x128xf32, #tpu.memory_space<vmem>>, vector<16x128xf32>
    tpu.vector_store %arg4[%c0_9, %c0_10], %22 {strides = array<i32>} : memref<16x128xf32, #tpu.memory_space<vmem>>, vector<16x128xf32>,
    return
  }
  func.func @transform_0(%arg0: i32) -> (i32, i32) {
    %c0_i32 = arith.constant 0 : i32
    %c0_i32_0 = arith.constant 0 : i32
    return %arg0, %c0_i32 : i32, i32
  }
  func.func @transform_1(%arg0: i32) -> (i32, i32) {
    %c0_i32 = arith.constant 0 : i32
    %c0_i32_0 = arith.constant 0 : i32
    %c0_i32_1 = arith.constant 0 : i32
    return %c0_i32, %c0_i32_0 : i32, i32
  }
  func.func @transform_2(%arg0: i32) -> (i32, i32) {
    %c0_i32 = arith.constant 0 : i32
    %c0_i32_0 = arith.constant 0 : i32
    %c0_i32_1 = arith.constant 0 : i32
    return %c0_i32, %c0_i32_0 : i32, i32
  }
  func.func @transform_3(%arg0: i32) -> (i32, i32) {
    %c0_i32 = arith.constant 0 : i32
    %c0_i32_0 = arith.constant 0 : i32
    return %arg0, %c0_i32 : i32, i32
  }
}

module attributes {stable_mosaic.version = 11 : i64} {
  func.func @_matmul_bias_kernel(%arg0: i32, %arg1: i32, %arg2: memref<16x128xf32, #tpu.memory_space<vmem>>, %arg3: memref<128x256xf32, #tpu.memory_space<vmem>>, %arg4: memref<1x256xf32, #tpu.memory_space<vmem>>, %arg5: memref<16x256xf32, #tpu.memory_space<vmem>>) attributes {dimension_semantics = [#tpu.dimension_semantics<parallel>, #tpu.dimension_semantics<parallel>], iteration_bounds = array<i64: 1, 1>, scalar_prefetch = 0 : i64, scratch_operands = 0 : i64, tpu.core_type = #tpu.core_type<tc>, window_params = [{transform_indices = @transform_0, window_bounds = array<i64: 16, 128>}, {transform_indices = @transform_1, window_bounds = array<i64: 128, 256>}, {transform_indices = @transform_2, window_bounds = array<i64: 1, 256>}, {transform_indices = @transform_3, window_bounds = array<i64: 16, 256>}]} {
    %c0 = arith.constant 0 : index
    %c0_0 = arith.constant 0 : index
    %0 = vector.load %arg2[%c0, %c0_0] : memref<16x128xf32, #tpu.memory_space<vmem>>, vector<16x128xf32>
    %1 = arith.truncf %0 : vector<16x128xf32> to vector<16x128xbf16>
    %c0_1 = arith.constant 0 : index
    %c0_2 = arith.constant 0 : index
    %2 = vector.load %arg3[%c0_1, %c0_2] : memref<128x256xf32, #tpu.memory_space<vmem>>, vector<128x256xf32>
    %3 = arith.truncf %2 : vector<128x256xf32> to vector<128x256xbf16>
    %cst = arith.constant dense<0.000000e+00> : vector<16x256xf32>
    %4 = tpu.matmul %1, %3, %cst {dimension_numbers = #tpu.dot_dimension_numbers<[1], [0], [0], [1], [0, 0, 1, 1], [], []>} : vector<16x128xbf16>, vector<128x256xbf16>, vector<16x256xf32> -> vector<16x256xf32>
    %c0_3 = arith.constant 0 : index
    %c0_4 = arith.constant 0 : index
    %5 = vector.load %arg4[%c0_3, %c0_4] : memref<1x256xf32, #tpu.memory_space<vmem>>, vector<1x256xf32>
    %6 = vector.broadcast %5 : vector<1x256xf32> to vector<16x256xf32>
    %7 = arith.addf %4, %6 : vector<16x256xf32>
    %c0_5 = arith.constant 0 : index
    %c0_6 = arith.constant 0 : index
    %8 = vector.load %arg5[%c0_5, %c0_6] : memref<16x256xf32, #tpu.memory_space<vmem>>, vector<16x256xf32>
    tpu.vector_store %arg5[%c0_5, %c0_6], %7 {strides = array<i32>} : memref<16x256xf32, #tpu.memory_space<vmem>>, vector<16x256xf32>,
    return
  }
  func.func @transform_0(%arg0: i32, %arg1: i32) -> (i32, i32) {
    %c0_i32 = arith.constant 0 : i32
    %c0_i32_0 = arith.constant 0 : i32
    return %arg0, %c0_i32 : i32, i32
  }
  func.func @transform_1(%arg0: i32, %arg1: i32) -> (i32, i32) {
    %c0_i32 = arith.constant 0 : i32
    %c0_i32_0 = arith.constant 0 : i32
    return %c0_i32, %arg1 : i32, i32
  }
  func.func @transform_2(%arg0: i32, %arg1: i32) -> (i32, i32) {
    %c0_i32 = arith.constant 0 : i32
    %c0_i32_0 = arith.constant 0 : i32
    return %c0_i32, %arg1 : i32, i32
  }
  func.func @transform_3(%arg0: i32, %arg1: i32) -> (i32, i32) {
    %c0_i32 = arith.constant 0 : i32
    return %arg0, %arg1 : i32, i32
  }
}

module attributes {stable_mosaic.version = 11 : i64} {
  func.func @_attn_outproj_ln_kernel(%arg0: i32, %arg1: i32, %arg2: memref<1x8x128xf32, #tpu.memory_space<vmem>>, %arg3: memref<1x8x128xf32, #tpu.memory_space<vmem>>, %arg4: memref<1x8x128xf32, #tpu.memory_space<vmem>>, %arg5: memref<128x128xf32, #tpu.memory_space<vmem>>, %arg6: memref<1x128xf32, #tpu.memory_space<vmem>>, %arg7: memref<1x8x128xf32, #tpu.memory_space<vmem>>, %arg8: memref<1x128xf32, #tpu.memory_space<vmem>>, %arg9: memref<1x128xf32, #tpu.memory_space<vmem>>, %arg10: memref<1x8x128xf32, #tpu.memory_space<vmem>>, %arg11: memref<8x128xbf16, #tpu.memory_space<vmem>>) attributes {dimension_semantics = [#tpu.dimension_semantics<parallel>, #tpu.dimension_semantics<parallel>], iteration_bounds = array<i64: 2, 1>, scalar_prefetch = 0 : i64, scratch_operands = 1 : i64, tpu.core_type = #tpu.core_type<tc>, window_params = [{transform_indices = @transform_0, window_bounds = array<i64: 1, 8, 128>}, {transform_indices = @transform_1, window_bounds = array<i64: 1, 8, 128>}, {transform_indices = @transform_2, window_bounds = array<i64: 1, 8, 128>}, {pipeline_mode = #tpu.pipeline_mode<synchronous>, transform_indices = @transform_3, window_bounds = array<i64: 128, 128>}, {pipeline_mode = #tpu.pipeline_mode<synchronous>, transform_indices = @transform_4, window_bounds = array<i64: 1, 128>}, {transform_indices = @transform_5, window_bounds = array<i64: 1, 8, 128>}, {pipeline_mode = #tpu.pipeline_mode<synchronous>, transform_indices = @transform_6, window_bounds = array<i64: 1, 128>}, {pipeline_mode = #tpu.pipeline_mode<synchronous>, transform_indices = @transform_7, window_bounds = array<i64: 1, 128>}, {transform_indices = @transform_8, window_bounds = array<i64: 1, 8, 128>}]} {
    %c0 = arith.constant 0 : index
    %c0_0 = arith.constant 0 : index
    %c0_1 = arith.constant 0 : index
    %0 = vector.load %arg2[%c0, %c0_0, %c0_1] : memref<1x8x128xf32, #tpu.memory_space<vmem>>, vector<1x8x128xf32>
    %1 = vector.shape_cast %0 : vector<1x8x128xf32> to vector<8x128xf32>
    %c0_2 = arith.constant 0 : index
    %c0_3 = arith.constant 0 : index
    %c0_4 = arith.constant 0 : index
    %2 = vector.load %arg3[%c0_2, %c0_3, %c0_4] : memref<1x8x128xf32, #tpu.memory_space<vmem>>, vector<1x8x128xf32>
    %3 = vector.shape_cast %2 : vector<1x8x128xf32> to vector<8x128xf32>
    %4 = arith.truncf %3 : vector<8x128xf32> to vector<8x128xbf16>
    %c0_5 = arith.constant 0 : index
    %c0_6 = arith.constant 0 : index
    %c0_7 = arith.constant 0 : index
    %5 = vector.load %arg4[%c0_5, %c0_6, %c0_7] : memref<1x8x128xf32, #tpu.memory_space<vmem>>, vector<1x8x128xf32>
    %6 = vector.shape_cast %5 : vector<1x8x128xf32> to vector<8x128xf32>
    %7 = arith.truncf %6 : vector<8x128xf32> to vector<8x128xbf16>
    %8 = vector.extract_strided_slice %1 {offsets = [0, 0], sizes = [8, 32], strides = [1, 1]} : vector<8x128xf32> to vector<8x32xf32>
    %cst = arith.constant 0.176776692 : f32
    %9 = vector.broadcast %cst : f32 to vector<8x32xf32>
    %10 = arith.mulf %8, %9 : vector<8x32xf32>
    %11 = arith.truncf %10 : vector<8x32xf32> to vector<8x32xbf16>
    %12 = vector.extract_strided_slice %4 {offsets = [0, 0], sizes = [8, 32], strides = [1, 1]} : vector<8x128xbf16> to vector<8x32xbf16>
    %cst_8 = arith.constant dense<0.000000e+00> : vector<8x8xf32>
    %13 = tpu.matmul %11, %12, %cst_8 {dimension_numbers = #tpu.dot_dimension_numbers<[1], [1], [0], [0], [0, 0, 1, 0], [], []>} : vector<8x32xbf16>, vector<8x32xbf16>, vector<8x8xf32> -> vector<8x8xf32>
    %cst_9 = arith.constant dense<0xFF800000> : vector<8xf32>
    %14 = vector.multi_reduction <maximumf>, %13, %cst_9 [1] : vector<8x8xf32> to vector<8xf32>
    %15 = vector.shape_cast %14 : vector<8xf32> to vector<8x1xf32>
    %16 = vector.broadcast %15 : vector<8x1xf32> to vector<8x8xf32>
    %17 = arith.subf %13, %16 : vector<8x8xf32>
    %18 = math.exp %17 : vector<8x8xf32>
    %cst_10 = arith.constant dense<0.000000e+00> : vector<8xf32>
    %19 = vector.multi_reduction <add>, %18, %cst_10 [1] : vector<8x8xf32> to vector<8xf32>
    %20 = vector.shape_cast %19 : vector<8xf32> to vector<8x1xf32>
    %21 = arith.truncf %18 : vector<8x8xf32> to vector<8x8xbf16>
    %22 = vector.extract_strided_slice %7 {offsets = [0, 0], sizes = [8, 32], strides = [1, 1]} : vector<8x128xbf16> to vector<8x32xbf16>
    %cst_11 = arith.constant dense<0.000000e+00> : vector<8x32xf32>
    %23 = tpu.matmul %21, %22, %cst_11 {dimension_numbers = #tpu.dot_dimension_numbers<[1], [0], [0], [1], [0, 0, 1, 1], [], []>} : vector<8x8xbf16>, vector<8x32xbf16>, vector<8x32xf32> -> vector<8x32xf32>
    %24 = tpu.reciprocal %20 {approx = true} : vector<8x1xf32> -> vector<8x1xf32>
    %25 = vector.broadcast %24 : vector<8x1xf32> to vector<8x32xf32>
    %26 = arith.mulf %23, %25 : vector<8x32xf32>
    %27 = arith.truncf %26 : vector<8x32xf32> to vector<8x32xbf16>
    %c0_12 = arith.constant 0 : index
    %c0_13 = arith.constant 0 : index
    %28 = vector.load %arg11[%c0_12, %c0_13] : memref<8x128xbf16, #tpu.memory_space<vmem>>, vector<8x32xbf16>
    tpu.vector_store %arg11[%c0_12, %c0_13], %27 {strides = array<i32>} : memref<8x128xbf16, #tpu.memory_space<vmem>>, vector<8x32xbf16>,
    %29 = vector.extract_strided_slice %1 {offsets = [0, 32], sizes = [8, 32], strides = [1, 1]} : vector<8x128xf32> to vector<8x32xf32>
    %cst_14 = arith.constant 0.176776692 : f32
    %30 = vector.broadcast %cst_14 : f32 to vector<8x32xf32>
    %31 = arith.mulf %29, %30 : vector<8x32xf32>
    %32 = arith.truncf %31 : vector<8x32xf32> to vector<8x32xbf16>
    %33 = vector.extract_strided_slice %4 {offsets = [0, 32], sizes = [8, 32], strides = [1, 1]} : vector<8x128xbf16> to vector<8x32xbf16>
    %cst_15 = arith.constant dense<0.000000e+00> : vector<8x8xf32>
    %34 = tpu.matmul %32, %33, %cst_15 {dimension_numbers = #tpu.dot_dimension_numbers<[1], [1], [0], [0], [0, 0, 1, 0], [], []>} : vector<8x32xbf16>, vector<8x32xbf16>, vector<8x8xf32> -> vector<8x8xf32>
    %cst_16 = arith.constant dense<0xFF800000> : vector<8xf32>
    %35 = vector.multi_reduction <maximumf>, %34, %cst_16 [1] : vector<8x8xf32> to vector<8xf32>
    %36 = vector.shape_cast %35 : vector<8xf32> to vector<8x1xf32>
    %37 = vector.broadcast %36 : vector<8x1xf32> to vector<8x8xf32>
    %38 = arith.subf %34, %37 : vector<8x8xf32>
    %39 = math.exp %38 : vector<8x8xf32>
    %cst_17 = arith.constant dense<0.000000e+00> : vector<8xf32>
    %40 = vector.multi_reduction <add>, %39, %cst_17 [1] : vector<8x8xf32> to vector<8xf32>
    %41 = vector.shape_cast %40 : vector<8xf32> to vector<8x1xf32>
    %42 = arith.truncf %39 : vector<8x8xf32> to vector<8x8xbf16>
    %43 = vector.extract_strided_slice %7 {offsets = [0, 32], sizes = [8, 32], strides = [1, 1]} : vector<8x128xbf16> to vector<8x32xbf16>
    %cst_18 = arith.constant dense<0.000000e+00> : vector<8x32xf32>
    %44 = tpu.matmul %42, %43, %cst_18 {dimension_numbers = #tpu.dot_dimension_numbers<[1], [0], [0], [1], [0, 0, 1, 1], [], []>} : vector<8x8xbf16>, vector<8x32xbf16>, vector<8x32xf32> -> vector<8x32xf32>
    %45 = tpu.reciprocal %41 {approx = true} : vector<8x1xf32> -> vector<8x1xf32>
    %46 = vector.broadcast %45 : vector<8x1xf32> to vector<8x32xf32>
    %47 = arith.mulf %44, %46 : vector<8x32xf32>
    %48 = arith.truncf %47 : vector<8x32xf32> to vector<8x32xbf16>
    %c0_19 = arith.constant 0 : index
    %c32 = arith.constant 32 : index
    %49 = vector.load %arg11[%c0_19, %c32] : memref<8x128xbf16, #tpu.memory_space<vmem>>, vector<8x32xbf16>
    tpu.vector_store %arg11[%c0_19, %c32], %48 {strides = array<i32>} : memref<8x128xbf16, #tpu.memory_space<vmem>>, vector<8x32xbf16>,
    %50 = vector.extract_strided_slice %1 {offsets = [0, 64], sizes = [8, 32], strides = [1, 1]} : vector<8x128xf32> to vector<8x32xf32>
    %cst_20 = arith.constant 0.176776692 : f32
    %51 = vector.broadcast %cst_20 : f32 to vector<8x32xf32>
    %52 = arith.mulf %50, %51 : vector<8x32xf32>
    %53 = arith.truncf %52 : vector<8x32xf32> to vector<8x32xbf16>
    %54 = vector.extract_strided_slice %4 {offsets = [0, 64], sizes = [8, 32], strides = [1, 1]} : vector<8x128xbf16> to vector<8x32xbf16>
    %cst_21 = arith.constant dense<0.000000e+00> : vector<8x8xf32>
    %55 = tpu.matmul %53, %54, %cst_21 {dimension_numbers = #tpu.dot_dimension_numbers<[1], [1], [0], [0], [0, 0, 1, 0], [], []>} : vector<8x32xbf16>, vector<8x32xbf16>, vector<8x8xf32> -> vector<8x8xf32>
    %cst_22 = arith.constant dense<0xFF800000> : vector<8xf32>
    %56 = vector.multi_reduction <maximumf>, %55, %cst_22 [1] : vector<8x8xf32> to vector<8xf32>
    %57 = vector.shape_cast %56 : vector<8xf32> to vector<8x1xf32>
    %58 = vector.broadcast %57 : vector<8x1xf32> to vector<8x8xf32>
    %59 = arith.subf %55, %58 : vector<8x8xf32>
    %60 = math.exp %59 : vector<8x8xf32>
    %cst_23 = arith.constant dense<0.000000e+00> : vector<8xf32>
    %61 = vector.multi_reduction <add>, %60, %cst_23 [1] : vector<8x8xf32> to vector<8xf32>
    %62 = vector.shape_cast %61 : vector<8xf32> to vector<8x1xf32>
    %63 = arith.truncf %60 : vector<8x8xf32> to vector<8x8xbf16>
    %64 = vector.extract_strided_slice %7 {offsets = [0, 64], sizes = [8, 32], strides = [1, 1]} : vector<8x128xbf16> to vector<8x32xbf16>
    %cst_24 = arith.constant dense<0.000000e+00> : vector<8x32xf32>
    %65 = tpu.matmul %63, %64, %cst_24 {dimension_numbers = #tpu.dot_dimension_numbers<[1], [0], [0], [1], [0, 0, 1, 1], [], []>} : vector<8x8xbf16>, vector<8x32xbf16>, vector<8x32xf32> -> vector<8x32xf32>
    %66 = tpu.reciprocal %62 {approx = true} : vector<8x1xf32> -> vector<8x1xf32>
    %67 = vector.broadcast %66 : vector<8x1xf32> to vector<8x32xf32>
    %68 = arith.mulf %65, %67 : vector<8x32xf32>
    %69 = arith.truncf %68 : vector<8x32xf32> to vector<8x32xbf16>
    %c0_25 = arith.constant 0 : index
    %c64 = arith.constant 64 : index
    %70 = vector.load %arg11[%c0_25, %c64] : memref<8x128xbf16, #tpu.memory_space<vmem>>, vector<8x32xbf16>
    tpu.vector_store %arg11[%c0_25, %c64], %69 {strides = array<i32>} : memref<8x128xbf16, #tpu.memory_space<vmem>>, vector<8x32xbf16>,
    %71 = vector.extract_strided_slice %1 {offsets = [0, 96], sizes = [8, 32], strides = [1, 1]} : vector<8x128xf32> to vector<8x32xf32>
    %cst_26 = arith.constant 0.176776692 : f32
    %72 = vector.broadcast %cst_26 : f32 to vector<8x32xf32>
    %73 = arith.mulf %71, %72 : vector<8x32xf32>
    %74 = arith.truncf %73 : vector<8x32xf32> to vector<8x32xbf16>
    %75 = vector.extract_strided_slice %4 {offsets = [0, 96], sizes = [8, 32], strides = [1, 1]} : vector<8x128xbf16> to vector<8x32xbf16>
    %cst_27 = arith.constant dense<0.000000e+00> : vector<8x8xf32>
    %76 = tpu.matmul %74, %75, %cst_27 {dimension_numbers = #tpu.dot_dimension_numbers<[1], [1], [0], [0], [0, 0, 1, 0], [], []>} : vector<8x32xbf16>, vector<8x32xbf16>, vector<8x8xf32> -> vector<8x8xf32>
    %cst_28 = arith.constant dense<0xFF800000> : vector<8xf32>
    %77 = vector.multi_reduction <maximumf>, %76, %cst_28 [1] : vector<8x8xf32> to vector<8xf32>
    %78 = vector.shape_cast %77 : vector<8xf32> to vector<8x1xf32>
    %79 = vector.broadcast %78 : vector<8x1xf32> to vector<8x8xf32>
    %80 = arith.subf %76, %79 : vector<8x8xf32>
    %81 = math.exp %80 : vector<8x8xf32>
    %cst_29 = arith.constant dense<0.000000e+00> : vector<8xf32>
    %82 = vector.multi_reduction <add>, %81, %cst_29 [1] : vector<8x8xf32> to vector<8xf32>
    %83 = vector.shape_cast %82 : vector<8xf32> to vector<8x1xf32>
    %84 = arith.truncf %81 : vector<8x8xf32> to vector<8x8xbf16>
    %85 = vector.extract_strided_slice %7 {offsets = [0, 96], sizes = [8, 32], strides = [1, 1]} : vector<8x128xbf16> to vector<8x32xbf16>
    %cst_30 = arith.constant dense<0.000000e+00> : vector<8x32xf32>
    %86 = tpu.matmul %84, %85, %cst_30 {dimension_numbers = #tpu.dot_dimension_numbers<[1], [0], [0], [1], [0, 0, 1, 1], [], []>} : vector<8x8xbf16>, vector<8x32xbf16>, vector<8x32xf32> -> vector<8x32xf32>
    %87 = tpu.reciprocal %83 {approx = true} : vector<8x1xf32> -> vector<8x1xf32>
    %88 = vector.broadcast %87 : vector<8x1xf32> to vector<8x32xf32>
    %89 = arith.mulf %86, %88 : vector<8x32xf32>
    %90 = arith.truncf %89 : vector<8x32xf32> to vector<8x32xbf16>
    %c0_31 = arith.constant 0 : index
    %c96 = arith.constant 96 : index
    %91 = vector.load %arg11[%c0_31, %c96] : memref<8x128xbf16, #tpu.memory_space<vmem>>, vector<8x32xbf16>
    tpu.vector_store %arg11[%c0_31, %c96], %90 {strides = array<i32>} : memref<8x128xbf16, #tpu.memory_space<vmem>>, vector<8x32xbf16>,
    %c0_32 = arith.constant 0 : index
    %c0_33 = arith.constant 0 : index
    %92 = vector.load %arg11[%c0_32, %c0_33] : memref<8x128xbf16, #tpu.memory_space<vmem>>, vector<8x128xbf16>
    %c0_34 = arith.constant 0 : index
    %c0_35 = arith.constant 0 : index
    %93 = vector.load %arg5[%c0_34, %c0_35] : memref<128x128xf32, #tpu.memory_space<vmem>>, vector<128x128xf32>
    %94 = arith.truncf %93 : vector<128x128xf32> to vector<128x128xbf16>
    %cst_36 = arith.constant dense<0.000000e+00> : vector<8x128xf32>
    %95 = tpu.matmul %92, %94, %cst_36 {dimension_numbers = #tpu.dot_dimension_numbers<[1], [0], [0], [1], [0, 0, 1, 1], [], []>} : vector<8x128xbf16>, vector<128x128xbf16>, vector<8x128xf32> -> vector<8x128xf32>
    %c0_37 = arith.constant 0 : index
    %c0_38 = arith.constant 0 : index
    %96 = vector.load %arg6[%c0_37, %c0_38] : memref<1x128xf32, #tpu.memory_space<vmem>>, vector<1x128xf32>
    %97 = vector.broadcast %96 : vector<1x128xf32> to vector<8x128xf32>
    %98 = arith.addf %95, %97 : vector<8x128xf32>
    %c0_39 = arith.constant 0 : index
    %c0_40 = arith.constant 0 : index
    %c0_41 = arith.constant 0 : index
    %99 = vector.load %arg7[%c0_39, %c0_40, %c0_41] : memref<1x8x128xf32, #tpu.memory_space<vmem>>, vector<1x8x128xf32>
    %100 = vector.shape_cast %99 : vector<1x8x128xf32> to vector<8x128xf32>
    %101 = arith.addf %98, %100 : vector<8x128xf32>
    %cst_42 = arith.constant dense<0.000000e+00> : vector<8xf32>
    %102 = vector.multi_reduction <add>, %101, %cst_42 [1] : vector<8x128xf32> to vector<8xf32>
    %103 = vector.shape_cast %102 : vector<8xf32> to vector<8x1xf32>
    %cst_43 = arith.constant 1.280000e+02 : f32
    %104 = vector.broadcast %cst_43 : f32 to vector<8x1xf32>
    %105 = arith.divf %103, %104 : vector<8x1xf32>
    %106 = vector.broadcast %105 : vector<8x1xf32> to vector<8x128xf32>
    %107 = arith.subf %101, %106 : vector<8x128xf32>
    %108 = arith.mulf %107, %107 : vector<8x128xf32>
    %cst_44 = arith.constant dense<0.000000e+00> : vector<8xf32>
    %109 = vector.multi_reduction <add>, %108, %cst_44 [1] : vector<8x128xf32> to vector<8xf32>
    %110 = vector.shape_cast %109 : vector<8xf32> to vector<8x1xf32>
    %cst_45 = arith.constant 1.280000e+02 : f32
    %111 = vector.broadcast %cst_45 : f32 to vector<8x1xf32>
    %112 = arith.divf %110, %111 : vector<8x1xf32>
    %cst_46 = arith.constant 9.99999974E-6 : f32
    %113 = vector.broadcast %cst_46 : f32 to vector<8x1xf32>
    %114 = arith.addf %112, %113 : vector<8x1xf32>
    %115 = math.rsqrt %114 : vector<8x1xf32>
    %116 = vector.broadcast %115 : vector<8x1xf32> to vector<8x128xf32>
    %117 = arith.mulf %107, %116 : vector<8x128xf32>
    %c0_47 = arith.constant 0 : index
    %c0_48 = arith.constant 0 : index
    %118 = vector.load %arg8[%c0_47, %c0_48] : memref<1x128xf32, #tpu.memory_space<vmem>>, vector<1x128xf32>
    %119 = vector.broadcast %118 : vector<1x128xf32> to vector<8x128xf32>
    %120 = arith.mulf %117, %119 : vector<8x128xf32>
    %c0_49 = arith.constant 0 : index
    %c0_50 = arith.constant 0 : index
    %121 = vector.load %arg9[%c0_49, %c0_50] : memref<1x128xf32, #tpu.memory_space<vmem>>, vector<1x128xf32>
    %122 = vector.broadcast %121 : vector<1x128xf32> to vector<8x128xf32>
    %123 = arith.addf %120, %122 : vector<8x128xf32>
    %c0_51 = arith.constant 0 : index
    %c0_52 = arith.constant 0 : index
    %c0_53 = arith.constant 0 : index
    %124 = vector.load %arg10[%c0_51, %c0_52, %c0_53] : memref<1x8x128xf32, #tpu.memory_space<vmem>>, vector<1x8x128xf32>
    %125 = vector.shape_cast %124 : vector<1x8x128xf32> to vector<8x128xf32>
    %126 = vector.shape_cast %123 : vector<8x128xf32> to vector<1x8x128xf32>
    tpu.vector_store %arg10[%c0_51, %c0_52, %c0_53], %126 {strides = array<i32>} : memref<1x8x128xf32, #tpu.memory_space<vmem>>, vector<1x8x128xf32>,
    return
  }
  func.func @transform_0(%arg0: i32, %arg1: i32) -> (i32, i32, i32) {
    %c0_i32 = arith.constant 0 : i32
    %c0_i32_0 = arith.constant 0 : i32
    return %arg0, %arg1, %c0_i32 : i32, i32, i32
  }
  func.func @transform_1(%arg0: i32, %arg1: i32) -> (i32, i32, i32) {
    %c0_i32 = arith.constant 0 : i32
    %c0_i32_0 = arith.constant 0 : i32
    %c0_i32_1 = arith.constant 0 : i32
    return %arg0, %c0_i32, %c0_i32_0 : i32, i32, i32
  }
  func.func @transform_2(%arg0: i32, %arg1: i32) -> (i32, i32, i32) {
    %c0_i32 = arith.constant 0 : i32
    %c1_i32 = arith.constant 1 : i32
    %c0_i32_0 = arith.constant 0 : i32
    return %arg0, %c0_i32, %c1_i32 : i32, i32, i32
  }
  func.func @transform_3(%arg0: i32, %arg1: i32) -> (i32, i32) {
    %c0_i32 = arith.constant 0 : i32
    %c0_i32_0 = arith.constant 0 : i32
    %c0_i32_1 = arith.constant 0 : i32
    return %c0_i32, %c0_i32_0 : i32, i32
  }
  func.func @transform_4(%arg0: i32, %arg1: i32) -> (i32, i32) {
    %c0_i32 = arith.constant 0 : i32
    %c0_i32_0 = arith.constant 0 : i32
    %c0_i32_1 = arith.constant 0 : i32
    return %c0_i32, %c0_i32_0 : i32, i32
  }
  func.func @transform_5(%arg0: i32, %arg1: i32) -> (i32, i32, i32) {
    %c0_i32 = arith.constant 0 : i32
    %c0_i32_0 = arith.constant 0 : i32
    return %arg0, %arg1, %c0_i32 : i32, i32, i32
  }
  func.func @transform_6(%arg0: i32, %arg1: i32) -> (i32, i32) {
    %c0_i32 = arith.constant 0 : i32
    %c0_i32_0 = arith.constant 0 : i32
    %c0_i32_1 = arith.constant 0 : i32
    return %c0_i32, %c0_i32_0 : i32, i32
  }
  func.func @transform_7(%arg0: i32, %arg1: i32) -> (i32, i32) {
    %c0_i32 = arith.constant 0 : i32
    %c0_i32_0 = arith.constant 0 : i32
    %c0_i32_1 = arith.constant 0 : i32
    return %c0_i32, %c0_i32_0 : i32, i32
  }
  func.func @transform_8(%arg0: i32, %arg1: i32) -> (i32, i32, i32) {
    %c0_i32 = arith.constant 0 : i32
    %c0_i32_0 = arith.constant 0 : i32
    return %arg0, %arg1, %c0_i32 : i32, i32, i32
  }
}

</mosaic_0001>

<llo_original>
// kernel: transformer_forward.35
$region0: #{transformer_forward.35}
  #allocation0 [shape = 'u32[]', space=smem, size = 0x4, offset = 0x4, fixed_abs, tag = 'smem constant byte address 0x4 - core index']
  #allocation1 [shape = 'u32[144,128]{1,0:T(1,128)}', space=vmem, size = 0x12000, scoped, tag = 'internal scratch']
  %s0 = inlined_call_operand.vmem [shape: f32[16,128], index: 0, kind: input, shape index: {}]
  %s1 = inlined_call_operand.vmem [shape: f32[128,128], index: 1, kind: input, shape index: {}]
  %s2 = inlined_call_operand.vmem [shape: f32[1,128], index: 2, kind: input, shape index: {}]
  %s3 = inlined_call_operand.vmem [shape: f32[16,128], index: 3, kind: output, shape index: {}]
  %s4 = sld [smem:[#allocation0]]
  $region22: #{transformer_forward.35} parent=0
    _
  %s6 = ssub.s32 1, %s4
  %s7 = scalar_select 0, %s6, %s4
  // Predicated region
  $region2: #{transformer_forward.35} parent=0 // pred_check
    _
  $region3: #{transformer_forward.35} parent=0 // pred_check_branch
    %9 = sbr.rel (0) target = $region5
  $region4: #{transformer_forward.35} parent=0 // pred_region
    _
  $region5: #{transformer_forward.35} parent=0 // pred_fallthru
    _
  // Predicated region
  $region6: #{transformer_forward.35} parent=0 // pred_check
    _
  $region7: #{transformer_forward.35} parent=0 // pred_check_branch
    %11 = sbr.rel (0) target = $region9
  $region8: #{transformer_forward.35} parent=0 // pred_region
    _
  $region9: #{transformer_forward.35} parent=0 // pred_fallthru
    _
  // Predicated region
  $region10: #{transformer_forward.35} parent=0 // pred_check
    _
  $region11: #{transformer_forward.35} parent=0 // pred_check_branch
    %13 = sbr.rel (0) target = $region13
  $region12: #{transformer_forward.35} parent=0 // pred_region
    _
  $region13: #{transformer_forward.35} parent=0 // pred_fallthru
    _
  %v15 = vld [vmem:[%s0] sm:$0xff]
  %v16 = vld [vmem:[%s0 + $0x8] sm:$0xff]
  %v17 = vpack.c.bf16 %v16, %v15
  %v18 = vld [vmem:[%s1] sm:$0xff]
  %v19 = vld [vmem:[%s1 + $0x8] sm:$0xff]
  %v20 = vld [vmem:[%s1 + $0x10] sm:$0xff]
  %v21 = vld [vmem:[%s1 + $0x18] sm:$0xff]
  %v22 = vld [vmem:[%s1 + $0x20] sm:$0xff]
  %v23 = vld [vmem:[%s1 + $0x28] sm:$0xff]
  %v24 = vld [vmem:[%s1 + $0x30] sm:$0xff]
  %v25 = vld [vmem:[%s1 + $0x38] sm:$0xff]
  %v26 = vld [vmem:[%s1 + $0x40] sm:$0xff]
  %v27 = vld [vmem:[%s1 + $0x48] sm:$0xff]
  %v28 = vld [vmem:[%s1 + $0x50] sm:$0xff]
  %v29 = vld [vmem:[%s1 + $0x58] sm:$0xff]
  %v30 = vld [vmem:[%s1 + $0x60] sm:$0xff]
  %v31 = vld [vmem:[%s1 + $0x68] sm:$0xff]
  %v32 = vld [vmem:[%s1 + $0x70] sm:$0xff]
  %v33 = vld [vmem:[%s1 + $0x78] sm:$0xff]
  %v34 = vpack.c.bf16 %v19, %v18
  %v35 = vpack.c.bf16 %v21, %v20
  %v36 = vpack.c.bf16 %v23, %v22
  %v37 = vpack.c.bf16 %v25, %v24
  %v38 = vpack.c.bf16 %v27, %v26
  %v39 = vpack.c.bf16 %v29, %v28
  %v40 = vpack.c.bf16 %v31, %v30
  %v41 = vpack.c.bf16 %v33, %v32
  %v42 = vld [vmem:[%s2] sm:$0x1]
  %v44 = vlaneseq
  %v45 = vshrl.u32 %v44, 7
  %v46 = vsub.s32 0, %v45
  %v47 = vrot.slane %v42, %v46
  %49 = vmatprep.subr.bf16.mxu0 0
  %50 = vmatpush1.bf16.msra.mxu0 %v34
  %51 = vmatprep.subr.bf16.mxu0 0
  %52 = vmatpush1.bf16.msra.mxu0 %v35
  %53 = vmatprep.subr.bf16.mxu0 0
  %54 = vmatpush1.bf16.msra.mxu0 %v36
  %55 = vmatprep.subr.bf16.mxu0 0
  %56 = vmatpush1.bf16.msra.mxu0 %v37
  %57 = vmatprep.subr.bf16.mxu0 0
  %58 = vmatpush1.bf16.msra.mxu0 %v38
  %59 = vmatprep.subr.bf16.mxu0 0
  %60 = vmatpush1.bf16.msra.mxu0 %v39
  %61 = vmatprep.subr.bf16.mxu0 0
  %62 = vmatpush1.bf16.msra.mxu0 %v40
  %63 = vmatprep.subr.bf16.mxu0 0
  %64 = vmatpush1.bf16.msra.mxu0 %v41
  %65 = vmatprep.subr.bf16.mxu0 0
  %66 = vmatpush1.bf16.msra.mxu0 0
  %67 = vmatprep.subr.bf16.mxu0 0
  %68 = vmatpush1.bf16.msra.mxu0 0
  %69 = vmatprep.subr.bf16.mxu0 0
  %70 = vmatpush1.bf16.msra.mxu0 0
  %71 = vmatprep.subr.bf16.mxu0 0
  %72 = vmatpush1.bf16.msra.mxu0 0
  %73 = vmatprep.subr.bf16.mxu0 0
  %74 = vmatpush1.bf16.msra.mxu0 0
  %75 = vmatprep.subr.bf16.mxu0 0
  %76 = vmatpush1.bf16.msra.mxu0 0
  %77 = vmatprep.subr.bf16.mxu0 0
  %78 = vmatpush1.bf16.msra.mxu0 0
  %79 = vmatprep.subr.bf16.mxu0 0
  %80 = vmatpush1.bf16.msra.mxu0 0
  %81 = vmatprep.mubr.bf16.mxu0 0
  %82 = vmatmul.mubr.bf16.gmra.mrb[0].mxu0 %v17
  %v83 = vpop.f32.mrb[0].mxu0
  %v84 = vadd.f32 %v47, %v83
  %v85 = vpop.f32.mrb[0].mxu0
  %v86 = vpop.f32.mrb[0].mxu0
  %v87 = vadd.f32 %v47, %v86
  %v88 = vpop.f32.mrb[0].mxu0
  %89 = vdwg.mxu0
  %90 = vst [vmem:[%s3] sm:$0xff] %v84
  %91 = vst [vmem:[%s3 + $0x8] sm:$0xff] %v87
  // Predicated region
  $region14: #{transformer_forward.35} parent=0 // pred_check
    _
  $region15: #{transformer_forward.35} parent=0 // pred_check_branch
    %93 = sbr.rel (0) target = $region17
  $region16: #{transformer_forward.35} parent=0 // pred_region
    _
  $region17: #{transformer_forward.35} parent=0 // pred_fallthru
    _
  // Predicated region
  $region18: #{transformer_forward.35} parent=0 // pred_check
    _
  $region19: #{transformer_forward.35} parent=0 // pred_check_branch
    %95 = sbr.rel (0) target = $region21
  $region20: #{transformer_forward.35} parent=0 // pred_region
    _
  $region21: #{transformer_forward.35} parent=0 // pred_fallthru
    _

// kernel: transformer_forward.33
$region0: #{transformer_forward.33}
  #allocation0 [shape = 'u32[]', space=smem, size = 0x4, offset = 0x4, fixed_abs, tag = 'smem constant byte address 0x4 - core index']
  #allocation1 [shape = 'u32[144,128]{1,0:T(1,128)}', space=vmem, size = 0x12000, scoped, tag = 'internal scratch']
  %s0 = inlined_call_operand.vmem [shape: f32[16,128], index: 0, kind: input, shape index: {}]
  %s1 = inlined_call_operand.hbm [shape: f32[128,384], index: 1, kind: input, shape index: {}]
  %s2 = inlined_call_operand.vmem [shape: f32[1,384], index: 2, kind: input, shape index: {}]
  %s3 = inlined_call_operand.vmem [shape: f32[16,384], index: 3, kind: output, shape index: {}]
  %s4 = sld [smem:[#allocation0]]
  $region26: #{transformer_forward.33} parent=0
    _
  %s6 = ssub.s32 1, %s4
  %s7 = scalar_select 0, %s6, %s4
  $region1: #{transformer_forward.33} parent=0
    #allocation2 [shape = 'u8[196608]{0}', space=vmem, size = 0x30000, scoped, tag = 'input window, operand 1, single buffered']
    #allocation3 [shape = 's32[1]{0}', space=sflag, size = 0x4, scoped, tag = 'scoped memory for transformer_forward.33']
    %8 = vsyncpa [#allocation3], 0
    // Predicated region
    $region2: #{transformer_forward.33} parent=1 // pred_check
      _
    $region3: #{transformer_forward.33} parent=1 // pred_check_branch
      %10 = sbr.rel (0) target = $region5
    $region4: #{transformer_forward.33} parent=1 // pred_region
      _
    $region5: #{transformer_forward.33} parent=1 // pred_fallthru
      _
    // Predicated region
    $region6: #{transformer_forward.33} parent=1 // pred_check
      _
    $region7: #{transformer_forward.33} parent=1 // pred_check_branch
      %12 = sbr.rel (0) target = $region9
    $region8: #{transformer_forward.33} parent=1 // pred_region
      %s14 = ssub.s32 6144, 6144
      %15 = vsyncadd [#allocation3], %s14
      %s16 = sshll.u32 [#allocation2], 4
      %s17 = int_to_ptr.vmem [resolvable:$true] %s16
      %22 = dma.hbm_to_vmem [thread:$0]  %s1, 6144, %s17, [#allocation3], 384, 384, 24
    $region9: #{transformer_forward.33} parent=1 // pred_fallthru
      _
    // Predicated region
    $region10: #{transformer_forward.33} parent=1 // pred_check
      _
    $region11: #{transformer_forward.33} parent=1 // pred_check_branch
      %24 = sbr.rel (0) target = $region13
    $region12: #{transformer_forward.33} parent=1 // pred_region
      _
    $region13: #{transformer_forward.33} parent=1 // pred_fallthru
      _
    // Predicated region
    $region14: #{transformer_forward.33} parent=1 // pred_check
      _
    $region15: #{transformer_forward.33} parent=1 // pred_check_branch
      %26 = sbr.rel (0) target = $region17
    $region16: #{transformer_forward.33} parent=1 // pred_region
      %27 = dma.done [#allocation3], 6144
    $region17: #{transformer_forward.33} parent=1 // pred_fallthru
      _
    %v29 = vld [vmem:[%s0] sm:$0xff]
    %v30 = vld [vmem:[%s0 + $0x8] sm:$0xff]
    %v31 = vpack.c.bf16 %v30, %v29
    %v32 = vld [vmem:[#allocation2] sm:$0xff]
    %v33 = vld [vmem:[#allocation2 + $0x8] sm:$0xff]
    %v34 = vld [vmem:[#allocation2 + $0x10] sm:$0xff]
    %v35 = vld [vmem:[#allocation2 + $0x18] sm:$0xff]
    %v36 = vld [vmem:[#allocation2 + $0x20] sm:$0xff]
    %v37 = vld [vmem:[#allocation2 + $0x28] sm:$0xff]
    %v38 = vld [vmem:[#allocation2 + $0x30] sm:$0xff]
    %v39 = vld [vmem:[#allocation2 + $0x38] sm:$0xff]
    %v40 = vld [vmem:[#allocation2 + $0x40] sm:$0xff]
    %v41 = vld [vmem:[#allocation2 + $0x48] sm:$0xff]
    %v42 = vld [vmem:[#allocation2 + $0x50] sm:$0xff]
    %v43 = vld [vmem:[#allocation2 + $0x58] sm:$0xff]
    %v44 = vld [vmem:[#allocation2 + $0x60] sm:$0xff]
    %v45 = vld [vmem:[#allocation2 + $0x68] sm:$0xff]
    %v46 = vld [vmem:[#allocation2 + $0x70] sm:$0xff]
    %v47 = vld [vmem:[#allocation2 + $0x78] sm:$0xff]
    %v48 = vld [vmem:[#allocation2 + $0x80] sm:$0xff]
    %v49 = vld [vmem:[#allocation2 + $0x88] sm:$0xff]
    %v50 = vld [vmem:[#allocation2 + $0x90] sm:$0xff]
    %v51 = vld [vmem:[#allocation2 + $0x98] sm:$0xff]
    %v52 = vld [vmem:[#allocation2 + $0xa0] sm:$0xff]
    %v53 = vld [vmem:[#allocation2 + $0xa8] sm:$0xff]
    %v54 = vld [vmem:[#allocation2 + $0xb0] sm:$0xff]
    %v55 = vld [vmem:[#allocation2 + $0xb8] sm:$0xff]
    %v56 = vld [vmem:[#allocation2 + $0xc0] sm:$0xff]
    %v57 = vld [vmem:[#allocation2 + $0xc8] sm:$0xff]
    %v58 = vld [vmem:[#allocation2 + $0xd0] sm:$0xff]
    %v59 = vld [vmem:[#allocation2 + $0xd8] sm:$0xff]
    %v60 = vld [vmem:[#allocation2 + $0xe0] sm:$0xff]
    %v61 = vld [vmem:[#allocation2 + $0xe8] sm:$0xff]
    %v62 = vld [vmem:[#allocation2 + $0xf0] sm:$0xff]
    %v63 = vld [vmem:[#allocation2 + $0xf8] sm:$0xff]
    %v64 = vld [vmem:[#allocation2 + $0x100] sm:$0xff]
    %v65 = vld [vmem:[#allocation2 + $0x108] sm:$0xff]
    %v66 = vld [vmem:[#allocation2 + $0x110] sm:$0xff]
    %v67 = vld [vmem:[#allocation2 + $0x118] sm:$0xff]
    %v68 = vld [vmem:[#allocation2 + $0x120] sm:$0xff]
    %v69 = vld [vmem:[#allocation2 + $0x128] sm:$0xff]
    %v70 = vld [vmem:[#allocation2 + $0x130] sm:$0xff]
    %v71 = vld [vmem:[#allocation2 + $0x138] sm:$0xff]
    %v72 = vld [vmem:[#allocation2 + $0x140] sm:$0xff]
    %v73 = vld [vmem:[#allocation2 + $0x148] sm:$0xff]
    %v74 = vld [vmem:[#allocation2 + $0x150] sm:$0xff]
    %v75 = vld [vmem:[#allocation2 + $0x158] sm:$0xff]
    %v76 = vld [vmem:[#allocation2 + $0x160] sm:$0xff]
    %v77 = vld [vmem:[#allocation2 + $0x168] sm:$0xff]
    %v78 = vld [vmem:[#allocation2 + $0x170] sm:$0xff]
    %v79 = vld [vmem:[#allocation2 + $0x178] sm:$0xff]
    %v80 = vpack.c.bf16 %v35, %v32
    %v81 = vpack.c.bf16 %v36, %v33
    %v82 = vpack.c.bf16 %v37, %v34
    %v83 = vpack.c.bf16 %v41, %v38
    %v84 = vpack.c.bf16 %v42, %v39
    %v85 = vpack.c.bf16 %v43, %v40
    %v86 = vpack.c.bf16 %v47, %v44
    %v87 = vpack.c.bf16 %v48, %v45
    %v88 = vpack.c.bf16 %v49, %v46
    %v89 = vpack.c.bf16 %v53, %v50
    %v90 = vpack.c.bf16 %v54, %v51
    %v91 = vpack.c.bf16 %v55, %v52
    %v92 = vpack.c.bf16 %v59, %v56
    %v93 = vpack.c.bf16 %v60, %v57
    %v94 = vpack.c.bf16 %v61, %v58
    %v95 = vpack.c.bf16 %v65, %v62
    %v96 = vpack.c.bf16 %v66, %v63
    %v97 = vpack.c.bf16 %v67, %v64
    %v98 = vpack.c.bf16 %v71, %v68
    %v99 = vpack.c.bf16 %v72, %v69
    %v100 = vpack.c.bf16 %v73, %v70
    %v101 = vpack.c.bf16 %v77, %v74
    %v102 = vpack.c.bf16 %v78, %v75
    %v103 = vpack.c.bf16 %v79, %v76
    %v104 = vld [vmem:[%s2] sm:$0x7]
    %v106 = vlaneseq
    %v107 = vshrl.u32 %v106, 7
    %v108 = vsub.s32 0, %v107
    %v109 = vrot.slane %v104, %v108
    %v110 = vlaneseq
    %v111 = vshrl.u32 %v110, 7
    %v112 = vsub.s32 1, %v111
    %v113 = vrot.slane %v104, %v112
    %v114 = vlaneseq
    %v115 = vshrl.u32 %v114, 7
    %v116 = vsub.s32 2, %v115
    %v117 = vrot.slane %v104, %v116
    %121 = vmatprep.subr.bf16.mxu0 %v81
    %122 = vmatpush1.bf16.msra.mxu0 %v80
    %123 = vmatprep.subr.bf16.mxu0 %v84
    %124 = vmatpush1.bf16.msra.mxu0 %v83
    %125 = vmatprep.subr.bf16.mxu0 %v87
    %126 = vmatpush1.bf16.msra.mxu0 %v86
    %127 = vmatprep.subr.bf16.mxu0 %v90
    %128 = vmatpush1.bf16.msra.mxu0 %v89
    %129 = vmatprep.subr.bf16.mxu0 %v93
    %130 = vmatpush1.bf16.msra.mxu0 %v92
    %131 = vmatprep.subr.bf16.mxu0 %v96
    %132 = vmatpush1.bf16.msra.mxu0 %v95
    %133 = vmatprep.subr.bf16.mxu0 %v99
    %134 = vmatpush1.bf16.msra.mxu0 %v98
    %135 = vmatprep.subr.bf16.mxu0 %v102
    %136 = vmatpush1.bf16.msra.mxu0 %v101
    %137 = vmatprep.subr.bf16.mxu0 0
    %138 = vmatpush1.bf16.msra.mxu0 0
    %139 = vmatprep.subr.bf16.mxu0 0
    %140 = vmatpush1.bf16.msra.mxu0 0
    %141 = vmatprep.subr.bf16.mxu0 0
    %142 = vmatpush1.bf16.msra.mxu0 0
    %143 = vmatprep.subr.bf16.mxu0 0
    %144 = vmatpush1.bf16.msra.mxu0 0
    %145 = vmatprep.subr.bf16.mxu0 0
    %146 = vmatpush1.bf16.msra.mxu0 0
    %147 = vmatprep.subr.bf16.mxu0 0
    %148 = vmatpush1.bf16.msra.mxu0 0
    %149 = vmatprep.subr.bf16.mxu0 0
    %150 = vmatpush1.bf16.msra.mxu0 0
    %151 = vmatprep.subr.bf16.mxu0 0
    %152 = vmatpush1.bf16.msra.mxu0 0
    %153 = vmatprep.mubr.bf16.mxu0 0
    %154 = vmatmul.mubr.bf16.gmra.mrb[0].mxu0 %v31
    %v155 = vpop.f32.mrb[0].mxu0
    %v156 = vadd.f32 %v109, %v155
    %v157 = vpop.f32.mrb[0].mxu0
    %v158 = vadd.f32 %v113, %v157
    %v159 = vpop.f32.mrb[0].mxu0
    %v160 = vadd.f32 %v109, %v159
    %v161 = vpop.f32.mrb[0].mxu0
    %v162 = vadd.f32 %v113, %v161
    %163 = vdwg.mxu0
    %164 = vmatprep.subr.bf16.mxu0 0
    %165 = vmatpush1.bf16.msra.mxu0 %v82
    %166 = vmatprep.subr.bf16.mxu0 0
    %167 = vmatpush1.bf16.msra.mxu0 %v85
    %168 = vmatprep.subr.bf16.mxu0 0
    %169 = vmatpush1.bf16.msra.mxu0 %v88
    %170 = vmatprep.subr.bf16.mxu0 0
    %171 = vmatpush1.bf16.msra.mxu0 %v91
    %172 = vmatprep.subr.bf16.mxu0 0
    %173 = vmatpush1.bf16.msra.mxu0 %v94
    %174 = vmatprep.subr.bf16.mxu0 0
    %175 = vmatpush1.bf16.msra.mxu0 %v97
    %176 = vmatprep.subr.bf16.mxu0 0
    %177 = vmatpush1.bf16.msra.mxu0 %v100
    %178 = vmatprep.subr.bf16.mxu0 0
    %179 = vmatpush1.bf16.msra.mxu0 %v103
    %180 = vmatprep.subr.bf16.mxu0 0
    %181 = vmatpush1.bf16.msra.mxu0 0
    %182 = vmatprep.subr.bf16.mxu0 0
    %183 = vmatpush1.bf16.msra.mxu0 0
    %184 = vmatprep.subr.bf16.mxu0 0
    %185 = vmatpush1.bf16.msra.mxu0 0
    %186 = vmatprep.subr.bf16.mxu0 0
    %187 = vmatpush1.bf16.msra.mxu0 0
    %188 = vmatprep.subr.bf16.mxu0 0
    %189 = vmatpush1.bf16.msra.mxu0 0
    %190 = vmatprep.subr.bf16.mxu0 0
    %191 = vmatpush1.bf16.msra.mxu0 0
    %192 = vmatprep.subr.bf16.mxu0 0
    %193 = vmatpush1.bf16.msra.mxu0 0
    %194 = vmatprep.subr.bf16.mxu0 0
    %195 = vmatpush1.bf16.msra.mxu0 0
    %196 = vmatprep.mubr.bf16.mxu0 0
    %197 = vmatmul.mubr.bf16.gmra.mrb[0].mxu0 %v31
    %v198 = vpop.f32.mrb[0].mxu0
    %v199 = vadd.f32 %v117, %v198
    %v200 = vpop.f32.mrb[0].mxu0
    %v201 = vpop.f32.mrb[0].mxu0
    %v202 = vadd.f32 %v117, %v201
    %v203 = vpop.f32.mrb[0].mxu0
    %204 = vdwg.mxu0
    %205 = vst [vmem:[%s3] sm:$0xff] %v156
    %206 = vst [vmem:[%s3 + $0x8] sm:$0xff] %v158
    %207 = vst [vmem:[%s3 + $0x10] sm:$0xff] %v199
    %208 = vst [vmem:[%s3 + $0x18] sm:$0xff] %v160
    %209 = vst [vmem:[%s3 + $0x20] sm:$0xff] %v162
    %210 = vst [vmem:[%s3 + $0x28] sm:$0xff] %v202
    // Predicated region
    $region18: #{transformer_forward.33} parent=1 // pred_check
      _
    $region19: #{transformer_forward.33} parent=1 // pred_check_branch
      %212 = sbr.rel (0) target = $region21
    $region20: #{transformer_forward.33} parent=1 // pred_region
      _
    $region21: #{transformer_forward.33} parent=1 // pred_fallthru
      _
    // Predicated region
    $region22: #{transformer_forward.33} parent=1 // pred_check
      _
    $region23: #{transformer_forward.33} parent=1 // pred_check_branch
      %214 = sbr.rel (0) target = $region25
    $region24: #{transformer_forward.33} parent=1 // pred_region
      _
    $region25: #{transformer_forward.33} parent=1 // pred_fallthru
      _
    %215 = vsyncpa [#allocation3], 1

// kernel: transformer_forward.24
$region0: #{transformer_forward.24}
  #allocation0 [shape = 'u32[]', space=smem, size = 0x4, offset = 0x4, fixed_abs, tag = 'smem constant byte address 0x4 - core index']
  #allocation1 [shape = 'u32[144,128]{1,0:T(1,128)}', space=vmem, size = 0x12000, scoped, tag = 'internal scratch']
  %s0 = inlined_call_operand.vmem [shape: f32[16,128], index: 0, kind: input, shape index: {}]
  %s1 = inlined_call_operand.vmem [shape: f32[128,384], index: 1, kind: input, shape index: {}]
  %s2 = inlined_call_operand.vmem [shape: f32[1,384], index: 2, kind: input, shape index: {}]
  %s3 = inlined_call_operand.vmem [shape: f32[16,384], index: 3, kind: output, shape index: {}]
  %s4 = sld [smem:[#allocation0]]
  $region22: #{transformer_forward.24} parent=0
    _
  %s6 = ssub.s32 1, %s4
  %s7 = scalar_select 0, %s6, %s4
  // Predicated region
  $region2: #{transformer_forward.24} parent=0 // pred_check
    _
  $region3: #{transformer_forward.24} parent=0 // pred_check_branch
    %9 = sbr.rel (0) target = $region5
  $region4: #{transformer_forward.24} parent=0 // pred_region
    _
  $region5: #{transformer_forward.24} parent=0 // pred_fallthru
    _
  // Predicated region
  $region6: #{transformer_forward.24} parent=0 // pred_check
    _
  $region7: #{transformer_forward.24} parent=0 // pred_check_branch
    %11 = sbr.rel (0) target = $region9
  $region8: #{transformer_forward.24} parent=0 // pred_region
    _
  $region9: #{transformer_forward.24} parent=0 // pred_fallthru
    _
  // Predicated region
  $region10: #{transformer_forward.24} parent=0 // pred_check
    _
  $region11: #{transformer_forward.24} parent=0 // pred_check_branch
    %13 = sbr.rel (0) target = $region13
  $region12: #{transformer_forward.24} parent=0 // pred_region
    _
  $region13: #{transformer_forward.24} parent=0 // pred_fallthru
    _
  %v15 = vld [vmem:[%s0] sm:$0xff]
  %v16 = vld [vmem:[%s0 + $0x8] sm:$0xff]
  %v17 = vpack.c.bf16 %v16, %v15
  %v18 = vld [vmem:[%s1] sm:$0xff]
  %v19 = vld [vmem:[%s1 + $0x8] sm:$0xff]
  %v20 = vld [vmem:[%s1 + $0x10] sm:$0xff]
  %v21 = vld [vmem:[%s1 + $0x18] sm:$0xff]
  %v22 = vld [vmem:[%s1 + $0x20] sm:$0xff]
  %v23 = vld [vmem:[%s1 + $0x28] sm:$0xff]
  %v24 = vld [vmem:[%s1 + $0x30] sm:$0xff]
  %v25 = vld [vmem:[%s1 + $0x38] sm:$0xff]
  %v26 = vld [vmem:[%s1 + $0x40] sm:$0xff]
  %v27 = vld [vmem:[%s1 + $0x48] sm:$0xff]
  %v28 = vld [vmem:[%s1 + $0x50] sm:$0xff]
  %v29 = vld [vmem:[%s1 + $0x58] sm:$0xff]
  %v30 = vld [vmem:[%s1 + $0x60] sm:$0xff]
  %v31 = vld [vmem:[%s1 + $0x68] sm:$0xff]
  %v32 = vld [vmem:[%s1 + $0x70] sm:$0xff]
  %v33 = vld [vmem:[%s1 + $0x78] sm:$0xff]
  %v34 = vld [vmem:[%s1 + $0x80] sm:$0xff]
  %v35 = vld [vmem:[%s1 + $0x88] sm:$0xff]
  %v36 = vld [vmem:[%s1 + $0x90] sm:$0xff]
  %v37 = vld [vmem:[%s1 + $0x98] sm:$0xff]
  %v38 = vld [vmem:[%s1 + $0xa0] sm:$0xff]
  %v39 = vld [vmem:[%s1 + $0xa8] sm:$0xff]
  %v40 = vld [vmem:[%s1 + $0xb0] sm:$0xff]
  %v41 = vld [vmem:[%s1 + $0xb8] sm:$0xff]
  %v42 = vld [vmem:[%s1 + $0xc0] sm:$0xff]
  %v43 = vld [vmem:[%s1 + $0xc8] sm:$0xff]
  %v44 = vld [vmem:[%s1 + $0xd0] sm:$0xff]
  %v45 = vld [vmem:[%s1 + $0xd8] sm:$0xff]
  %v46 = vld [vmem:[%s1 + $0xe0] sm:$0xff]
  %v47 = vld [vmem:[%s1 + $0xe8] sm:$0xff]
  %v48 = vld [vmem:[%s1 + $0xf0] sm:$0xff]
  %v49 = vld [vmem:[%s1 + $0xf8] sm:$0xff]
  %v50 = vld [vmem:[%s1 + $0x100] sm:$0xff]
  %v51 = vld [vmem:[%s1 + $0x108] sm:$0xff]
  %v52 = vld [vmem:[%s1 + $0x110] sm:$0xff]
  %v53 = vld [vmem:[%s1 + $0x118] sm:$0xff]
  %v54 = vld [vmem:[%s1 + $0x120] sm:$0xff]
  %v55 = vld [vmem:[%s1 + $0x128] sm:$0xff]
  %v56 = vld [vmem:[%s1 + $0x130] sm:$0xff]
  %v57 = vld [vmem:[%s1 + $0x138] sm:$0xff]
  %v58 = vld [vmem:[%s1 + $0x140] sm:$0xff]
  %v59 = vld [vmem:[%s1 + $0x148] sm:$0xff]
  %v60 = vld [vmem:[%s1 + $0x150] sm:$0xff]
  %v61 = vld [vmem:[%s1 + $0x158] sm:$0xff]
  %v62 = vld [vmem:[%s1 + $0x160] sm:$0xff]
  %v63 = vld [vmem:[%s1 + $0x168] sm:$0xff]
  %v64 = vld [vmem:[%s1 + $0x170] sm:$0xff]
  %v65 = vld [vmem:[%s1 + $0x178] sm:$0xff]
  %v66 = vpack.c.bf16 %v21, %v18
  %v67 = vpack.c.bf16 %v22, %v19
  %v68 = vpack.c.bf16 %v23, %v20
  %v69 = vpack.c.bf16 %v27, %v24
  %v70 = vpack.c.bf16 %v28, %v25
  %v71 = vpack.c.bf16 %v29, %v26
  %v72 = vpack.c.bf16 %v33, %v30
  %v73 = vpack.c.bf16 %v34, %v31
  %v74 = vpack.c.bf16 %v35, %v32
  %v75 = vpack.c.bf16 %v39, %v36
  %v76 = vpack.c.bf16 %v40, %v37
  %v77 = vpack.c.bf16 %v41, %v38
  %v78 = vpack.c.bf16 %v45, %v42
  %v79 = vpack.c.bf16 %v46, %v43
  %v80 = vpack.c.bf16 %v47, %v44
  %v81 = vpack.c.bf16 %v51, %v48
  %v82 = vpack.c.bf16 %v52, %v49
  %v83 = vpack.c.bf16 %v53, %v50
  %v84 = vpack.c.bf16 %v57, %v54
  %v85 = vpack.c.bf16 %v58, %v55
  %v86 = vpack.c.bf16 %v59, %v56
  %v87 = vpack.c.bf16 %v63, %v60
  %v88 = vpack.c.bf16 %v64, %v61
  %v89 = vpack.c.bf16 %v65, %v62
  %v90 = vld [vmem:[%s2] sm:$0x7]
  %v92 = vlaneseq
  %v93 = vshrl.u32 %v92, 7
  %v94 = vsub.s32 0, %v93
  %v95 = vrot.slane %v90, %v94
  %v96 = vlaneseq
  %v97 = vshrl.u32 %v96, 7
  %v98 = vsub.s32 1, %v97
  %v99 = vrot.slane %v90, %v98
  %v100 = vlaneseq
  %v101 = vshrl.u32 %v100, 7
  %v102 = vsub.s32 2, %v101
  %v103 = vrot.slane %v90, %v102
  %107 = vmatprep.subr.bf16.mxu0 %v67
  %108 = vmatpush1.bf16.msra.mxu0 %v66
  %109 = vmatprep.subr.bf16.mxu0 %v70
  %110 = vmatpush1.bf16.msra.mxu0 %v69
  %111 = vmatprep.subr.bf16.mxu0 %v73
  %112 = vmatpush1.bf16.msra.mxu0 %v72
  %113 = vmatprep.subr.bf16.mxu0 %v76
  %114 = vmatpush1.bf16.msra.mxu0 %v75
  %115 = vmatprep.subr.bf16.mxu0 %v79
  %116 = vmatpush1.bf16.msra.mxu0 %v78
  %117 = vmatprep.subr.bf16.mxu0 %v82
  %118 = vmatpush1.bf16.msra.mxu0 %v81
  %119 = vmatprep.subr.bf16.mxu0 %v85
  %120 = vmatpush1.bf16.msra.mxu0 %v84
  %121 = vmatprep.subr.bf16.mxu0 %v88
  %122 = vmatpush1.bf16.msra.mxu0 %v87
  %123 = vmatprep.subr.bf16.mxu0 0
  %124 = vmatpush1.bf16.msra.mxu0 0
  %125 = vmatprep.subr.bf16.mxu0 0
  %126 = vmatpush1.bf16.msra.mxu0 0
  %127 = vmatprep.subr.bf16.mxu0 0
  %128 = vmatpush1.bf16.msra.mxu0 0
  %129 = vmatprep.subr.bf16.mxu0 0
  %130 = vmatpush1.bf16.msra.mxu0 0
  %131 = vmatprep.subr.bf16.mxu0 0
  %132 = vmatpush1.bf16.msra.mxu0 0
  %133 = vmatprep.subr.bf16.mxu0 0
  %134 = vmatpush1.bf16.msra.mxu0 0
  %135 = vmatprep.subr.bf16.mxu0 0
  %136 = vmatpush1.bf16.msra.mxu0 0
  %137 = vmatprep.subr.bf16.mxu0 0
  %138 = vmatpush1.bf16.msra.mxu0 0
  %139 = vmatprep.mubr.bf16.mxu0 0
  %140 = vmatmul.mubr.bf16.gmra.mrb[0].mxu0 %v17
  %v141 = vpop.f32.mrb[0].mxu0
  %v142 = vadd.f32 %v95, %v141
  %v143 = vpop.f32.mrb[0].mxu0
  %v144 = vadd.f32 %v99, %v143
  %v145 = vpop.f32.mrb[0].mxu0
  %v146 = vadd.f32 %v95, %v145
  %v147 = vpop.f32.mrb[0].mxu0
  %v148 = vadd.f32 %v99, %v147
  %149 = vdwg.mxu0
  %150 = vmatprep.subr.bf16.mxu0 0
  %151 = vmatpush1.bf16.msra.mxu0 %v68
  %152 = vmatprep.subr.bf16.mxu0 0
  %153 = vmatpush1.bf16.msra.mxu0 %v71
  %154 = vmatprep.subr.bf16.mxu0 0
  %155 = vmatpush1.bf16.msra.mxu0 %v74
  %156 = vmatprep.subr.bf16.mxu0 0
  %157 = vmatpush1.bf16.msra.mxu0 %v77
  %158 = vmatprep.subr.bf16.mxu0 0
  %159 = vmatpush1.bf16.msra.mxu0 %v80
  %160 = vmatprep.subr.bf16.mxu0 0
  %161 = vmatpush1.bf16.msra.mxu0 %v83
  %162 = vmatprep.subr.bf16.mxu0 0
  %163 = vmatpush1.bf16.msra.mxu0 %v86
  %164 = vmatprep.subr.bf16.mxu0 0
  %165 = vmatpush1.bf16.msra.mxu0 %v89
  %166 = vmatprep.subr.bf16.mxu0 0
  %167 = vmatpush1.bf16.msra.mxu0 0
  %168 = vmatprep.subr.bf16.mxu0 0
  %169 = vmatpush1.bf16.msra.mxu0 0
  %170 = vmatprep.subr.bf16.mxu0 0
  %171 = vmatpush1.bf16.msra.mxu0 0
  %172 = vmatprep.subr.bf16.mxu0 0
  %173 = vmatpush1.bf16.msra.mxu0 0
  %174 = vmatprep.subr.bf16.mxu0 0
  %175 = vmatpush1.bf16.msra.mxu0 0
  %176 = vmatprep.subr.bf16.mxu0 0
  %177 = vmatpush1.bf16.msra.mxu0 0
  %178 = vmatprep.subr.bf16.mxu0 0
  %179 = vmatpush1.bf16.msra.mxu0 0
  %180 = vmatprep.subr.bf16.mxu0 0
  %181 = vmatpush1.bf16.msra.mxu0 0
  %182 = vmatprep.mubr.bf16.mxu0 0
  %183 = vmatmul.mubr.bf16.gmra.mrb[0].mxu0 %v17
  %v184 = vpop.f32.mrb[0].mxu0
  %v185 = vadd.f32 %v103, %v184
  %v186 = vpop.f32.mrb[0].mxu0
  %v187 = vpop.f32.mrb[0].mxu0
  %v188 = vadd.f32 %v103, %v187
  %v189 = vpop.f32.mrb[0].mxu0
  %190 = vdwg.mxu0
  %191 = vst [vmem:[%s3] sm:$0xff] %v142
  %192 = vst [vmem:[%s3 + $0x8] sm:$0xff] %v144
  %193 = vst [vmem:[%s3 + $0x10] sm:$0xff] %v185
  %194 = vst [vmem:[%s3 + $0x18] sm:$0xff] %v146
  %195 = vst [vmem:[%s3 + $0x20] sm:$0xff] %v148
  %196 = vst [vmem:[%s3 + $0x28] sm:$0xff] %v188
  // Predicated region
  $region14: #{transformer_forward.24} parent=0 // pred_check
    _
  $region15: #{transformer_forward.24} parent=0 // pred_check_branch
    %198 = sbr.rel (0) target = $region17
  $region16: #{transformer_forward.24} parent=0 // pred_region
    _
  $region17: #{transformer_forward.24} parent=0 // pred_fallthru
    _
  // Predicated region
  $region18: #{transformer_forward.24} parent=0 // pred_check
    _
  $region19: #{transformer_forward.24} parent=0 // pred_check_branch
    %200 = sbr.rel (0) target = $region21
  $region20: #{transformer_forward.24} parent=0 // pred_region
    _
  $region21: #{transformer_forward.24} parent=0 // pred_fallthru
    _

// kernel: transformer_forward.34
$region0: #{transformer_forward.34}
  #allocation0 [shape = 'u32[]', space=smem, size = 0x4, offset = 0x4, fixed_abs, tag = 'smem constant byte address 0x4 - core index']
  #allocation1 [shape = 'u32[144,128]{1,0:T(1,128)}', space=vmem, size = 0x12000, scoped, tag = 'internal scratch']
  #allocation2 [shape = 'bf16[8,128]{1,0:T(8,128)(2,1)}', space=vmem, size = 0x800, scoped, tag = 'scratch operand']
  %s0 = inlined_call_operand.vmem [shape: f32[2,8,384], index: 0, kind: input, shape index: {}, may-alias: {0,1,2}]
  %s1 = inlined_call_operand.vmem [shape: f32[2,8,384], index: 1, kind: input, shape index: {}, may-alias: {0,1,2}]
  %s2 = inlined_call_operand.vmem [shape: f32[2,8,384], index: 2, kind: input, shape index: {}, may-alias: {0,1,2}]
  %s3 = inlined_call_operand.vmem [shape: f32[128,128], index: 3, kind: input, shape index: {}]
  %s4 = inlined_call_operand.vmem [shape: f32[1,128], index: 4, kind: input, shape index: {}]
  %s5 = inlined_call_operand.vmem [shape: f32[2,8,128], index: 5, kind: input, shape index: {}]
  %s6 = inlined_call_operand.vmem [shape: f32[1,128], index: 6, kind: input, shape index: {}]
  %s7 = inlined_call_operand.vmem [shape: f32[1,128], index: 7, kind: input, shape index: {}]
  %s8 = inlined_call_operand.vmem [shape: f32[2,8,128], index: 8, kind: output, shape index: {}]
  %s9 = sld [smem:[#allocation0]]
  $region65: #{transformer_forward.34} parent=0
    _
  %s11 = ssub.s32 1, %s9
  %s12 = scalar_select 0, %s11, %s9
  loop: start=0, step=1, limit=4
  $region2: #{transformer_forward.34} parent=0 // loop_pre_header
    _
  $region3: #{transformer_forward.34} parent=0 // loop_header
    %s14 = sphi 0, %s18
    %p15 = scmp.ge.s32.totalorder %s14, 4
    %s21 = sphi 0, %s33
    %s22 = sphi 0, %s29
    %s23 = sphi 0, %s21
    %s24 = sphi 0, %s22
    %s25 = sphi 0, %s23
    %s26 = sphi 0, %s24
    %s38 = sphi 0, %s40
    %s41 = sphi 0, %s38
    %s42 = sphi 0, %s41
    %s58 = sphi 0, %s42
    %s64 = sphi 0, %s66
    %s67 = sphi 0, %s64
    %s68 = sphi 0, %s67
    %s84 = sphi 0, %s68
    %s90 = sphi 0, %s92
    %s93 = sphi 0, %s90
    %s94 = sphi 0, %s93
    %s110 = sphi 0, %s94
    %s114 = sphi 0, %s114
    %s116 = sphi 0, %s114
    %s117 = sphi 0, %s116
    %s131 = sphi 0, %s117
    %s135 = sphi 0, %s135
    %s137 = sphi 0, %s135
    %s138 = sphi 0, %s137
    %s152 = sphi 0, %s138
    %s160 = sphi 0, %s162
    %s163 = sphi 0, %s160
    %s164 = sphi 0, %s163
    %s180 = sphi 0, %s164
    %s184 = sphi 0, %s184
    %s186 = sphi 0, %s184
    %s187 = sphi 0, %s186
    %s201 = sphi 0, %s187
    %s205 = sphi 0, %s205
    %s207 = sphi 0, %s205
    %s208 = sphi 0, %s207
    %s222 = sphi 0, %s208
    %s230 = sphi 0, %s232
    %s233 = sphi 0, %s230
    %s234 = sphi 0, %s233
    %s250 = sphi 0, %s234
  $region4: #{transformer_forward.34} parent=0 // loop_header_branch
    %17 = sbr.rel (%p15) target = $region8
  $region5: #{transformer_forward.34} parent=0 // loop_body
    %s19 = ssub.s32 %s14, 1
    %s20 = ssub.s32 %s14, 2
    %s27 = sadd.s32 1, %s22
    %p28 = scmp.ge.s32.totalorder %s27, 1
    %s29 = scalar_select %p28, 0, %s27
    %s30 = sadd.s32 1, %s21
    %s31 = scalar_select %p28, %s30, %s21
    %p32 = scmp.ge.s32.totalorder %s31, 2
    %s33 = scalar_select %p32, 0, %s31
    %s34 = ssub.s32 %s21, %s33
    %s35 = ssub.s32 %s22, %s29
    %s36 = sor.u32 %s34, %s35
    %p37 = scmp.eq.s32.totalorder %s36, 0
    %s39 = sadd.s32 %s38, 1
    %s40 = scalar_select %p37, %s38, %s39
    %p43 = pneg %p37
    %p44 = scmp.eq.s32.totalorder %s14, 1
    %p45 = por %p43, %p44
    %p46 = scmp.ne.s32.totalorder %s38, %s41
    %p47 = scmp.eq.s32.totalorder %s14, 0
    %p48 = por %p46, %p47
    %p49 = scmp.ne.s32.totalorder %s38, %s41
    %p50 = scmp.eq.s32.totalorder %s19, 1
    %p51 = por %p49, %p50
    %p52 = scmp.ne.s32.totalorder %s41, %s42
    %p53 = scmp.eq.s32.totalorder %s19, 0
    %p54 = por %p52, %p53
    %p55 = scmp.ne.s32.totalorder %s41, %s42
    %p56 = scmp.eq.s32.totalorder %s20, 1
    %p57 = por %p55, %p56
    %p59 = scmp.ne.s32.totalorder %s42, %s58
    %p60 = scmp.eq.s32.totalorder %s20, 0
    %p61 = por %p59, %p60
    %s62 = ssub.s32 %s21, %s33
    %p63 = scmp.eq.s32.totalorder %s62, 0
    %s65 = sadd.s32 %s64, 1
    %s66 = scalar_select %p63, %s64, %s65
    %p69 = pneg %p63
    %p70 = scmp.eq.s32.totalorder %s14, 1
    %p71 = por %p69, %p70
    %p72 = scmp.ne.s32.totalorder %s64, %s67
    %p73 = scmp.eq.s32.totalorder %s14, 0
    %p74 = por %p72, %p73
    %p75 = scmp.ne.s32.totalorder %s64, %s67
    %p76 = scmp.eq.s32.totalorder %s19, 1
    %p77 = por %p75, %p76
    %p78 = scmp.ne.s32.totalorder %s67, %s68
    %p79 = scmp.eq.s32.totalorder %s19, 0
    %p80 = por %p78, %p79
    %p81 = scmp.ne.s32.totalorder %s67, %s68
    %p82 = scmp.eq.s32.totalorder %s20, 1
    %p83 = por %p81, %p82
    %p85 = scmp.ne.s32.totalorder %s68, %s84
    %p86 = scmp.eq.s32.totalorder %s20, 0
    %p87 = por %p85, %p86
    %s88 = ssub.s32 %s21, %s33
    %p89 = scmp.eq.s32.totalorder %s88, 0
    %s91 = sadd.s32 %s90, 1
    %s92 = scalar_select %p89, %s90, %s91
    %p95 = pneg %p89
    %p96 = scmp.eq.s32.totalorder %s14, 1
    %p97 = por %p95, %p96
    %p98 = scmp.ne.s32.totalorder %s90, %s93
    %p99 = scmp.eq.s32.totalorder %s14, 0
    %p100 = por %p98, %p99
    %p101 = scmp.ne.s32.totalorder %s90, %s93
    %p102 = scmp.eq.s32.totalorder %s19, 1
    %p103 = por %p101, %p102
    %p104 = scmp.ne.s32.totalorder %s93, %s94
    %p105 = scmp.eq.s32.totalorder %s19, 0
    %p106 = por %p104, %p105
    %p107 = scmp.ne.s32.totalorder %s93, %s94
    %p108 = scmp.eq.s32.totalorder %s20, 1
    %p109 = por %p107, %p108
    %p111 = scmp.ne.s32.totalorder %s94, %s110
    %p112 = scmp.eq.s32.totalorder %s20, 0
    %p113 = por %p111, %p112
    %s115 = sadd.s32 %s114, 1
    %p118 = scmp.eq.s32.totalorder %s14, 1
    %p119 = scmp.ne.s32.totalorder %s114, %s116
    %p120 = scmp.eq.s32.totalorder %s14, 0
    %p121 = por %p119, %p120
    %p122 = scmp.ne.s32.totalorder %s114, %s116
    %p123 = scmp.eq.s32.totalorder %s19, 1
    %p124 = por %p122, %p123
    %p125 = scmp.ne.s32.totalorder %s116, %s117
    %p126 = scmp.eq.s32.totalorder %s19, 0
    %p127 = por %p125, %p126
    %p128 = scmp.ne.s32.totalorder %s116, %s117
    %p129 = scmp.eq.s32.totalorder %s20, 1
    %p130 = por %p128, %p129
    %p132 = scmp.ne.s32.totalorder %s117, %s131
    %p133 = scmp.eq.s32.totalorder %s20, 0
    %p134 = por %p132, %p133
    %s136 = sadd.s32 %s135, 1
    %p139 = scmp.eq.s32.totalorder %s14, 1
    %p140 = scmp.ne.s32.totalorder %s135, %s137
    %p141 = scmp.eq.s32.totalorder %s14, 0
    %p142 = por %p140, %p141
    %p143 = scmp.ne.s32.totalorder %s135, %s137
    %p144 = scmp.eq.s32.totalorder %s19, 1
    %p145 = por %p143, %p144
    %p146 = scmp.ne.s32.totalorder %s137, %s138
    %p147 = scmp.eq.s32.totalorder %s19, 0
    %p148 = por %p146, %p147
    %p149 = scmp.ne.s32.totalorder %s137, %s138
    %p150 = scmp.eq.s32.totalorder %s20, 1
    %p151 = por %p149, %p150
    %p153 = scmp.ne.s32.totalorder %s138, %s152
    %p154 = scmp.eq.s32.totalorder %s20, 0
    %p155 = por %p153, %p154
    %s156 = ssub.s32 %s21, %s33
    %s157 = ssub.s32 %s22, %s29
    %s158 = sor.u32 %s156, %s157
    %p159 = scmp.eq.s32.totalorder %s158, 0
    %s161 = sadd.s32 %s160, 1
    %s162 = scalar_select %p159, %s160, %s161
    %p165 = pneg %p159
    %p166 = scmp.eq.s32.totalorder %s14, 1
    %p167 = por %p165, %p166
    %p168 = scmp.ne.s32.totalorder %s160, %s163
    %p169 = scmp.eq.s32.totalorder %s14, 0
    %p170 = por %p168, %p169
    %p171 = scmp.ne.s32.totalorder %s160, %s163
    %p172 = scmp.eq.s32.totalorder %s19, 1
    %p173 = por %p171, %p172
    %p174 = scmp.ne.s32.totalorder %s163, %s164
    %p175 = scmp.eq.s32.totalorder %s19, 0
    %p176 = por %p174, %p175
    %p177 = scmp.ne.s32.totalorder %s163, %s164
    %p178 = scmp.eq.s32.totalorder %s20, 1
    %p179 = por %p177, %p178
    %p181 = scmp.ne.s32.totalorder %s164, %s180
    %p182 = scmp.eq.s32.totalorder %s20, 0
    %p183 = por %p181, %p182
    %s185 = sadd.s32 %s184, 1
    %p188 = scmp.eq.s32.totalorder %s14, 1
    %p189 = scmp.ne.s32.totalorder %s184, %s186
    %p190 = scmp.eq.s32.totalorder %s14, 0
    %p191 = por %p189, %p190
    %p192 = scmp.ne.s32.totalorder %s184, %s186
    %p193 = scmp.eq.s32.totalorder %s19, 1
    %p194 = por %p192, %p193
    %p195 = scmp.ne.s32.totalorder %s186, %s187
    %p196 = scmp.eq.s32.totalorder %s19, 0
    %p197 = por %p195, %p196
    %p198 = scmp.ne.s32.totalorder %s186, %s187
    %p199 = scmp.eq.s32.totalorder %s20, 1
    %p200 = por %p198, %p199
    %p202 = scmp.ne.s32.totalorder %s187, %s201
    %p203 = scmp.eq.s32.totalorder %s20, 0
    %p204 = por %p202, %p203
    %s206 = sadd.s32 %s205, 1
    %p209 = scmp.eq.s32.totalorder %s14, 1
    %p210 = scmp.ne.s32.totalorder %s205, %s207
    %p211 = scmp.eq.s32.totalorder %s14, 0
    %p212 = por %p210, %p211
    %p213 = scmp.ne.s32.totalorder %s205, %s207
    %p214 = scmp.eq.s32.totalorder %s19, 1
    %p215 = por %p213, %p214
    %p216 = scmp.ne.s32.totalorder %s207, %s208
    %p217 = scmp.eq.s32.totalorder %s19, 0
    %p218 = por %p216, %p217
    %p219 = scmp.ne.s32.totalorder %s207, %s208
    %p220 = scmp.eq.s32.totalorder %s20, 1
    %p221 = por %p219, %p220
    %p223 = scmp.ne.s32.totalorder %s208, %s222
    %p224 = scmp.eq.s32.totalorder %s20, 0
    %p225 = por %p223, %p224
    %s226 = ssub.s32 %s21, %s33
    %s227 = ssub.s32 %s22, %s29
    %s228 = sor.u32 %s226, %s227
    %p229 = scmp.eq.s32.totalorder %s228, 0
    %s231 = sadd.s32 %s230, 1
    %s232 = scalar_select %p229, %s230, %s231
    %p235 = pneg %p229
    %p236 = scmp.eq.s32.totalorder %s14, 1
    %p237 = por %p235, %p236
    %p238 = scmp.ne.s32.totalorder %s230, %s233
    %p239 = scmp.eq.s32.totalorder %s14, 0
    %p240 = por %p238, %p239
    %p241 = scmp.ne.s32.totalorder %s230, %s233
    %p242 = scmp.eq.s32.totalorder %s19, 1
    %p243 = por %p241, %p242
    %p244 = scmp.ne.s32.totalorder %s233, %s234
    %p245 = scmp.eq.s32.totalorder %s19, 0
    %p246 = por %p244, %p245
    %p247 = scmp.ne.s32.totalorder %s233, %s234
    %p248 = scmp.eq.s32.totalorder %s20, 1
    %p249 = por %p247, %p248
    %p251 = scmp.ne.s32.totalorder %s234, %s250
    %p252 = scmp.eq.s32.totalorder %s20, 0
    %p253 = por %p251, %p252
    %p254 = scmp.le.s32.totalorder 1, %s14
    %p255 = scmp.lt.s32.totalorder %s14, 3
    %p256 = pnand %p254, %p255
    %p257 = pneg %p256
    // Predicated region
    $region9: #{transformer_forward.34} parent=5 // pred_check
      _
    $region10: #{transformer_forward.34} parent=5 // pred_check_branch
      %259 = sbr.rel (%p256) target = $region12
    $region11: #{transformer_forward.34} parent=5 // pred_region
      %s260 = ssub.s32 %s14, 1
      // Predicated region
      $region13: #{transformer_forward.34} parent=11 // pred_check
        %p261 = pneg %p127
      $region14: #{transformer_forward.34} parent=11 // pred_check_branch
        %263 = sbr.rel (%p261) target = $region16
      $region15: #{transformer_forward.34} parent=11 // pred_region
        _
      $region16: #{transformer_forward.34} parent=11 // pred_fallthru
        _
      // Predicated region
      $region17: #{transformer_forward.34} parent=11 // pred_check
        %p264 = pneg %p148
      $region18: #{transformer_forward.34} parent=11 // pred_check_branch
        %266 = sbr.rel (%p264) target = $region20
      $region19: #{transformer_forward.34} parent=11 // pred_region
        _
      $region20: #{transformer_forward.34} parent=11 // pred_fallthru
        _
      // Predicated region
      $region21: #{transformer_forward.34} parent=11 // pred_check
        %p267 = pneg %p197
      $region22: #{transformer_forward.34} parent=11 // pred_check_branch
        %269 = sbr.rel (%p267) target = $region24
      $region23: #{transformer_forward.34} parent=11 // pred_region
        _
      $region24: #{transformer_forward.34} parent=11 // pred_fallthru
        _
      // Predicated region
      $region25: #{transformer_forward.34} parent=11 // pred_check
        %p270 = pneg %p218
      $region26: #{transformer_forward.34} parent=11 // pred_check_branch
        %272 = sbr.rel (%p270) target = $region28
      $region27: #{transformer_forward.34} parent=11 // pred_region
        _
      $region28: #{transformer_forward.34} parent=11 // pred_fallthru
        _
    $region12: #{transformer_forward.34} parent=5 // pred_fallthru
      _
    %p273 = scmp.lt.s32.totalorder %s14, 2
    // Predicated region
    $region29: #{transformer_forward.34} parent=5 // pred_check
      %p274 = pneg %p273
    $region30: #{transformer_forward.34} parent=5 // pred_check_branch
      %276 = sbr.rel (%p274) target = $region32
    $region31: #{transformer_forward.34} parent=5 // pred_region
      // Predicated region
      $region33: #{transformer_forward.34} parent=31 // pred_check
        %p277 = pneg %p48
      $region34: #{transformer_forward.34} parent=31 // pred_check_branch
        %279 = sbr.rel (%p277) target = $region36
      $region35: #{transformer_forward.34} parent=31 // pred_region
        %p280 = scmp.lt.s32.totalorder %s21, 1
        %s281 = scalar_select %p280, %s21, 1
        %p282 = scmp.lt.s32.totalorder %s22, 0
        %s283 = scalar_select %p282, %s22, 0
        %s284 = smul.addr %s283, 3
        %s285 = smul.addr %s281, 3
        %s286 = sadd.s32 %s284, %s285
        %s287 = smul.addr %s286, 8
        %s288 = scalar_lea.vmem %s0, %s287
      $region36: #{transformer_forward.34} parent=31 // pred_fallthru
        _
      // Predicated region
      $region37: #{transformer_forward.34} parent=31 // pred_check
        %p289 = pneg %p74
      $region38: #{transformer_forward.34} parent=31 // pred_check_branch
        %291 = sbr.rel (%p289) target = $region40
      $region39: #{transformer_forward.34} parent=31 // pred_region
        %p292 = scmp.lt.s32.totalorder %s21, 1
        %s293 = scalar_select %p292, %s21, 1
        %s294 = smul.addr %s293, 3
        %s295 = sadd.s32 1, %s294
        %s296 = smul.addr %s295, 8
        %s297 = scalar_lea.vmem %s1, %s296
      $region40: #{transformer_forward.34} parent=31 // pred_fallthru
        _
      // Predicated region
      $region41: #{transformer_forward.34} parent=31 // pred_check
        %p298 = pneg %p100
      $region42: #{transformer_forward.34} parent=31 // pred_check_branch
        %300 = sbr.rel (%p298) target = $region44
      $region43: #{transformer_forward.34} parent=31 // pred_region
        %p301 = scmp.lt.s32.totalorder %s21, 1
        %s302 = scalar_select %p301, %s21, 1
        %s303 = smul.addr %s302, 3
        %s304 = sadd.s32 2, %s303
        %s305 = smul.addr %s304, 8
        %s306 = scalar_lea.vmem %s2, %s305
      $region44: #{transformer_forward.34} parent=31 // pred_fallthru
        _
      // Predicated region
      $region45: #{transformer_forward.34} parent=31 // pred_check
        %p307 = pneg %p170
      $region46: #{transformer_forward.34} parent=31 // pred_check_branch
        %309 = sbr.rel (%p307) target = $region48
      $region47: #{transformer_forward.34} parent=31 // pred_region
        %p310 = scmp.lt.s32.totalorder %s21, 1
        %s311 = scalar_select %p310, %s21, 1
        %p312 = scmp.lt.s32.totalorder %s22, 0
        %s313 = scalar_select %p312, %s22, 0
        %s314 = sadd.s32 %s313, %s311
        %s315 = smul.addr %s314, 8
        %s316 = scalar_lea.vmem %s5, %s315
      $region48: #{transformer_forward.34} parent=31 // pred_fallthru
        _
    $region32: #{transformer_forward.34} parent=5 // pred_fallthru
      _
    %p317 = scmp.le.s32.totalorder 1, %s14
    %p318 = scmp.lt.s32.totalorder %s14, 3
    %p319 = pnand %p317, %p318
    %p320 = pneg %p319
    // Predicated region
    $region49: #{transformer_forward.34} parent=5 // pred_check
      _
    $region50: #{transformer_forward.34} parent=5 // pred_check_branch
      %322 = sbr.rel (%p319) target = $region52
    $region51: #{transformer_forward.34} parent=5 // pred_region
      %s323 = ssub.s32 %s14, 1
      %p324 = scmp.lt.s32.totalorder %s23, 1
      %s325 = scalar_select %p324, %s23, 1
      %p326 = scmp.lt.s32.totalorder %s24, 0
      %s327 = scalar_select %p326, %s24, 0
      %s328 = smul.addr %s327, 3
      %s329 = smul.addr %s325, 3
      %s330 = sadd.s32 %s328, %s329
      %s331 = smul.addr %s330, 8
      %s332 = scalar_lea.vmem %s0, %s331
      %p333 = pneg %p54
      %p334 = pneg %p51
      %p335 = scmp.lt.s32.totalorder %s23, 1
      %s336 = scalar_select %p335, %s23, 1
      %s337 = smul.addr %s336, 3
      %s338 = sadd.s32 1, %s337
      %s339 = smul.addr %s338, 8
      %s340 = scalar_lea.vmem %s1, %s339
      %p341 = pneg %p80
      %p342 = pneg %p77
      %p343 = scmp.lt.s32.totalorder %s23, 1
      %s344 = scalar_select %p343, %s23, 1
      %s345 = smul.addr %s344, 3
      %s346 = sadd.s32 2, %s345
      %s347 = smul.addr %s346, 8
      %s348 = scalar_lea.vmem %s2, %s347
      %p349 = pneg %p106
      %p350 = pneg %p103
      %p351 = pneg %p127
      %p352 = pneg %p124
      %p353 = pneg %p148
      %p354 = pneg %p145
      %p355 = scmp.lt.s32.totalorder %s23, 1
      %s356 = scalar_select %p355, %s23, 1
      %p357 = scmp.lt.s32.totalorder %s24, 0
      %s358 = scalar_select %p357, %s24, 0
      %s359 = sadd.s32 %s358, %s356
      %s360 = smul.addr %s359, 8
      %s361 = scalar_lea.vmem %s5, %s360
      %p362 = pneg %p176
      %p363 = pneg %p173
      %p364 = pneg %p197
      %p365 = pneg %p194
      %p366 = pneg %p218
      %p367 = pneg %p215
      %p368 = pneg %p246
      %p369 = pneg %p243
      %p370 = scmp.lt.s32.totalorder %s23, 1
      %s371 = scalar_select %p370, %s23, 1
      %p372 = scmp.lt.s32.totalorder %s24, 0
      %s373 = scalar_select %p372, %s24, 0
      %s374 = sadd.s32 %s373, %s371
      %s375 = smul.addr %s374, 8
      %s376 = scalar_lea.vmem %s8, %s375
      %p377 = scmp.lt.s32.totalorder %s23, 1
      %s378 = scalar_select %p377, %s23, 1
      %p379 = scmp.lt.s32.totalorder %s24, 0
      %s380 = scalar_select %p379, %s24, 0
      %s381 = smul.addr %s380, 3
      %s382 = smul.addr %s378, 3
      %s383 = sadd.s32 %s381, %s382
      %s384 = smul.addr %s383, 8
      %s385 = scalar_lea.vmem %s0, %s384
      %p386 = scmp.lt.s32.totalorder %s23, 1
      %s387 = scalar_select %p386, %s23, 1
      %s388 = smul.addr %s387, 3
      %s389 = sadd.s32 1, %s388
      %s390 = smul.addr %s389, 8
      %s391 = scalar_lea.vmem %s1, %s390
      %p392 = scmp.lt.s32.totalorder %s23, 1
      %s393 = scalar_select %p392, %s23, 1
      %s394 = smul.addr %s393, 3
      %s395 = sadd.s32 2, %s394
      %s396 = smul.addr %s395, 8
      %s397 = scalar_lea.vmem %s2, %s396
      %p398 = scmp.lt.s32.totalorder %s23, 1
      %s399 = scalar_select %p398, %s23, 1
      %p400 = scmp.lt.s32.totalorder %s24, 0
      %s401 = scalar_select %p400, %s24, 0
      %s402 = sadd.s32 %s401, %s399
      %s403 = smul.addr %s402, 8
      %s404 = scalar_lea.vmem %s5, %s403
      %p405 = scmp.lt.s32.totalorder %s23, 1
      %s406 = scalar_select %p405, %s23, 1
      %p407 = scmp.lt.s32.totalorder %s24, 0
      %s408 = scalar_select %p407, %s24, 0
      %s409 = sadd.s32 %s408, %s406
      %s410 = smul.addr %s409, 8
      %s411 = scalar_lea.vmem %s8, %s410
      %v413 = vld [vmem:[%s385] sm:$0xff]
      %v414 = vld [vmem:[%s391] sm:$0xff]
      %v415 = vpack.c.bf16 %v414, %v414
      %v416 = vld [vmem:[%s397] sm:$0xff]
      %v417 = vpack.c.bf16 %v416, %v416
      %v418 = vmul.f32 %v413, 0.17677669
      %v419 = vpack.c.bf16 %v418, %v418
      %vm420 = vcmask 261120
      %v422 = vsel %vm420, %v419, 0
      %v425 = vsel %vm420, %v415, 0
      %427 = vmatprep.subr.bf16.mxu0 0
      %428 = vmatpush1.bf16.xpose.msra.mxu0 %v425
      %429 = vmatprep.subr.bf16.mxu0 0
      %430 = vmatpush1.bf16.xpose.msra.mxu0 0
      %431 = vmatprep.subr.bf16.mxu0 0
      %432 = vmatpush1.bf16.xpose.msra.mxu0 0
      %433 = vmatprep.subr.bf16.mxu0 0
      %434 = vmatpush1.bf16.xpose.msra.mxu0 0
      %435 = vmatprep.subr.bf16.mxu0 0
      %436 = vmatpush1.bf16.xpose.msra.mxu0 0
      %437 = vmatprep.subr.bf16.mxu0 0
      %438 = vmatpush1.bf16.xpose.msra.mxu0 0
      %439 = vmatprep.subr.bf16.mxu0 0
      %440 = vmatpush1.bf16.xpose.msra.mxu0 0
      %441 = vmatprep.subr.bf16.mxu0 0
      %442 = vmatpush1.bf16.xpose.msra.mxu0 0
      %443 = vmatprep.subr.bf16.mxu0 0
      %444 = vmatpush1.bf16.xpose.msra.mxu0 0
      %445 = vmatprep.subr.bf16.mxu0 0
      %446 = vmatpush1.bf16.xpose.msra.mxu0 0
      %447 = vmatprep.subr.bf16.mxu0 0
      %448 = vmatpush1.bf16.xpose.msra.mxu0 0
      %449 = vmatprep.subr.bf16.mxu0 0
      %450 = vmatpush1.bf16.xpose.msra.mxu0 0
      %451 = vmatprep.subr.bf16.mxu0 0
      %452 = vmatpush1.bf16.xpose.msra.mxu0 0
      %453 = vmatprep.subr.bf16.mxu0 0
      %454 = vmatpush1.bf16.xpose.msra.mxu0 0
      %455 = vmatprep.subr.bf16.mxu0 0
      %456 = vmatpush1.bf16.xpose.msra.mxu0 0
      %457 = vmatprep.subr.bf16.mxu0 0
      %458 = vmatpush1.bf16.xpose.msra.mxu0 0
      %459 = vmatprep.mubr.bf16.mxu0 0
      %460 = vmatmul.mubr.bf16.gmra.mrb[0].mxu0 %v422
      %v461 = vpop.f32.mrb[0].mxu0
      %v462 = vadd.f32 0.0, %v461
      %v463 = vpop.f32.mrb[0].mxu0
      %v464 = vpop.f32.mrb[0].mxu0
      %v465 = vpop.f32.mrb[0].mxu0
      %466 = vdwg.mxu0
      %vm467 = vcmask 64512
      %v468 = vsel %vm467, %v462, -inf
      %469 = vmax.xlane.f32.xlu0 %v468
      %v470 = vpop.xlane.xlu0 %469
      %v471 = vsub.f32 %v462, %v470
      %v472 = vmul.f32 %v471, 1.442695
      %v473 = vpow.pop %v472
      %v474 = vsel %vm467, %v473, 0.0
      %475 = vadd.xlane.f32.xlu0 %v474
      %v476 = vpop.xlane.xlu0 %475
      %v477 = vpack.c.bf16 %v473, %v473
      %v479 = vsel %vm467, %v477, 0
      %vm481 = vcmask 1043456
      %v483 = vsel %vm481, %v417, 0
      %485 = vmatprep.subr.bf16.mxu0 0
      %486 = vmatpush1.bf16.msra.mxu0 %v483
      %487 = vmatprep.subr.bf16.mxu0 0
      %488 = vmatpush1.bf16.msra.mxu0 0
      %489 = vmatprep.subr.bf16.mxu0 0
      %490 = vmatpush1.bf16.msra.mxu0 0
      %491 = vmatprep.subr.bf16.mxu0 0
      %492 = vmatpush1.bf16.msra.mxu0 0
      %493 = vmatprep.subr.bf16.mxu0 0
      %494 = vmatpush1.bf16.msra.mxu0 0
      %495 = vmatprep.subr.bf16.mxu0 0
      %496 = vmatpush1.bf16.msra.mxu0 0
      %497 = vmatprep.subr.bf16.mxu0 0
      %498 = vmatpush1.bf16.msra.mxu0 0
      %499 = vmatprep.subr.bf16.mxu0 0
      %500 = vmatpush1.bf16.msra.mxu0 0
      %501 = vmatprep.subr.bf16.mxu0 0
      %502 = vmatpush1.bf16.msra.mxu0 0
      %503 = vmatprep.subr.bf16.mxu0 0
      %504 = vmatpush1.bf16.msra.mxu0 0
      %505 = vmatprep.subr.bf16.mxu0 0
      %506 = vmatpush1.bf16.msra.mxu0 0
      %507 = vmatprep.subr.bf16.mxu0 0
      %508 = vmatpush1.bf16.msra.mxu0 0
      %509 = vmatprep.subr.bf16.mxu0 0
      %510 = vmatpush1.bf16.msra.mxu0 0
      %511 = vmatprep.subr.bf16.mxu0 0
      %512 = vmatpush1.bf16.msra.mxu0 0
      %513 = vmatprep.subr.bf16.mxu0 0
      %514 = vmatpush1.bf16.msra.mxu0 0
      %515 = vmatprep.subr.bf16.mxu0 0
      %516 = vmatpush1.bf16.msra.mxu0 0
      %517 = vmatprep.mubr.bf16.mxu0 0
      %518 = vmatmul.mubr.bf16.gmra.mrb[0].mxu0 %v479
      %v519 = vpop.f32.mrb[0].mxu0
      %v520 = vadd.f32 0.0, %v519
      %v521 = vpop.f32.mrb[0].mxu0
      %v522 = vpop.f32.mrb[0].mxu0
      %v523 = vpop.f32.mrb[0].mxu0
      %524 = vdwg.mxu0
      %v525 = vrcp.pop %v476
      %v526 = vmul.f32 %v520, %v525
      %v527 = vpack.c.bf16 %v526, %v526
      %vm528 = vcmask 257024
      %529 = vst.msk [vmem:[#allocation2] sm:$0xf] %vm528, %v527
      %531 = vrot.lane.b32.xlu0 %v419, 96
      %v532 = vpop.permute.xlu0 %531
      %534 = vrot.lane.b32.xlu0 %v415, 96
      %v535 = vpop.permute.xlu0 %534
      %v537 = vsel %vm420, %v532, 0
      %v540 = vsel %vm420, %v535, 0
      %542 = vmatprep.subr.bf16.mxu0 0
      %543 = vmatpush1.bf16.xpose.msra.mxu0 %v540
      %544 = vmatprep.subr.bf16.mxu0 0
      %545 = vmatpush1.bf16.xpose.msra.mxu0 0
      %546 = vmatprep.subr.bf16.mxu0 0
      %547 = vmatpush1.bf16.xpose.msra.mxu0 0
      %548 = vmatprep.subr.bf16.mxu0 0
      %549 = vmatpush1.bf16.xpose.msra.mxu0 0
      %550 = vmatprep.subr.bf16.mxu0 0
      %551 = vmatpush1.bf16.xpose.msra.mxu0 0
      %552 = vmatprep.subr.bf16.mxu0 0
      %553 = vmatpush1.bf16.xpose.msra.mxu0 0
      %554 = vmatprep.subr.bf16.mxu0 0
      %555 = vmatpush1.bf16.xpose.msra.mxu0 0
      %556 = vmatprep.subr.bf16.mxu0 0
      %557 = vmatpush1.bf16.xpose.msra.mxu0 0
      %558 = vmatprep.subr.bf16.mxu0 0
      %559 = vmatpush1.bf16.xpose.msra.mxu0 0
      %560 = vmatprep.subr.bf16.mxu0 0
      %561 = vmatpush1.bf16.xpose.msra.mxu0 0
      %562 = vmatprep.subr.bf16.mxu0 0
      %563 = vmatpush1.bf16.xpose.msra.mxu0 0
      %564 = vmatprep.subr.bf16.mxu0 0
      %565 = vmatpush1.bf16.xpose.msra.mxu0 0
      %566 = vmatprep.subr.bf16.mxu0 0
      %567 = vmatpush1.bf16.xpose.msra.mxu0 0
      %568 = vmatprep.subr.bf16.mxu0 0
      %569 = vmatpush1.bf16.xpose.msra.mxu0 0
      %570 = vmatprep.subr.bf16.mxu0 0
      %571 = vmatpush1.bf16.xpose.msra.mxu0 0
      %572 = vmatprep.subr.bf16.mxu0 0
      %573 = vmatpush1.bf16.xpose.msra.mxu0 0
      %574 = vmatprep.mubr.bf16.mxu0 0
      %575 = vmatmul.mubr.bf16.gmra.mrb[0].mxu0 %v537
      %v576 = vpop.f32.mrb[0].mxu0
      %v577 = vadd.f32 0.0, %v576
      %v578 = vpop.f32.mrb[0].mxu0
      %v579 = vpop.f32.mrb[0].mxu0
      %v580 = vpop.f32.mrb[0].mxu0
      %581 = vdwg.mxu0
      %v582 = vsel %vm467, %v577, -inf
      %583 = vmax.xlane.f32.xlu0 %v582
      %v584 = vpop.xlane.xlu0 %583
      %v585 = vsub.f32 %v577, %v584
      %v586 = vmul.f32 %v585, 1.442695
      %v587 = vpow.pop %v586
      %v588 = vsel %vm467, %v587, 0.0
      %589 = vadd.xlane.f32.xlu0 %v588
      %v590 = vpop.xlane.xlu0 %589
      %v591 = vpack.c.bf16 %v587, %v587
      %593 = vrot.lane.b32.xlu0 %v417, 96
      %v594 = vpop.permute.xlu0 %593
      %v596 = vsel %vm467, %v591, 0
      %v599 = vsel %vm481, %v594, 0
      %601 = vmatprep.subr.bf16.mxu0 0
      %602 = vmatpush1.bf16.msra.mxu0 %v599
      %603 = vmatprep.subr.bf16.mxu0 0
      %604 = vmatpush1.bf16.msra.mxu0 0
      %605 = vmatprep.subr.bf16.mxu0 0
      %606 = vmatpush1.bf16.msra.mxu0 0
      %607 = vmatprep.subr.bf16.mxu0 0
      %608 = vmatpush1.bf16.msra.mxu0 0
      %609 = vmatprep.subr.bf16.mxu0 0
      %610 = vmatpush1.bf16.msra.mxu0 0
      %611 = vmatprep.subr.bf16.mxu0 0
      %612 = vmatpush1.bf16.msra.mxu0 0
      %613 = vmatprep.subr.bf16.mxu0 0
      %614 = vmatpush1.bf16.msra.mxu0 0
      %615 = vmatprep.subr.bf16.mxu0 0
      %616 = vmatpush1.bf16.msra.mxu0 0
      %617 = vmatprep.subr.bf16.mxu0 0
      %618 = vmatpush1.bf16.msra.mxu0 0
      %619 = vmatprep.subr.bf16.mxu0 0
      %620 = vmatpush1.bf16.msra.mxu0 0
      %621 = vmatprep.subr.bf16.mxu0 0
      %622 = vmatpush1.bf16.msra.mxu0 0
      %623 = vmatprep.subr.bf16.mxu0 0
      %624 = vmatpush1.bf16.msra.mxu0 0
      %625 = vmatprep.subr.bf16.mxu0 0
      %626 = vmatpush1.bf16.msra.mxu0 0
      %627 = vmatprep.subr.bf16.mxu0 0
      %628 = vmatpush1.bf16.msra.mxu0 0
      %629 = vmatprep.subr.bf16.mxu0 0
      %630 = vmatpush1.bf16.msra.mxu0 0
      %631 = vmatprep.subr.bf16.mxu0 0
      %632 = vmatpush1.bf16.msra.mxu0 0
      %633 = vmatprep.mubr.bf16.mxu0 0
      %634 = vmatmul.mubr.bf16.gmra.mrb[0].mxu0 %v596
      %v635 = vpop.f32.mrb[0].mxu0
      %v636 = vadd.f32 0.0, %v635
      %v637 = vpop.f32.mrb[0].mxu0
      %v638 = vpop.f32.mrb[0].mxu0
      %v639 = vpop.f32.mrb[0].mxu0
      %640 = vdwg.mxu0
      %v641 = vrcp.pop %v590
      %v642 = vmul.f32 %v636, %v641
      %v643 = vpack.c.bf16 %v642, %v642
      %v645 = vunpack.c.l.b16 %v643
      %v646 = vpack.c.b16 %v645, %v645
      %647 = vrot.lane.b32.xlu0 %v646, 32
      %v648 = vpop.permute.xlu0 %647
      %vm650 = vcmask 519424
      %651 = vst.msk [vmem:[#allocation2] sm:$0xf] %vm650, %v648
      %652 = vrot.lane.b32.xlu0 %v419, 64
      %v653 = vpop.permute.xlu0 %652
      %654 = vrot.lane.b32.xlu0 %v415, 64
      %v655 = vpop.permute.xlu0 %654
      %v657 = vsel %vm420, %v653, 0
      %v660 = vsel %vm420, %v655, 0
      %662 = vmatprep.subr.bf16.mxu0 0
      %663 = vmatpush1.bf16.xpose.msra.mxu0 %v660
      %664 = vmatprep.subr.bf16.mxu0 0
      %665 = vmatpush1.bf16.xpose.msra.mxu0 0
      %666 = vmatprep.subr.bf16.mxu0 0
      %667 = vmatpush1.bf16.xpose.msra.mxu0 0
      %668 = vmatprep.subr.bf16.mxu0 0
      %669 = vmatpush1.bf16.xpose.msra.mxu0 0
      %670 = vmatprep.subr.bf16.mxu0 0
      %671 = vmatpush1.bf16.xpose.msra.mxu0 0
      %672 = vmatprep.subr.bf16.mxu0 0
      %673 = vmatpush1.bf16.xpose.msra.mxu0 0
      %674 = vmatprep.subr.bf16.mxu0 0
      %675 = vmatpush1.bf16.xpose.msra.mxu0 0
      %676 = vmatprep.subr.bf16.mxu0 0
      %677 = vmatpush1.bf16.xpose.msra.mxu0 0
      %678 = vmatprep.subr.bf16.mxu0 0
      %679 = vmatpush1.bf16.xpose.msra.mxu0 0
      %680 = vmatprep.subr.bf16.mxu0 0
      %681 = vmatpush1.bf16.xpose.msra.mxu0 0
      %682 = vmatprep.subr.bf16.mxu0 0
      %683 = vmatpush1.bf16.xpose.msra.mxu0 0
      %684 = vmatprep.subr.bf16.mxu0 0
      %685 = vmatpush1.bf16.xpose.msra.mxu0 0
      %686 = vmatprep.subr.bf16.mxu0 0
      %687 = vmatpush1.bf16.xpose.msra.mxu0 0
      %688 = vmatprep.subr.bf16.mxu0 0
      %689 = vmatpush1.bf16.xpose.msra.mxu0 0
      %690 = vmatprep.subr.bf16.mxu0 0
      %691 = vmatpush1.bf16.xpose.msra.mxu0 0
      %692 = vmatprep.subr.bf16.mxu0 0
      %693 = vmatpush1.bf16.xpose.msra.mxu0 0
      %694 = vmatprep.mubr.bf16.mxu0 0
      %695 = vmatmul.mubr.bf16.gmra.mrb[0].mxu0 %v657
      %v696 = vpop.f32.mrb[0].mxu0
      %v697 = vadd.f32 0.0, %v696
      %v698 = vpop.f32.mrb[0].mxu0
      %v699 = vpop.f32.mrb[0].mxu0
      %v700 = vpop.f32.mrb[0].mxu0
      %701 = vdwg.mxu0
      %v702 = vsel %vm467, %v697, -inf
      %703 = vmax.xlane.f32.xlu0 %v702
      %v704 = vpop.xlane.xlu0 %703
      %v705 = vsub.f32 %v697, %v704
      %v706 = vmul.f32 %v705, 1.442695
      %v707 = vpow.pop %v706
      %v708 = vsel %vm467, %v707, 0.0
      %709 = vadd.xlane.f32.xlu0 %v708
      %v710 = vpop.xlane.xlu0 %709
      %v711 = vpack.c.bf16 %v707, %v707
      %712 = vrot.lane.b32.xlu0 %v417, 64
      %v713 = vpop.permute.xlu0 %712
      %v715 = vsel %vm467, %v711, 0
      %v718 = vsel %vm481, %v713, 0
      %720 = vmatprep.subr.bf16.mxu0 0
      %721 = vmatpush1.bf16.msra.mxu0 %v718
      %722 = vmatprep.subr.bf16.mxu0 0
      %723 = vmatpush1.bf16.msra.mxu0 0
      %724 = vmatprep.subr.bf16.mxu0 0
      %725 = vmatpush1.bf16.msra.mxu0 0
      %726 = vmatprep.subr.bf16.mxu0 0
      %727 = vmatpush1.bf16.msra.mxu0 0
      %728 = vmatprep.subr.bf16.mxu0 0
      %729 = vmatpush1.bf16.msra.mxu0 0
      %730 = vmatprep.subr.bf16.mxu0 0
      %731 = vmatpush1.bf16.msra.mxu0 0
      %732 = vmatprep.subr.bf16.mxu0 0
      %733 = vmatpush1.bf16.msra.mxu0 0
      %734 = vmatprep.subr.bf16.mxu0 0
      %735 = vmatpush1.bf16.msra.mxu0 0
      %736 = vmatprep.subr.bf16.mxu0 0
      %737 = vmatpush1.bf16.msra.mxu0 0
      %738 = vmatprep.subr.bf16.mxu0 0
      %739 = vmatpush1.bf16.msra.mxu0 0
      %740 = vmatprep.subr.bf16.mxu0 0
      %741 = vmatpush1.bf16.msra.mxu0 0
      %742 = vmatprep.subr.bf16.mxu0 0
      %743 = vmatpush1.bf16.msra.mxu0 0
      %744 = vmatprep.subr.bf16.mxu0 0
      %745 = vmatpush1.bf16.msra.mxu0 0
      %746 = vmatprep.subr.bf16.mxu0 0
      %747 = vmatpush1.bf16.msra.mxu0 0
      %748 = vmatprep.subr.bf16.mxu0 0
      %749 = vmatpush1.bf16.msra.mxu0 0
      %750 = vmatprep.subr.bf16.mxu0 0
      %751 = vmatpush1.bf16.msra.mxu0 0
      %752 = vmatprep.mubr.bf16.mxu0 0
      %753 = vmatmul.mubr.bf16.gmra.mrb[0].mxu0 %v715
      %v754 = vpop.f32.mrb[0].mxu0
      %v755 = vadd.f32 0.0, %v754
      %v756 = vpop.f32.mrb[0].mxu0
      %v757 = vpop.f32.mrb[0].mxu0
      %v758 = vpop.f32.mrb[0].mxu0
      %759 = vdwg.mxu0
      %v760 = vrcp.pop %v710
      %v761 = vmul.f32 %v755, %v760
      %v762 = vpack.c.bf16 %v761, %v761
      %v764 = vunpack.c.l.b16 %v762
      %v765 = vpack.c.b16 %v764, %v764
      %766 = vrot.lane.b32.xlu0 %v765, 64
      %v767 = vpop.permute.xlu0 %766
      %vm769 = vcmask 781824
      %770 = vst.msk [vmem:[#allocation2] sm:$0xf] %vm769, %v767
      %771 = vrot.lane.b32.xlu0 %v419, 32
      %v772 = vpop.permute.xlu0 %771
      %773 = vrot.lane.b32.xlu0 %v415, 32
      %v774 = vpop.permute.xlu0 %773
      %v776 = vsel %vm420, %v772, 0
      %v779 = vsel %vm420, %v774, 0
      %781 = vmatprep.subr.bf16.mxu0 0
      %782 = vmatpush1.bf16.xpose.msra.mxu0 %v779
      %783 = vmatprep.subr.bf16.mxu0 0
      %784 = vmatpush1.bf16.xpose.msra.mxu0 0
      %785 = vmatprep.subr.bf16.mxu0 0
      %786 = vmatpush1.bf16.xpose.msra.mxu0 0
      %787 = vmatprep.subr.bf16.mxu0 0
      %788 = vmatpush1.bf16.xpose.msra.mxu0 0
      %789 = vmatprep.subr.bf16.mxu0 0
      %790 = vmatpush1.bf16.xpose.msra.mxu0 0
      %791 = vmatprep.subr.bf16.mxu0 0
      %792 = vmatpush1.bf16.xpose.msra.mxu0 0
      %793 = vmatprep.subr.bf16.mxu0 0
      %794 = vmatpush1.bf16.xpose.msra.mxu0 0
      %795 = vmatprep.subr.bf16.mxu0 0
      %796 = vmatpush1.bf16.xpose.msra.mxu0 0
      %797 = vmatprep.subr.bf16.mxu0 0
      %798 = vmatpush1.bf16.xpose.msra.mxu0 0
      %799 = vmatprep.subr.bf16.mxu0 0
      %800 = vmatpush1.bf16.xpose.msra.mxu0 0
      %801 = vmatprep.subr.bf16.mxu0 0
      %802 = vmatpush1.bf16.xpose.msra.mxu0 0
      %803 = vmatprep.subr.bf16.mxu0 0
      %804 = vmatpush1.bf16.xpose.msra.mxu0 0
      %805 = vmatprep.subr.bf16.mxu0 0
      %806 = vmatpush1.bf16.xpose.msra.mxu0 0
      %807 = vmatprep.subr.bf16.mxu0 0
      %808 = vmatpush1.bf16.xpose.msra.mxu0 0
      %809 = vmatprep.subr.bf16.mxu0 0
      %810 = vmatpush1.bf16.xpose.msra.mxu0 0
      %811 = vmatprep.subr.bf16.mxu0 0
      %812 = vmatpush1.bf16.xpose.msra.mxu0 0
      %813 = vmatprep.mubr.bf16.mxu0 0
      %814 = vmatmul.mubr.bf16.gmra.mrb[0].mxu0 %v776
      %v815 = vpop.f32.mrb[0].mxu0
      %v816 = vadd.f32 0.0, %v815
      %v817 = vpop.f32.mrb[0].mxu0
      %v818 = vpop.f32.mrb[0].mxu0
      %v819 = vpop.f32.mrb[0].mxu0
      %820 = vdwg.mxu0
      %v821 = vsel %vm467, %v816, -inf
      %822 = vmax.xlane.f32.xlu0 %v821
      %v823 = vpop.xlane.xlu0 %822
      %v824 = vsub.f32 %v816, %v823
      %v825 = vmul.f32 %v824, 1.442695
      %v826 = vpow.pop %v825
      %v827 = vsel %vm467, %v826, 0.0
      %828 = vadd.xlane.f32.xlu0 %v827
      %v829 = vpop.xlane.xlu0 %828
      %v830 = vpack.c.bf16 %v826, %v826
      %831 = vrot.lane.b32.xlu0 %v417, 32
      %v832 = vpop.permute.xlu0 %831
      %v834 = vsel %vm467, %v830, 0
      %v837 = vsel %vm481, %v832, 0
      %839 = vmatprep.subr.bf16.mxu0 0
      %840 = vmatpush1.bf16.msra.mxu0 %v837
      %841 = vmatprep.subr.bf16.mxu0 0
      %842 = vmatpush1.bf16.msra.mxu0 0
      %843 = vmatprep.subr.bf16.mxu0 0
      %844 = vmatpush1.bf16.msra.mxu0 0
      %845 = vmatprep.subr.bf16.mxu0 0
      %846 = vmatpush1.bf16.msra.mxu0 0
      %847 = vmatprep.subr.bf16.mxu0 0
      %848 = vmatpush1.bf16.msra.mxu0 0
      %849 = vmatprep.subr.bf16.mxu0 0
      %850 = vmatpush1.bf16.msra.mxu0 0
      %851 = vmatprep.subr.bf16.mxu0 0
      %852 = vmatpush1.bf16.msra.mxu0 0
      %853 = vmatprep.subr.bf16.mxu0 0
      %854 = vmatpush1.bf16.msra.mxu0 0
      %855 = vmatprep.subr.bf16.mxu0 0
      %856 = vmatpush1.bf16.msra.mxu0 0
      %857 = vmatprep.subr.bf16.mxu0 0
      %858 = vmatpush1.bf16.msra.mxu0 0
      %859 = vmatprep.subr.bf16.mxu0 0
      %860 = vmatpush1.bf16.msra.mxu0 0
      %861 = vmatprep.subr.bf16.mxu0 0
      %862 = vmatpush1.bf16.msra.mxu0 0
      %863 = vmatprep.subr.bf16.mxu0 0
      %864 = vmatpush1.bf16.msra.mxu0 0
      %865 = vmatprep.subr.bf16.mxu0 0
      %866 = vmatpush1.bf16.msra.mxu0 0
      %867 = vmatprep.subr.bf16.mxu0 0
      %868 = vmatpush1.bf16.msra.mxu0 0
      %869 = vmatprep.subr.bf16.mxu0 0
      %870 = vmatpush1.bf16.msra.mxu0 0
      %871 = vmatprep.mubr.bf16.mxu0 0
      %872 = vmatmul.mubr.bf16.gmra.mrb[0].mxu0 %v834
      %v873 = vpop.f32.mrb[0].mxu0
      %v874 = vadd.f32 0.0, %v873
      %v875 = vpop.f32.mrb[0].mxu0
      %v876 = vpop.f32.mrb[0].mxu0
      %v877 = vpop.f32.mrb[0].mxu0
      %878 = vdwg.mxu0
      %v879 = vrcp.pop %v829
      %v880 = vmul.f32 %v874, %v879
      %v881 = vpack.c.bf16 %v880, %v880
      %v883 = vunpack.c.l.b16 %v881
      %v884 = vpack.c.b16 %v883, %v883
      %885 = vrot.lane.b32.xlu0 %v884, 96
      %v886 = vpop.permute.xlu0 %885
      %vm888 = vcmask 1044224
      %889 = vst.msk [vmem:[#allocation2] sm:$0xf] %vm888, %v886
      %v890 = vld [vmem:[#allocation2] sm:$0xf]
      %v891 = vld [vmem:[%s3] sm:$0xff]
      %v892 = vld [vmem:[%s3 + $0x8] sm:$0xff]
      %v893 = vld [vmem:[%s3 + $0x10] sm:$0xff]
      %v894 = vld [vmem:[%s3 + $0x18] sm:$0xff]
      %v895 = vld [vmem:[%s3 + $0x20] sm:$0xff]
      %v896 = vld [vmem:[%s3 + $0x28] sm:$0xff]
      %v897 = vld [vmem:[%s3 + $0x30] sm:$0xff]
      %v898 = vld [vmem:[%s3 + $0x38] sm:$0xff]
      %v899 = vld [vmem:[%s3 + $0x40] sm:$0xff]
      %v900 = vld [vmem:[%s3 + $0x48] sm:$0xff]
      %v901 = vld [vmem:[%s3 + $0x50] sm:$0xff]
      %v902 = vld [vmem:[%s3 + $0x58] sm:$0xff]
      %v903 = vld [vmem:[%s3 + $0x60] sm:$0xff]
      %v904 = vld [vmem:[%s3 + $0x68] sm:$0xff]
      %v905 = vld [vmem:[%s3 + $0x70] sm:$0xff]
      %v906 = vld [vmem:[%s3 + $0x78] sm:$0xff]
      %v907 = vpack.c.bf16 %v892, %v891
      %v908 = vpack.c.bf16 %v894, %v893
      %v909 = vpack.c.bf16 %v896, %v895
      %v910 = vpack.c.bf16 %v898, %v897
      %v911 = vpack.c.bf16 %v900, %v899
      %v912 = vpack.c.bf16 %v902, %v901
      %v913 = vpack.c.bf16 %v904, %v903
      %v914 = vpack.c.bf16 %v906, %v905
      %v915 = vld [vmem:[%s4] sm:$0x1]
      %v917 = vlaneseq
      %v918 = vshrl.u32 %v917, 7
      %v919 = vsub.s32 0, %v918
      %v920 = vrot.slane %v915, %v919
      %922 = vmatprep.subr.bf16.mxu0 0
      %923 = vmatpush1.bf16.msra.mxu0 %v907
      %924 = vmatprep.subr.bf16.mxu0 0
      %925 = vmatpush1.bf16.msra.mxu0 %v908
      %926 = vmatprep.subr.bf16.mxu0 0
      %927 = vmatpush1.bf16.msra.mxu0 %v909
      %928 = vmatprep.subr.bf16.mxu0 0
      %929 = vmatpush1.bf16.msra.mxu0 %v910
      %930 = vmatprep.subr.bf16.mxu0 0
      %931 = vmatpush1.bf16.msra.mxu0 %v911
      %932 = vmatprep.subr.bf16.mxu0 0
      %933 = vmatpush1.bf16.msra.mxu0 %v912
      %934 = vmatprep.subr.bf16.mxu0 0
      %935 = vmatpush1.bf16.msra.mxu0 %v913
      %936 = vmatprep.subr.bf16.mxu0 0
      %937 = vmatpush1.bf16.msra.mxu0 %v914
      %938 = vmatprep.subr.bf16.mxu0 0
      %939 = vmatpush1.bf16.msra.mxu0 0
      %940 = vmatprep.subr.bf16.mxu0 0
      %941 = vmatpush1.bf16.msra.mxu0 0
      %942 = vmatprep.subr.bf16.mxu0 0
      %943 = vmatpush1.bf16.msra.mxu0 0
      %944 = vmatprep.subr.bf16.mxu0 0
      %945 = vmatpush1.bf16.msra.mxu0 0
      %946 = vmatprep.subr.bf16.mxu0 0
      %947 = vmatpush1.bf16.msra.mxu0 0
      %948 = vmatprep.subr.bf16.mxu0 0
      %949 = vmatpush1.bf16.msra.mxu0 0
      %950 = vmatprep.subr.bf16.mxu0 0
      %951 = vmatpush1.bf16.msra.mxu0 0
      %952 = vmatprep.subr.bf16.mxu0 0
      %953 = vmatpush1.bf16.msra.mxu0 0
      %954 = vmatprep.mubr.bf16.mxu0 0
      %955 = vmatmul.mubr.bf16.gmra.mrb[0].mxu0 %v890
      %v956 = vpop.f32.mrb[0].mxu0
      %v957 = vadd.f32 %v920, %v956
      %v958 = vpop.f32.mrb[0].mxu0
      %v959 = vpop.f32.mrb[0].mxu0
      %v960 = vpop.f32.mrb[0].mxu0
      %961 = vdwg.mxu0
      %v962 = vld [vmem:[%s404] sm:$0xff]
      %v963 = vadd.f32 %v957, %v962
      %964 = vadd.xlane.f32.xlu0 %v963
      %v965 = vpop.xlane.xlu0 %964
      %v966 = vrcp.pop 128.0
      %v967 = vmul.f32 %v965, %v966
      %v968 = vsub.f32 %v963, %v967
      %v969 = vmul.f32 %v968, %v968
      %970 = vadd.xlane.f32.xlu0 %v969
      %v971 = vpop.xlane.xlu0 %970
      %v972 = vmul.f32 %v971, %v966
      %v973 = vadd.f32 %v972, 1e-05
      %v974 = vrsqrt.pop %v973
      %v975 = vmul.f32 %v968, %v974
      %v976 = vld [vmem:[%s6] sm:$0x1]
      %v978 = vlaneseq
      %v979 = vshrl.u32 %v978, 7
      %v980 = vsub.s32 0, %v979
      %v981 = vrot.slane %v976, %v980
      %v983 = vmul.f32 %v975, %v981
      %v984 = vld [vmem:[%s7] sm:$0x1]
      %v986 = vlaneseq
      %v987 = vshrl.u32 %v986, 7
      %v988 = vsub.s32 0, %v987
      %v989 = vrot.slane %v984, %v988
      %v991 = vadd.f32 %v983, %v989
      %992 = vst [vmem:[%s411] sm:$0xff] %v991
      %p993 = scmp.lt.s32.totalorder %s23, 1
      %s994 = scalar_select %p993, %s23, 1
      %p995 = scmp.lt.s32.totalorder %s24, 0
      %s996 = scalar_select %p995, %s24, 0
      %s997 = sadd.s32 %s996, %s994
      %s998 = smul.addr %s997, 8
      %s999 = scalar_lea.vmem %s8, %s998
      // Predicated region
      $region53: #{transformer_forward.34} parent=51 // pred_check
        %p1000 = pneg %p243
      $region54: #{transformer_forward.34} parent=51 // pred_check_branch
        %1002 = sbr.rel (%p1000) target = $region56
      $region55: #{transformer_forward.34} parent=51 // pred_region
        _
      $region56: #{transformer_forward.34} parent=51 // pred_fallthru
        _
    $region52: #{transformer_forward.34} parent=5 // pred_fallthru
      _
    %p1003 = scmp.le.s32.totalorder 2, %s14
    // Predicated region
    $region57: #{transformer_forward.34} parent=5 // pred_check
      %p1004 = pneg %p1003
    $region58: #{transformer_forward.34} parent=5 // pred_check_branch
      %1006 = sbr.rel (%p1004) target = $region60
    $region59: #{transformer_forward.34} parent=5 // pred_region
      %s1007 = ssub.s32 %s14, 2
      // Predicated region
      $region61: #{transformer_forward.34} parent=59 // pred_check
        %p1008 = pneg %p249
      $region62: #{transformer_forward.34} parent=59 // pred_check_branch
        %1010 = sbr.rel (%p1008) target = $region64
      $region63: #{transformer_forward.34} parent=59 // pred_region
        %p1011 = scmp.lt.s32.totalorder %s25, 1
        %s1012 = scalar_select %p1011, %s25, 1
        %p1013 = scmp.lt.s32.totalorder %s26, 0
        %s1014 = scalar_select %p1013, %s26, 0
        %s1015 = sadd.s32 %s1014, %s1012
        %s1016 = smul.addr %s1015, 8
        %s1017 = scalar_lea.vmem %s8, %s1016
      $region64: #{transformer_forward.34} parent=59 // pred_fallthru
        _
    $region60: #{transformer_forward.34} parent=5 // pred_fallthru
      _
  $region6: #{transformer_forward.34} parent=0 // loop_footer
    %s18 = sadd.s32 1, %s14
  $region7: #{transformer_forward.34} parent=0 // loop_footer_branch
    %13 = sbr.rel target = $region3
  $region8: #{transformer_forward.34} parent=0 // loop_exit
    _

// kernel: transformer_forward.26
$region0: #{transformer_forward.26}
  #allocation0 [shape = 'u32[]', space=smem, size = 0x4, offset = 0x4, fixed_abs, tag = 'smem constant byte address 0x4 - core index']
  #allocation1 [shape = 'u32[144,128]{1,0:T(1,128)}', space=vmem, size = 0x12000, scoped, tag = 'internal scratch']
  %s0 = inlined_call_operand.vmem [shape: f32[16,128], index: 0, kind: input, shape index: {}]
  %s1 = inlined_call_operand.vmem [shape: f32[128,256], index: 1, kind: input, shape index: {}]
  %s2 = inlined_call_operand.vmem [shape: f32[1,256], index: 2, kind: input, shape index: {}]
  %s3 = inlined_call_operand.vmem [shape: f32[16,256], index: 3, kind: output, shape index: {}]
  %s4 = sld [smem:[#allocation0]]
  $region22: #{transformer_forward.26} parent=0
    _
  %s6 = ssub.s32 1, %s4
  %s7 = scalar_select 0, %s6, %s4
  // Predicated region
  $region2: #{transformer_forward.26} parent=0 // pred_check
    _
  $region3: #{transformer_forward.26} parent=0 // pred_check_branch
    %9 = sbr.rel (0) target = $region5
  $region4: #{transformer_forward.26} parent=0 // pred_region
    _
  $region5: #{transformer_forward.26} parent=0 // pred_fallthru
    _
  // Predicated region
  $region6: #{transformer_forward.26} parent=0 // pred_check
    _
  $region7: #{transformer_forward.26} parent=0 // pred_check_branch
    %11 = sbr.rel (0) target = $region9
  $region8: #{transformer_forward.26} parent=0 // pred_region
    _
  $region9: #{transformer_forward.26} parent=0 // pred_fallthru
    _
  // Predicated region
  $region10: #{transformer_forward.26} parent=0 // pred_check
    _
  $region11: #{transformer_forward.26} parent=0 // pred_check_branch
    %13 = sbr.rel (0) target = $region13
  $region12: #{transformer_forward.26} parent=0 // pred_region
    _
  $region13: #{transformer_forward.26} parent=0 // pred_fallthru
    _
  %v15 = vld [vmem:[%s0] sm:$0xff]
  %v16 = vld [vmem:[%s0 + $0x8] sm:$0xff]
  %v17 = vpack.c.bf16 %v16, %v15
  %v18 = vld [vmem:[%s1] sm:$0xff]
  %v19 = vld [vmem:[%s1 + $0x8] sm:$0xff]
  %v20 = vld [vmem:[%s1 + $0x10] sm:$0xff]
  %v21 = vld [vmem:[%s1 + $0x18] sm:$0xff]
  %v22 = vld [vmem:[%s1 + $0x20] sm:$0xff]
  %v23 = vld [vmem:[%s1 + $0x28] sm:$0xff]
  %v24 = vld [vmem:[%s1 + $0x30] sm:$0xff]
  %v25 = vld [vmem:[%s1 + $0x38] sm:$0xff]
  %v26 = vld [vmem:[%s1 + $0x40] sm:$0xff]
  %v27 = vld [vmem:[%s1 + $0x48] sm:$0xff]
  %v28 = vld [vmem:[%s1 + $0x50] sm:$0xff]
  %v29 = vld [vmem:[%s1 + $0x58] sm:$0xff]
  %v30 = vld [vmem:[%s1 + $0x60] sm:$0xff]
  %v31 = vld [vmem:[%s1 + $0x68] sm:$0xff]
  %v32 = vld [vmem:[%s1 + $0x70] sm:$0xff]
  %v33 = vld [vmem:[%s1 + $0x78] sm:$0xff]
  %v34 = vld [vmem:[%s1 + $0x80] sm:$0xff]
  %v35 = vld [vmem:[%s1 + $0x88] sm:$0xff]
  %v36 = vld [vmem:[%s1 + $0x90] sm:$0xff]
  %v37 = vld [vmem:[%s1 + $0x98] sm:$0xff]
  %v38 = vld [vmem:[%s1 + $0xa0] sm:$0xff]
  %v39 = vld [vmem:[%s1 + $0xa8] sm:$0xff]
  %v40 = vld [vmem:[%s1 + $0xb0] sm:$0xff]
  %v41 = vld [vmem:[%s1 + $0xb8] sm:$0xff]
  %v42 = vld [vmem:[%s1 + $0xc0] sm:$0xff]
  %v43 = vld [vmem:[%s1 + $0xc8] sm:$0xff]
  %v44 = vld [vmem:[%s1 + $0xd0] sm:$0xff]
  %v45 = vld [vmem:[%s1 + $0xd8] sm:$0xff]
  %v46 = vld [vmem:[%s1 + $0xe0] sm:$0xff]
  %v47 = vld [vmem:[%s1 + $0xe8] sm:$0xff]
  %v48 = vld [vmem:[%s1 + $0xf0] sm:$0xff]
  %v49 = vld [vmem:[%s1 + $0xf8] sm:$0xff]
  %v50 = vpack.c.bf16 %v20, %v18
  %v51 = vpack.c.bf16 %v21, %v19
  %v52 = vpack.c.bf16 %v24, %v22
  %v53 = vpack.c.bf16 %v25, %v23
  %v54 = vpack.c.bf16 %v28, %v26
  %v55 = vpack.c.bf16 %v29, %v27
  %v56 = vpack.c.bf16 %v32, %v30
  %v57 = vpack.c.bf16 %v33, %v31
  %v58 = vpack.c.bf16 %v36, %v34
  %v59 = vpack.c.bf16 %v37, %v35
  %v60 = vpack.c.bf16 %v40, %v38
  %v61 = vpack.c.bf16 %v41, %v39
  %v62 = vpack.c.bf16 %v44, %v42
  %v63 = vpack.c.bf16 %v45, %v43
  %v64 = vpack.c.bf16 %v48, %v46
  %v65 = vpack.c.bf16 %v49, %v47
  %v66 = vld [vmem:[%s2] sm:$0x3]
  %v68 = vlaneseq
  %v69 = vshrl.u32 %v68, 7
  %v70 = vsub.s32 0, %v69
  %v71 = vrot.slane %v66, %v70
  %v72 = vlaneseq
  %v73 = vshrl.u32 %v72, 7
  %v74 = vsub.s32 1, %v73
  %v75 = vrot.slane %v66, %v74
  %78 = vmatprep.subr.bf16.mxu0 %v51
  %79 = vmatpush1.bf16.msra.mxu0 %v50
  %80 = vmatprep.subr.bf16.mxu0 %v53
  %81 = vmatpush1.bf16.msra.mxu0 %v52
  %82 = vmatprep.subr.bf16.mxu0 %v55
  %83 = vmatpush1.bf16.msra.mxu0 %v54
  %84 = vmatprep.subr.bf16.mxu0 %v57
  %85 = vmatpush1.bf16.msra.mxu0 %v56
  %86 = vmatprep.subr.bf16.mxu0 %v59
  %87 = vmatpush1.bf16.msra.mxu0 %v58
  %88 = vmatprep.subr.bf16.mxu0 %v61
  %89 = vmatpush1.bf16.msra.mxu0 %v60
  %90 = vmatprep.subr.bf16.mxu0 %v63
  %91 = vmatpush1.bf16.msra.mxu0 %v62
  %92 = vmatprep.subr.bf16.mxu0 %v65
  %93 = vmatpush1.bf16.msra.mxu0 %v64
  %94 = vmatprep.subr.bf16.mxu0 0
  %95 = vmatpush1.bf16.msra.mxu0 0
  %96 = vmatprep.subr.bf16.mxu0 0
  %97 = vmatpush1.bf16.msra.mxu0 0
  %98 = vmatprep.subr.bf16.mxu0 0
  %99 = vmatpush1.bf16.msra.mxu0 0
  %100 = vmatprep.subr.bf16.mxu0 0
  %101 = vmatpush1.bf16.msra.mxu0 0
  %102 = vmatprep.subr.bf16.mxu0 0
  %103 = vmatpush1.bf16.msra.mxu0 0
  %104 = vmatprep.subr.bf16.mxu0 0
  %105 = vmatpush1.bf16.msra.mxu0 0
  %106 = vmatprep.subr.bf16.mxu0 0
  %107 = vmatpush1.bf16.msra.mxu0 0
  %108 = vmatprep.subr.bf16.mxu0 0
  %109 = vmatpush1.bf16.msra.mxu0 0
  %110 = vmatprep.mubr.bf16.mxu0 0
  %111 = vmatmul.mubr.bf16.gmra.mrb[0].mxu0 %v17
  %v112 = vpop.f32.mrb[0].mxu0
  %v113 = vadd.f32 %v71, %v112
  %v114 = vpop.f32.mrb[0].mxu0
  %v115 = vadd.f32 %v75, %v114
  %v116 = vpop.f32.mrb[0].mxu0
  %v117 = vadd.f32 %v71, %v116
  %v118 = vpop.f32.mrb[0].mxu0
  %v119 = vadd.f32 %v75, %v118
  %120 = vdwg.mxu0
  %v121 = vmax.f32 %v113, 0.0
  %v122 = vmax.f32 %v115, 0.0
  %v123 = vmax.f32 %v117, 0.0
  %v124 = vmax.f32 %v119, 0.0
  %125 = vst [vmem:[%s3] sm:$0xff] %v121
  %126 = vst [vmem:[%s3 + $0x8] sm:$0xff] %v122
  %127 = vst [vmem:[%s3 + $0x10] sm:$0xff] %v123
  %128 = vst [vmem:[%s3 + $0x18] sm:$0xff] %v124
  // Predicated region
  $region14: #{transformer_forward.26} parent=0 // pred_check
    _
  $region15: #{transformer_forward.26} parent=0 // pred_check_branch
    %130 = sbr.rel (0) target = $region17
  $region16: #{transformer_forward.26} parent=0 // pred_region
    _
  $region17: #{transformer_forward.26} parent=0 // pred_fallthru
    _
  // Predicated region
  $region18: #{transformer_forward.26} parent=0 // pred_check
    _
  $region19: #{transformer_forward.26} parent=0 // pred_check_branch
    %132 = sbr.rel (0) target = $region21
  $region20: #{transformer_forward.26} parent=0 // pred_region
    _
  $region21: #{transformer_forward.26} parent=0 // pred_fallthru
    _

// kernel: transformer_forward.32
$region0: #{transformer_forward.32}
  #allocation0 [shape = 'u32[]', space=smem, size = 0x4, offset = 0x4, fixed_abs, tag = 'smem constant byte address 0x4 - core index']
  #allocation1 [shape = 'u32[144,128]{1,0:T(1,128)}', space=vmem, size = 0x12000, scoped, tag = 'internal scratch']
  %s0 = inlined_call_operand.vmem [shape: f32[16,128], index: 0, kind: input, shape index: {}]
  %s1 = inlined_call_operand.vmem [shape: f32[1,128], index: 1, kind: input, shape index: {}]
  %s2 = inlined_call_operand.vmem [shape: f32[1,128], index: 2, kind: input, shape index: {}]
  %s3 = inlined_call_operand.vmem [shape: f32[16,128], index: 3, kind: output, shape index: {}]
  %s4 = sld [smem:[#allocation0]]
  $region22: #{transformer_forward.32} parent=0
    _
  %s6 = ssub.s32 1, %s4
  %s7 = scalar_select 0, %s6, %s4
  // Predicated region
  $region2: #{transformer_forward.32} parent=0 // pred_check
    _
  $region3: #{transformer_forward.32} parent=0 // pred_check_branch
    %9 = sbr.rel (0) target = $region5
  $region4: #{transformer_forward.32} parent=0 // pred_region
    _
  $region5: #{transformer_forward.32} parent=0 // pred_fallthru
    _
  // Predicated region
  $region6: #{transformer_forward.32} parent=0 // pred_check
    _
  $region7: #{transformer_forward.32} parent=0 // pred_check_branch
    %11 = sbr.rel (0) target = $region9
  $region8: #{transformer_forward.32} parent=0 // pred_region
    _
  $region9: #{transformer_forward.32} parent=0 // pred_fallthru
    _
  // Predicated region
  $region10: #{transformer_forward.32} parent=0 // pred_check
    _
  $region11: #{transformer_forward.32} parent=0 // pred_check_branch
    %13 = sbr.rel (0) target = $region13
  $region12: #{transformer_forward.32} parent=0 // pred_region
    _
  $region13: #{transformer_forward.32} parent=0 // pred_fallthru
    _
  %v14 = vld [vmem:[%s0] sm:$0xff]
  %v15 = vld [vmem:[%s0 + $0x8] sm:$0xff]
  %16 = vadd.xlane.f32.xlu0 %v14
  %v17 = vpop.xlane.xlu0 %16
  %18 = vadd.xlane.f32.xlu0 %v15
  %v19 = vpop.xlane.xlu0 %18
  %v20 = vrcp.pop 128.0
  %v21 = vmul.f32 %v17, %v20
  %v22 = vmul.f32 %v19, %v20
  %v23 = vsub.f32 %v14, %v21
  %v24 = vsub.f32 %v15, %v22
  %v25 = vmul.f32 %v23, %v23
  %v26 = vmul.f32 %v24, %v24
  %27 = vadd.xlane.f32.xlu0 %v25
  %v28 = vpop.xlane.xlu0 %27
  %29 = vadd.xlane.f32.xlu0 %v26
  %v30 = vpop.xlane.xlu0 %29
  %v31 = vmul.f32 %v28, %v20
  %v32 = vmul.f32 %v30, %v20
  %v33 = vadd.f32 %v31, 1e-05
  %v34 = vadd.f32 %v32, 1e-05
  %v35 = vrsqrt.pop %v33
  %v36 = vrsqrt.pop %v34
  %v37 = vmul.f32 %v23, %v35
  %v38 = vmul.f32 %v24, %v36
  %v39 = vld [vmem:[%s1] sm:$0x1]
  %v41 = vlaneseq
  %v42 = vshrl.u32 %v41, 7
  %v43 = vsub.s32 0, %v42
  %v44 = vrot.slane %v39, %v43
  %v46 = vmul.f32 %v37, %v44
  %v47 = vmul.f32 %v38, %v44
  %v48 = vld [vmem:[%s2] sm:$0x1]
  %v50 = vlaneseq
  %v51 = vshrl.u32 %v50, 7
  %v52 = vsub.s32 0, %v51
  %v53 = vrot.slane %v48, %v52
  %v55 = vadd.f32 %v46, %v53
  %v56 = vadd.f32 %v47, %v53
  %57 = vst [vmem:[%s3] sm:$0xff] %v55
  %58 = vst [vmem:[%s3 + $0x8] sm:$0xff] %v56
  // Predicated region
  $region14: #{transformer_forward.32} parent=0 // pred_check
    _
  $region15: #{transformer_forward.32} parent=0 // pred_check_branch
    %60 = sbr.rel (0) target = $region17
  $region16: #{transformer_forward.32} parent=0 // pred_region
    _
  $region17: #{transformer_forward.32} parent=0 // pred_fallthru
    _
  // Predicated region
  $region18: #{transformer_forward.32} parent=0 // pred_check
    _
  $region19: #{transformer_forward.32} parent=0 // pred_check_branch
    %62 = sbr.rel (0) target = $region21
  $region20: #{transformer_forward.32} parent=0 // pred_region
    _
  $region21: #{transformer_forward.32} parent=0 // pred_fallthru
    _

// kernel: transformer_forward.27
$region0: #{transformer_forward.27}
  #allocation0 [shape = 'u32[]', space=smem, size = 0x4, offset = 0x4, fixed_abs, tag = 'smem constant byte address 0x4 - core index']
  #allocation1 [shape = 'u32[144,128]{1,0:T(1,128)}', space=vmem, size = 0x12000, scoped, tag = 'internal scratch']
  %s0 = inlined_call_operand.vmem [shape: f32[16,256], index: 0, kind: input, shape index: {}]
  %s1 = inlined_call_operand.vmem [shape: f32[256,128], index: 1, kind: input, shape index: {}]
  %s2 = inlined_call_operand.vmem [shape: f32[1,128], index: 2, kind: input, shape index: {}]
  %s3 = inlined_call_operand.vmem [shape: f32[16,128], index: 3, kind: input, shape index: {}]
  %s4 = inlined_call_operand.vmem [shape: f32[1,128], index: 4, kind: input, shape index: {}]
  %s5 = inlined_call_operand.vmem [shape: f32[1,128], index: 5, kind: input, shape index: {}]
  %s6 = inlined_call_operand.vmem [shape: f32[16,128], index: 6, kind: output, shape index: {}]
  %s7 = sld [smem:[#allocation0]]
  $region34: #{transformer_forward.27} parent=0
    _
  %s9 = ssub.s32 1, %s7
  %s10 = scalar_select 0, %s9, %s7
  // Predicated region
  $region2: #{transformer_forward.27} parent=0 // pred_check
    _
  $region3: #{transformer_forward.27} parent=0 // pred_check_branch
    %12 = sbr.rel (0) target = $region5
  $region4: #{transformer_forward.27} parent=0 // pred_region
    _
  $region5: #{transformer_forward.27} parent=0 // pred_fallthru
    _
  // Predicated region
  $region6: #{transformer_forward.27} parent=0 // pred_check
    _
  $region7: #{transformer_forward.27} parent=0 // pred_check_branch
    %14 = sbr.rel (0) target = $region9
  $region8: #{transformer_forward.27} parent=0 // pred_region
    _
  $region9: #{transformer_forward.27} parent=0 // pred_fallthru
    _
  // Predicated region
  $region10: #{transformer_forward.27} parent=0 // pred_check
    _
  $region11: #{transformer_forward.27} parent=0 // pred_check_branch
    %16 = sbr.rel (0) target = $region13
  $region12: #{transformer_forward.27} parent=0 // pred_region
    _
  $region13: #{transformer_forward.27} parent=0 // pred_fallthru
    _
  // Predicated region
  $region14: #{transformer_forward.27} parent=0 // pred_check
    _
  $region15: #{transformer_forward.27} parent=0 // pred_check_branch
    %18 = sbr.rel (0) target = $region17
  $region16: #{transformer_forward.27} parent=0 // pred_region
    _
  $region17: #{transformer_forward.27} parent=0 // pred_fallthru
    _
  // Predicated region
  $region18: #{transformer_forward.27} parent=0 // pred_check
    _
  $region19: #{transformer_forward.27} parent=0 // pred_check_branch
    %20 = sbr.rel (0) target = $region21
  $region20: #{transformer_forward.27} parent=0 // pred_region
    _
  $region21: #{transformer_forward.27} parent=0 // pred_fallthru
    _
  // Predicated region
  $region22: #{transformer_forward.27} parent=0 // pred_check
    _
  $region23: #{transformer_forward.27} parent=0 // pred_check_branch
    %22 = sbr.rel (0) target = $region25
  $region24: #{transformer_forward.27} parent=0 // pred_region
    _
  $region25: #{transformer_forward.27} parent=0 // pred_fallthru
    _
  %v24 = vld [vmem:[%s0] sm:$0xff]
  %v25 = vld [vmem:[%s0 + $0x8] sm:$0xff]
  %v26 = vld [vmem:[%s0 + $0x10] sm:$0xff]
  %v27 = vld [vmem:[%s0 + $0x18] sm:$0xff]
  %v28 = vpack.c.bf16 %v26, %v24
  %v29 = vpack.c.bf16 %v27, %v25
  %v30 = vld [vmem:[%s1] sm:$0xff]
  %v31 = vld [vmem:[%s1 + $0x8] sm:$0xff]
  %v32 = vld [vmem:[%s1 + $0x10] sm:$0xff]
  %v33 = vld [vmem:[%s1 + $0x18] sm:$0xff]
  %v34 = vld [vmem:[%s1 + $0x20] sm:$0xff]
  %v35 = vld [vmem:[%s1 + $0x28] sm:$0xff]
  %v36 = vld [vmem:[%s1 + $0x30] sm:$0xff]
  %v37 = vld [vmem:[%s1 + $0x38] sm:$0xff]
  %v38 = vld [vmem:[%s1 + $0x40] sm:$0xff]
  %v39 = vld [vmem:[%s1 + $0x48] sm:$0xff]
  %v40 = vld [vmem:[%s1 + $0x50] sm:$0xff]
  %v41 = vld [vmem:[%s1 + $0x58] sm:$0xff]
  %v42 = vld [vmem:[%s1 + $0x60] sm:$0xff]
  %v43 = vld [vmem:[%s1 + $0x68] sm:$0xff]
  %v44 = vld [vmem:[%s1 + $0x70] sm:$0xff]
  %v45 = vld [vmem:[%s1 + $0x78] sm:$0xff]
  %v46 = vld [vmem:[%s1 + $0x80] sm:$0xff]
  %v47 = vld [vmem:[%s1 + $0x88] sm:$0xff]
  %v48 = vld [vmem:[%s1 + $0x90] sm:$0xff]
  %v49 = vld [vmem:[%s1 + $0x98] sm:$0xff]
  %v50 = vld [vmem:[%s1 + $0xa0] sm:$0xff]
  %v51 = vld [vmem:[%s1 + $0xa8] sm:$0xff]
  %v52 = vld [vmem:[%s1 + $0xb0] sm:$0xff]
  %v53 = vld [vmem:[%s1 + $0xb8] sm:$0xff]
  %v54 = vld [vmem:[%s1 + $0xc0] sm:$0xff]
  %v55 = vld [vmem:[%s1 + $0xc8] sm:$0xff]
  %v56 = vld [vmem:[%s1 + $0xd0] sm:$0xff]
  %v57 = vld [vmem:[%s1 + $0xd8] sm:$0xff]
  %v58 = vld [vmem:[%s1 + $0xe0] sm:$0xff]
  %v59 = vld [vmem:[%s1 + $0xe8] sm:$0xff]
  %v60 = vld [vmem:[%s1 + $0xf0] sm:$0xff]
  %v61 = vld [vmem:[%s1 + $0xf8] sm:$0xff]
  %v62 = vpack.c.bf16 %v31, %v30
  %v63 = vpack.c.bf16 %v33, %v32
  %v64 = vpack.c.bf16 %v35, %v34
  %v65 = vpack.c.bf16 %v37, %v36
  %v66 = vpack.c.bf16 %v39, %v38
  %v67 = vpack.c.bf16 %v41, %v40
  %v68 = vpack.c.bf16 %v43, %v42
  %v69 = vpack.c.bf16 %v45, %v44
  %v70 = vpack.c.bf16 %v47, %v46
  %v71 = vpack.c.bf16 %v49, %v48
  %v72 = vpack.c.bf16 %v51, %v50
  %v73 = vpack.c.bf16 %v53, %v52
  %v74 = vpack.c.bf16 %v55, %v54
  %v75 = vpack.c.bf16 %v57, %v56
  %v76 = vpack.c.bf16 %v59, %v58
  %v77 = vpack.c.bf16 %v61, %v60
  %v78 = vld [vmem:[%s2] sm:$0x1]
  %v80 = vlaneseq
  %v81 = vshrl.u32 %v80, 7
  %v82 = vsub.s32 0, %v81
  %v83 = vrot.slane %v78, %v82
  %85 = vmatprep.subr.bf16.mxu0 0
  %86 = vmatpush1.bf16.msra.mxu0 %v62
  %87 = vmatprep.subr.bf16.mxu0 0
  %88 = vmatpush1.bf16.msra.mxu0 %v63
  %89 = vmatprep.subr.bf16.mxu0 0
  %90 = vmatpush1.bf16.msra.mxu0 %v64
  %91 = vmatprep.subr.bf16.mxu0 0
  %92 = vmatpush1.bf16.msra.mxu0 %v65
  %93 = vmatprep.subr.bf16.mxu0 0
  %94 = vmatpush1.bf16.msra.mxu0 %v66
  %95 = vmatprep.subr.bf16.mxu0 0
  %96 = vmatpush1.bf16.msra.mxu0 %v67
  %97 = vmatprep.subr.bf16.mxu0 0
  %98 = vmatpush1.bf16.msra.mxu0 %v68
  %99 = vmatprep.subr.bf16.mxu0 0
  %100 = vmatpush1.bf16.msra.mxu0 %v69
  %101 = vmatprep.subr.bf16.mxu0 0
  %102 = vmatpush1.bf16.msra.mxu0 %v70
  %103 = vmatprep.subr.bf16.mxu0 0
  %104 = vmatpush1.bf16.msra.mxu0 %v71
  %105 = vmatprep.subr.bf16.mxu0 0
  %106 = vmatpush1.bf16.msra.mxu0 %v72
  %107 = vmatprep.subr.bf16.mxu0 0
  %108 = vmatpush1.bf16.msra.mxu0 %v73
  %109 = vmatprep.subr.bf16.mxu0 0
  %110 = vmatpush1.bf16.msra.mxu0 %v74
  %111 = vmatprep.subr.bf16.mxu0 0
  %112 = vmatpush1.bf16.msra.mxu0 %v75
  %113 = vmatprep.subr.bf16.mxu0 0
  %114 = vmatpush1.bf16.msra.mxu0 %v76
  %115 = vmatprep.subr.bf16.mxu0 0
  %116 = vmatpush1.bf16.msra.mxu0 %v77
  %117 = vmatprep.mubr.bf16.mxu0 %v29
  %118 = vmatmul.mubr.bf16.gmra.mrb[0].mxu0 %v28
  %v119 = vpop.f32.mrb[0].mxu0
  %v120 = vadd.f32 %v83, %v119
  %v121 = vpop.f32.mrb[0].mxu0
  %v122 = vpop.f32.mrb[0].mxu0
  %v123 = vadd.f32 %v83, %v122
  %v124 = vpop.f32.mrb[0].mxu0
  %125 = vdwg.mxu0
  %v126 = vld [vmem:[%s3] sm:$0xff]
  %v127 = vld [vmem:[%s3 + $0x8] sm:$0xff]
  %v128 = vadd.f32 %v120, %v126
  %v129 = vadd.f32 %v123, %v127
  %130 = vadd.xlane.f32.xlu0 %v128
  %v131 = vpop.xlane.xlu0 %130
  %132 = vadd.xlane.f32.xlu0 %v129
  %v133 = vpop.xlane.xlu0 %132
  %v134 = vrcp.pop 128.0
  %v135 = vmul.f32 %v131, %v134
  %v136 = vmul.f32 %v133, %v134
  %v137 = vsub.f32 %v128, %v135
  %v138 = vsub.f32 %v129, %v136
  %v139 = vmul.f32 %v137, %v137
  %v140 = vmul.f32 %v138, %v138
  %141 = vadd.xlane.f32.xlu0 %v139
  %v142 = vpop.xlane.xlu0 %141
  %143 = vadd.xlane.f32.xlu0 %v140
  %v144 = vpop.xlane.xlu0 %143
  %v145 = vmul.f32 %v142, %v134
  %v146 = vmul.f32 %v144, %v134
  %v147 = vadd.f32 %v145, 1e-05
  %v148 = vadd.f32 %v146, 1e-05
  %v149 = vrsqrt.pop %v147
  %v150 = vrsqrt.pop %v148
  %v151 = vmul.f32 %v137, %v149
  %v152 = vmul.f32 %v138, %v150
  %v153 = vld [vmem:[%s4] sm:$0x1]
  %v155 = vlaneseq
  %v156 = vshrl.u32 %v155, 7
  %v157 = vsub.s32 0, %v156
  %v158 = vrot.slane %v153, %v157
  %v160 = vmul.f32 %v151, %v158
  %v161 = vmul.f32 %v152, %v158
  %v162 = vld [vmem:[%s5] sm:$0x1]
  %v164 = vlaneseq
  %v165 = vshrl.u32 %v164, 7
  %v166 = vsub.s32 0, %v165
  %v167 = vrot.slane %v162, %v166
  %v169 = vadd.f32 %v160, %v167
  %v170 = vadd.f32 %v161, %v167
  %171 = vst [vmem:[%s6] sm:$0xff] %v169
  %172 = vst [vmem:[%s6 + $0x8] sm:$0xff] %v170
  // Predicated region
  $region26: #{transformer_forward.27} parent=0 // pred_check
    _
  $region27: #{transformer_forward.27} parent=0 // pred_check_branch
    %174 = sbr.rel (0) target = $region29
  $region28: #{transformer_forward.27} parent=0 // pred_region
    _
  $region29: #{transformer_forward.27} parent=0 // pred_fallthru
    _
  // Predicated region
  $region30: #{transformer_forward.27} parent=0 // pred_check
    _
  $region31: #{transformer_forward.27} parent=0 // pred_check_branch
    %176 = sbr.rel (0) target = $region33
  $region32: #{transformer_forward.27} parent=0 // pred_region
    _
  $region33: #{transformer_forward.27} parent=0 // pred_fallthru
    _

// kernel: transformer_forward.36
$region0: #{transformer_forward.36}
  #allocation0 [shape = 'u32[]', space=smem, size = 0x4, offset = 0x4, fixed_abs, tag = 'smem constant byte address 0x4 - core index']
  #allocation1 [shape = 'u32[144,128]{1,0:T(1,128)}', space=vmem, size = 0x12000, scoped, tag = 'internal scratch']
  %s0 = inlined_call_operand.vmem [shape: f32[16,128], index: 0, kind: input, shape index: {}]
  %s1 = inlined_call_operand.vmem [shape: f32[128,256], index: 1, kind: input, shape index: {}]
  %s2 = inlined_call_operand.vmem [shape: f32[1,256], index: 2, kind: input, shape index: {}]
  %s3 = inlined_call_operand.vmem [shape: f32[16,256], index: 3, kind: output, shape index: {}]
  %s4 = sld [smem:[#allocation0]]
  $region22: #{transformer_forward.36} parent=0
    _
  %s6 = ssub.s32 1, %s4
  %s7 = scalar_select 0, %s6, %s4
  // Predicated region
  $region2: #{transformer_forward.36} parent=0 // pred_check
    _
  $region3: #{transformer_forward.36} parent=0 // pred_check_branch
    %9 = sbr.rel (0) target = $region5
  $region4: #{transformer_forward.36} parent=0 // pred_region
    _
  $region5: #{transformer_forward.36} parent=0 // pred_fallthru
    _
  // Predicated region
  $region6: #{transformer_forward.36} parent=0 // pred_check
    _
  $region7: #{transformer_forward.36} parent=0 // pred_check_branch
    %11 = sbr.rel (0) target = $region9
  $region8: #{transformer_forward.36} parent=0 // pred_region
    _
  $region9: #{transformer_forward.36} parent=0 // pred_fallthru
    _
  // Predicated region
  $region10: #{transformer_forward.36} parent=0 // pred_check
    _
  $region11: #{transformer_forward.36} parent=0 // pred_check_branch
    %13 = sbr.rel (0) target = $region13
  $region12: #{transformer_forward.36} parent=0 // pred_region
    _
  $region13: #{transformer_forward.36} parent=0 // pred_fallthru
    _
  %v15 = vld [vmem:[%s0] sm:$0xff]
  %v16 = vld [vmem:[%s0 + $0x8] sm:$0xff]
  %v17 = vpack.c.bf16 %v16, %v15
  %v18 = vld [vmem:[%s1] sm:$0xff]
  %v19 = vld [vmem:[%s1 + $0x8] sm:$0xff]
  %v20 = vld [vmem:[%s1 + $0x10] sm:$0xff]
  %v21 = vld [vmem:[%s1 + $0x18] sm:$0xff]
  %v22 = vld [vmem:[%s1 + $0x20] sm:$0xff]
  %v23 = vld [vmem:[%s1 + $0x28] sm:$0xff]
  %v24 = vld [vmem:[%s1 + $0x30] sm:$0xff]
  %v25 = vld [vmem:[%s1 + $0x38] sm:$0xff]
  %v26 = vld [vmem:[%s1 + $0x40] sm:$0xff]
  %v27 = vld [vmem:[%s1 + $0x48] sm:$0xff]
  %v28 = vld [vmem:[%s1 + $0x50] sm:$0xff]
  %v29 = vld [vmem:[%s1 + $0x58] sm:$0xff]
  %v30 = vld [vmem:[%s1 + $0x60] sm:$0xff]
  %v31 = vld [vmem:[%s1 + $0x68] sm:$0xff]
  %v32 = vld [vmem:[%s1 + $0x70] sm:$0xff]
  %v33 = vld [vmem:[%s1 + $0x78] sm:$0xff]
  %v34 = vld [vmem:[%s1 + $0x80] sm:$0xff]
  %v35 = vld [vmem:[%s1 + $0x88] sm:$0xff]
  %v36 = vld [vmem:[%s1 + $0x90] sm:$0xff]
  %v37 = vld [vmem:[%s1 + $0x98] sm:$0xff]
  %v38 = vld [vmem:[%s1 + $0xa0] sm:$0xff]
  %v39 = vld [vmem:[%s1 + $0xa8] sm:$0xff]
  %v40 = vld [vmem:[%s1 + $0xb0] sm:$0xff]
  %v41 = vld [vmem:[%s1 + $0xb8] sm:$0xff]
  %v42 = vld [vmem:[%s1 + $0xc0] sm:$0xff]
  %v43 = vld [vmem:[%s1 + $0xc8] sm:$0xff]
  %v44 = vld [vmem:[%s1 + $0xd0] sm:$0xff]
  %v45 = vld [vmem:[%s1 + $0xd8] sm:$0xff]
  %v46 = vld [vmem:[%s1 + $0xe0] sm:$0xff]
  %v47 = vld [vmem:[%s1 + $0xe8] sm:$0xff]
  %v48 = vld [vmem:[%s1 + $0xf0] sm:$0xff]
  %v49 = vld [vmem:[%s1 + $0xf8] sm:$0xff]
  %v50 = vpack.c.bf16 %v20, %v18
  %v51 = vpack.c.bf16 %v21, %v19
  %v52 = vpack.c.bf16 %v24, %v22
  %v53 = vpack.c.bf16 %v25, %v23
  %v54 = vpack.c.bf16 %v28, %v26
  %v55 = vpack.c.bf16 %v29, %v27
  %v56 = vpack.c.bf16 %v32, %v30
  %v57 = vpack.c.bf16 %v33, %v31
  %v58 = vpack.c.bf16 %v36, %v34
  %v59 = vpack.c.bf16 %v37, %v35
  %v60 = vpack.c.bf16 %v40, %v38
  %v61 = vpack.c.bf16 %v41, %v39
  %v62 = vpack.c.bf16 %v44, %v42
  %v63 = vpack.c.bf16 %v45, %v43
  %v64 = vpack.c.bf16 %v48, %v46
  %v65 = vpack.c.bf16 %v49, %v47
  %v66 = vld [vmem:[%s2] sm:$0x3]
  %v68 = vlaneseq
  %v69 = vshrl.u32 %v68, 7
  %v70 = vsub.s32 0, %v69
  %v71 = vrot.slane %v66, %v70
  %v72 = vlaneseq
  %v73 = vshrl.u32 %v72, 7
  %v74 = vsub.s32 1, %v73
  %v75 = vrot.slane %v66, %v74
  %78 = vmatprep.subr.bf16.mxu0 %v51
  %79 = vmatpush1.bf16.msra.mxu0 %v50
  %80 = vmatprep.subr.bf16.mxu0 %v53
  %81 = vmatpush1.bf16.msra.mxu0 %v52
  %82 = vmatprep.subr.bf16.mxu0 %v55
  %83 = vmatpush1.bf16.msra.mxu0 %v54
  %84 = vmatprep.subr.bf16.mxu0 %v57
  %85 = vmatpush1.bf16.msra.mxu0 %v56
  %86 = vmatprep.subr.bf16.mxu0 %v59
  %87 = vmatpush1.bf16.msra.mxu0 %v58
  %88 = vmatprep.subr.bf16.mxu0 %v61
  %89 = vmatpush1.bf16.msra.mxu0 %v60
  %90 = vmatprep.subr.bf16.mxu0 %v63
  %91 = vmatpush1.bf16.msra.mxu0 %v62
  %92 = vmatprep.subr.bf16.mxu0 %v65
  %93 = vmatpush1.bf16.msra.mxu0 %v64
  %94 = vmatprep.subr.bf16.mxu0 0
  %95 = vmatpush1.bf16.msra.mxu0 0
  %96 = vmatprep.subr.bf16.mxu0 0
  %97 = vmatpush1.bf16.msra.mxu0 0
  %98 = vmatprep.subr.bf16.mxu0 0
  %99 = vmatpush1.bf16.msra.mxu0 0
  %100 = vmatprep.subr.bf16.mxu0 0
  %101 = vmatpush1.bf16.msra.mxu0 0
  %102 = vmatprep.subr.bf16.mxu0 0
  %103 = vmatpush1.bf16.msra.mxu0 0
  %104 = vmatprep.subr.bf16.mxu0 0
  %105 = vmatpush1.bf16.msra.mxu0 0
  %106 = vmatprep.subr.bf16.mxu0 0
  %107 = vmatpush1.bf16.msra.mxu0 0
  %108 = vmatprep.subr.bf16.mxu0 0
  %109 = vmatpush1.bf16.msra.mxu0 0
  %110 = vmatprep.mubr.bf16.mxu0 0
  %111 = vmatmul.mubr.bf16.gmra.mrb[0].mxu0 %v17
  %v112 = vpop.f32.mrb[0].mxu0
  %v113 = vadd.f32 %v71, %v112
  %v114 = vpop.f32.mrb[0].mxu0
  %v115 = vadd.f32 %v75, %v114
  %v116 = vpop.f32.mrb[0].mxu0
  %v117 = vadd.f32 %v71, %v116
  %v118 = vpop.f32.mrb[0].mxu0
  %v119 = vadd.f32 %v75, %v118
  %120 = vdwg.mxu0
  %121 = vst [vmem:[%s3] sm:$0xff] %v113
  %122 = vst [vmem:[%s3 + $0x8] sm:$0xff] %v115
  %123 = vst [vmem:[%s3 + $0x10] sm:$0xff] %v117
  %124 = vst [vmem:[%s3 + $0x18] sm:$0xff] %v119
  // Predicated region
  $region14: #{transformer_forward.36} parent=0 // pred_check
    _
  $region15: #{transformer_forward.36} parent=0 // pred_check_branch
    %126 = sbr.rel (0) target = $region17
  $region16: #{transformer_forward.36} parent=0 // pred_region
    _
  $region17: #{transformer_forward.36} parent=0 // pred_fallthru
    _
  // Predicated region
  $region18: #{transformer_forward.36} parent=0 // pred_check
    _
  $region19: #{transformer_forward.36} parent=0 // pred_check_branch
    %128 = sbr.rel (0) target = $region21
  $region20: #{transformer_forward.36} parent=0 // pred_region
    _
  $region21: #{transformer_forward.36} parent=0 // pred_fallthru
    _

// kernel: transformer_forward.37
$region0: #{transformer_forward.37}
  #allocation0 [shape = 'u32[]', space=smem, size = 0x4, offset = 0x4, fixed_abs, tag = 'smem constant byte address 0x4 - core index']
  #allocation1 [shape = 'u32[144,128]{1,0:T(1,128)}', space=vmem, size = 0x12000, scoped, tag = 'internal scratch']
  #allocation2 [shape = 'bf16[8,128]{1,0:T(8,128)(2,1)}', space=vmem, size = 0x800, scoped, tag = 'scratch operand']
  %s0 = inlined_call_operand.vmem [shape: f32[2,8,128], index: 0, kind: input, shape index: {}]
  %s1 = inlined_call_operand.vmem [shape: f32[2,8,256], index: 1, kind: input, shape index: {}, may-alias: {1,2}]
  %s2 = inlined_call_operand.vmem [shape: f32[2,8,256], index: 2, kind: input, shape index: {}, may-alias: {1,2}]
  %s3 = inlined_call_operand.vmem [shape: f32[128,128], index: 3, kind: input, shape index: {}]
  %s4 = inlined_call_operand.vmem [shape: f32[1,128], index: 4, kind: input, shape index: {}]
  %s5 = inlined_call_operand.vmem [shape: f32[2,8,128], index: 5, kind: input, shape index: {}]
  %s6 = inlined_call_operand.vmem [shape: f32[1,128], index: 6, kind: input, shape index: {}]
  %s7 = inlined_call_operand.vmem [shape: f32[1,128], index: 7, kind: input, shape index: {}]
  %s8 = inlined_call_operand.vmem [shape: f32[2,8,128], index: 8, kind: output, shape index: {}]
  %s9 = sld [smem:[#allocation0]]
  $region65: #{transformer_forward.37} parent=0
    _
  %s11 = ssub.s32 1, %s9
  %s12 = scalar_select 0, %s11, %s9
  loop: start=0, step=1, limit=4
  $region2: #{transformer_forward.37} parent=0 // loop_pre_header
    _
  $region3: #{transformer_forward.37} parent=0 // loop_header
    %s14 = sphi 0, %s18
    %p15 = scmp.ge.s32.totalorder %s14, 4
    %s21 = sphi 0, %s33
    %s22 = sphi 0, %s29
    %s23 = sphi 0, %s21
    %s24 = sphi 0, %s22
    %s25 = sphi 0, %s23
    %s26 = sphi 0, %s24
    %s38 = sphi 0, %s40
    %s41 = sphi 0, %s38
    %s42 = sphi 0, %s41
    %s58 = sphi 0, %s42
    %s64 = sphi 0, %s66
    %s67 = sphi 0, %s64
    %s68 = sphi 0, %s67
    %s84 = sphi 0, %s68
    %s90 = sphi 0, %s92
    %s93 = sphi 0, %s90
    %s94 = sphi 0, %s93
    %s110 = sphi 0, %s94
    %s114 = sphi 0, %s114
    %s116 = sphi 0, %s114
    %s117 = sphi 0, %s116
    %s131 = sphi 0, %s117
    %s135 = sphi 0, %s135
    %s137 = sphi 0, %s135
    %s138 = sphi 0, %s137
    %s152 = sphi 0, %s138
    %s160 = sphi 0, %s162
    %s163 = sphi 0, %s160
    %s164 = sphi 0, %s163
    %s180 = sphi 0, %s164
    %s184 = sphi 0, %s184
    %s186 = sphi 0, %s184
    %s187 = sphi 0, %s186
    %s201 = sphi 0, %s187
    %s205 = sphi 0, %s205
    %s207 = sphi 0, %s205
    %s208 = sphi 0, %s207
    %s222 = sphi 0, %s208
    %s230 = sphi 0, %s232
    %s233 = sphi 0, %s230
    %s234 = sphi 0, %s233
    %s250 = sphi 0, %s234
  $region4: #{transformer_forward.37} parent=0 // loop_header_branch
    %17 = sbr.rel (%p15) target = $region8
  $region5: #{transformer_forward.37} parent=0 // loop_body
    %s19 = ssub.s32 %s14, 1
    %s20 = ssub.s32 %s14, 2
    %s27 = sadd.s32 1, %s22
    %p28 = scmp.ge.s32.totalorder %s27, 1
    %s29 = scalar_select %p28, 0, %s27
    %s30 = sadd.s32 1, %s21
    %s31 = scalar_select %p28, %s30, %s21
    %p32 = scmp.ge.s32.totalorder %s31, 2
    %s33 = scalar_select %p32, 0, %s31
    %s34 = ssub.s32 %s21, %s33
    %s35 = ssub.s32 %s22, %s29
    %s36 = sor.u32 %s34, %s35
    %p37 = scmp.eq.s32.totalorder %s36, 0
    %s39 = sadd.s32 %s38, 1
    %s40 = scalar_select %p37, %s38, %s39
    %p43 = pneg %p37
    %p44 = scmp.eq.s32.totalorder %s14, 1
    %p45 = por %p43, %p44
    %p46 = scmp.ne.s32.totalorder %s38, %s41
    %p47 = scmp.eq.s32.totalorder %s14, 0
    %p48 = por %p46, %p47
    %p49 = scmp.ne.s32.totalorder %s38, %s41
    %p50 = scmp.eq.s32.totalorder %s19, 1
    %p51 = por %p49, %p50
    %p52 = scmp.ne.s32.totalorder %s41, %s42
    %p53 = scmp.eq.s32.totalorder %s19, 0
    %p54 = por %p52, %p53
    %p55 = scmp.ne.s32.totalorder %s41, %s42
    %p56 = scmp.eq.s32.totalorder %s20, 1
    %p57 = por %p55, %p56
    %p59 = scmp.ne.s32.totalorder %s42, %s58
    %p60 = scmp.eq.s32.totalorder %s20, 0
    %p61 = por %p59, %p60
    %s62 = ssub.s32 %s21, %s33
    %p63 = scmp.eq.s32.totalorder %s62, 0
    %s65 = sadd.s32 %s64, 1
    %s66 = scalar_select %p63, %s64, %s65
    %p69 = pneg %p63
    %p70 = scmp.eq.s32.totalorder %s14, 1
    %p71 = por %p69, %p70
    %p72 = scmp.ne.s32.totalorder %s64, %s67
    %p73 = scmp.eq.s32.totalorder %s14, 0
    %p74 = por %p72, %p73
    %p75 = scmp.ne.s32.totalorder %s64, %s67
    %p76 = scmp.eq.s32.totalorder %s19, 1
    %p77 = por %p75, %p76
    %p78 = scmp.ne.s32.totalorder %s67, %s68
    %p79 = scmp.eq.s32.totalorder %s19, 0
    %p80 = por %p78, %p79
    %p81 = scmp.ne.s32.totalorder %s67, %s68
    %p82 = scmp.eq.s32.totalorder %s20, 1
    %p83 = por %p81, %p82
    %p85 = scmp.ne.s32.totalorder %s68, %s84
    %p86 = scmp.eq.s32.totalorder %s20, 0
    %p87 = por %p85, %p86
    %s88 = ssub.s32 %s21, %s33
    %p89 = scmp.eq.s32.totalorder %s88, 0
    %s91 = sadd.s32 %s90, 1
    %s92 = scalar_select %p89, %s90, %s91
    %p95 = pneg %p89
    %p96 = scmp.eq.s32.totalorder %s14, 1
    %p97 = por %p95, %p96
    %p98 = scmp.ne.s32.totalorder %s90, %s93
    %p99 = scmp.eq.s32.totalorder %s14, 0
    %p100 = por %p98, %p99
    %p101 = scmp.ne.s32.totalorder %s90, %s93
    %p102 = scmp.eq.s32.totalorder %s19, 1
    %p103 = por %p101, %p102
    %p104 = scmp.ne.s32.totalorder %s93, %s94
    %p105 = scmp.eq.s32.totalorder %s19, 0
    %p106 = por %p104, %p105
    %p107 = scmp.ne.s32.totalorder %s93, %s94
    %p108 = scmp.eq.s32.totalorder %s20, 1
    %p109 = por %p107, %p108
    %p111 = scmp.ne.s32.totalorder %s94, %s110
    %p112 = scmp.eq.s32.totalorder %s20, 0
    %p113 = por %p111, %p112
    %s115 = sadd.s32 %s114, 1
    %p118 = scmp.eq.s32.totalorder %s14, 1
    %p119 = scmp.ne.s32.totalorder %s114, %s116
    %p120 = scmp.eq.s32.totalorder %s14, 0
    %p121 = por %p119, %p120
    %p122 = scmp.ne.s32.totalorder %s114, %s116
    %p123 = scmp.eq.s32.totalorder %s19, 1
    %p124 = por %p122, %p123
    %p125 = scmp.ne.s32.totalorder %s116, %s117
    %p126 = scmp.eq.s32.totalorder %s19, 0
    %p127 = por %p125, %p126
    %p128 = scmp.ne.s32.totalorder %s116, %s117
    %p129 = scmp.eq.s32.totalorder %s20, 1
    %p130 = por %p128, %p129
    %p132 = scmp.ne.s32.totalorder %s117, %s131
    %p133 = scmp.eq.s32.totalorder %s20, 0
    %p134 = por %p132, %p133
    %s136 = sadd.s32 %s135, 1
    %p139 = scmp.eq.s32.totalorder %s14, 1
    %p140 = scmp.ne.s32.totalorder %s135, %s137
    %p141 = scmp.eq.s32.totalorder %s14, 0
    %p142 = por %p140, %p141
    %p143 = scmp.ne.s32.totalorder %s135, %s137
    %p144 = scmp.eq.s32.totalorder %s19, 1
    %p145 = por %p143, %p144
    %p146 = scmp.ne.s32.totalorder %s137, %s138
    %p147 = scmp.eq.s32.totalorder %s19, 0
    %p148 = por %p146, %p147
    %p149 = scmp.ne.s32.totalorder %s137, %s138
    %p150 = scmp.eq.s32.totalorder %s20, 1
    %p151 = por %p149, %p150
    %p153 = scmp.ne.s32.totalorder %s138, %s152
    %p154 = scmp.eq.s32.totalorder %s20, 0
    %p155 = por %p153, %p154
    %s156 = ssub.s32 %s21, %s33
    %s157 = ssub.s32 %s22, %s29
    %s158 = sor.u32 %s156, %s157
    %p159 = scmp.eq.s32.totalorder %s158, 0
    %s161 = sadd.s32 %s160, 1
    %s162 = scalar_select %p159, %s160, %s161
    %p165 = pneg %p159
    %p166 = scmp.eq.s32.totalorder %s14, 1
    %p167 = por %p165, %p166
    %p168 = scmp.ne.s32.totalorder %s160, %s163
    %p169 = scmp.eq.s32.totalorder %s14, 0
    %p170 = por %p168, %p169
    %p171 = scmp.ne.s32.totalorder %s160, %s163
    %p172 = scmp.eq.s32.totalorder %s19, 1
    %p173 = por %p171, %p172
    %p174 = scmp.ne.s32.totalorder %s163, %s164
    %p175 = scmp.eq.s32.totalorder %s19, 0
    %p176 = por %p174, %p175
    %p177 = scmp.ne.s32.totalorder %s163, %s164
    %p178 = scmp.eq.s32.totalorder %s20, 1
    %p179 = por %p177, %p178
    %p181 = scmp.ne.s32.totalorder %s164, %s180
    %p182 = scmp.eq.s32.totalorder %s20, 0
    %p183 = por %p181, %p182
    %s185 = sadd.s32 %s184, 1
    %p188 = scmp.eq.s32.totalorder %s14, 1
    %p189 = scmp.ne.s32.totalorder %s184, %s186
    %p190 = scmp.eq.s32.totalorder %s14, 0
    %p191 = por %p189, %p190
    %p192 = scmp.ne.s32.totalorder %s184, %s186
    %p193 = scmp.eq.s32.totalorder %s19, 1
    %p194 = por %p192, %p193
    %p195 = scmp.ne.s32.totalorder %s186, %s187
    %p196 = scmp.eq.s32.totalorder %s19, 0
    %p197 = por %p195, %p196
    %p198 = scmp.ne.s32.totalorder %s186, %s187
    %p199 = scmp.eq.s32.totalorder %s20, 1
    %p200 = por %p198, %p199
    %p202 = scmp.ne.s32.totalorder %s187, %s201
    %p203 = scmp.eq.s32.totalorder %s20, 0
    %p204 = por %p202, %p203
    %s206 = sadd.s32 %s205, 1
    %p209 = scmp.eq.s32.totalorder %s14, 1
    %p210 = scmp.ne.s32.totalorder %s205, %s207
    %p211 = scmp.eq.s32.totalorder %s14, 0
    %p212 = por %p210, %p211
    %p213 = scmp.ne.s32.totalorder %s205, %s207
    %p214 = scmp.eq.s32.totalorder %s19, 1
    %p215 = por %p213, %p214
    %p216 = scmp.ne.s32.totalorder %s207, %s208
    %p217 = scmp.eq.s32.totalorder %s19, 0
    %p218 = por %p216, %p217
    %p219 = scmp.ne.s32.totalorder %s207, %s208
    %p220 = scmp.eq.s32.totalorder %s20, 1
    %p221 = por %p219, %p220
    %p223 = scmp.ne.s32.totalorder %s208, %s222
    %p224 = scmp.eq.s32.totalorder %s20, 0
    %p225 = por %p223, %p224
    %s226 = ssub.s32 %s21, %s33
    %s227 = ssub.s32 %s22, %s29
    %s228 = sor.u32 %s226, %s227
    %p229 = scmp.eq.s32.totalorder %s228, 0
    %s231 = sadd.s32 %s230, 1
    %s232 = scalar_select %p229, %s230, %s231
    %p235 = pneg %p229
    %p236 = scmp.eq.s32.totalorder %s14, 1
    %p237 = por %p235, %p236
    %p238 = scmp.ne.s32.totalorder %s230, %s233
    %p239 = scmp.eq.s32.totalorder %s14, 0
    %p240 = por %p238, %p239
    %p241 = scmp.ne.s32.totalorder %s230, %s233
    %p242 = scmp.eq.s32.totalorder %s19, 1
    %p243 = por %p241, %p242
    %p244 = scmp.ne.s32.totalorder %s233, %s234
    %p245 = scmp.eq.s32.totalorder %s19, 0
    %p246 = por %p244, %p245
    %p247 = scmp.ne.s32.totalorder %s233, %s234
    %p248 = scmp.eq.s32.totalorder %s20, 1
    %p249 = por %p247, %p248
    %p251 = scmp.ne.s32.totalorder %s234, %s250
    %p252 = scmp.eq.s32.totalorder %s20, 0
    %p253 = por %p251, %p252
    %p254 = scmp.le.s32.totalorder 1, %s14
    %p255 = scmp.lt.s32.totalorder %s14, 3
    %p256 = pnand %p254, %p255
    %p257 = pneg %p256
    // Predicated region
    $region9: #{transformer_forward.37} parent=5 // pred_check
      _
    $region10: #{transformer_forward.37} parent=5 // pred_check_branch
      %259 = sbr.rel (%p256) target = $region12
    $region11: #{transformer_forward.37} parent=5 // pred_region
      %s260 = ssub.s32 %s14, 1
      // Predicated region
      $region13: #{transformer_forward.37} parent=11 // pred_check
        %p261 = pneg %p127
      $region14: #{transformer_forward.37} parent=11 // pred_check_branch
        %263 = sbr.rel (%p261) target = $region16
      $region15: #{transformer_forward.37} parent=11 // pred_region
        _
      $region16: #{transformer_forward.37} parent=11 // pred_fallthru
        _
      // Predicated region
      $region17: #{transformer_forward.37} parent=11 // pred_check
        %p264 = pneg %p148
      $region18: #{transformer_forward.37} parent=11 // pred_check_branch
        %266 = sbr.rel (%p264) target = $region20
      $region19: #{transformer_forward.37} parent=11 // pred_region
        _
      $region20: #{transformer_forward.37} parent=11 // pred_fallthru
        _
      // Predicated region
      $region21: #{transformer_forward.37} parent=11 // pred_check
        %p267 = pneg %p197
      $region22: #{transformer_forward.37} parent=11 // pred_check_branch
        %269 = sbr.rel (%p267) target = $region24
      $region23: #{transformer_forward.37} parent=11 // pred_region
        _
      $region24: #{transformer_forward.37} parent=11 // pred_fallthru
        _
      // Predicated region
      $region25: #{transformer_forward.37} parent=11 // pred_check
        %p270 = pneg %p218
      $region26: #{transformer_forward.37} parent=11 // pred_check_branch
        %272 = sbr.rel (%p270) target = $region28
      $region27: #{transformer_forward.37} parent=11 // pred_region
        _
      $region28: #{transformer_forward.37} parent=11 // pred_fallthru
        _
    $region12: #{transformer_forward.37} parent=5 // pred_fallthru
      _
    %p273 = scmp.lt.s32.totalorder %s14, 2
    // Predicated region
    $region29: #{transformer_forward.37} parent=5 // pred_check
      %p274 = pneg %p273
    $region30: #{transformer_forward.37} parent=5 // pred_check_branch
      %276 = sbr.rel (%p274) target = $region32
    $region31: #{transformer_forward.37} parent=5 // pred_region
      // Predicated region
      $region33: #{transformer_forward.37} parent=31 // pred_check
        %p277 = pneg %p48
      $region34: #{transformer_forward.37} parent=31 // pred_check_branch
        %279 = sbr.rel (%p277) target = $region36
      $region35: #{transformer_forward.37} parent=31 // pred_region
        %p280 = scmp.lt.s32.totalorder %s21, 1
        %s281 = scalar_select %p280, %s21, 1
        %p282 = scmp.lt.s32.totalorder %s22, 0
        %s283 = scalar_select %p282, %s22, 0
        %s284 = sadd.s32 %s283, %s281
        %s285 = smul.addr %s284, 8
        %s286 = scalar_lea.vmem %s0, %s285
      $region36: #{transformer_forward.37} parent=31 // pred_fallthru
        _
      // Predicated region
      $region37: #{transformer_forward.37} parent=31 // pred_check
        %p287 = pneg %p74
      $region38: #{transformer_forward.37} parent=31 // pred_check_branch
        %289 = sbr.rel (%p287) target = $region40
      $region39: #{transformer_forward.37} parent=31 // pred_region
        %p290 = scmp.lt.s32.totalorder %s21, 1
        %s291 = scalar_select %p290, %s21, 1
        %s292 = smul.addr %s291, 2
        %s293 = smul.addr %s292, 8
        %s294 = scalar_lea.vmem %s1, %s293
      $region40: #{transformer_forward.37} parent=31 // pred_fallthru
        _
      // Predicated region
      $region41: #{transformer_forward.37} parent=31 // pred_check
        %p295 = pneg %p100
      $region42: #{transformer_forward.37} parent=31 // pred_check_branch
        %297 = sbr.rel (%p295) target = $region44
      $region43: #{transformer_forward.37} parent=31 // pred_region
        %p298 = scmp.lt.s32.totalorder %s21, 1
        %s299 = scalar_select %p298, %s21, 1
        %s300 = smul.addr %s299, 2
        %s301 = sadd.s32 1, %s300
        %s302 = smul.addr %s301, 8
        %s303 = scalar_lea.vmem %s2, %s302
      $region44: #{transformer_forward.37} parent=31 // pred_fallthru
        _
      // Predicated region
      $region45: #{transformer_forward.37} parent=31 // pred_check
        %p304 = pneg %p170
      $region46: #{transformer_forward.37} parent=31 // pred_check_branch
        %306 = sbr.rel (%p304) target = $region48
      $region47: #{transformer_forward.37} parent=31 // pred_region
        %p307 = scmp.lt.s32.totalorder %s21, 1
        %s308 = scalar_select %p307, %s21, 1
        %p309 = scmp.lt.s32.totalorder %s22, 0
        %s310 = scalar_select %p309, %s22, 0
        %s311 = sadd.s32 %s310, %s308
        %s312 = smul.addr %s311, 8
        %s313 = scalar_lea.vmem %s5, %s312
      $region48: #{transformer_forward.37} parent=31 // pred_fallthru
        _
    $region32: #{transformer_forward.37} parent=5 // pred_fallthru
      _
    %p314 = scmp.le.s32.totalorder 1, %s14
    %p315 = scmp.lt.s32.totalorder %s14, 3
    %p316 = pnand %p314, %p315
    %p317 = pneg %p316
    // Predicated region
    $region49: #{transformer_forward.37} parent=5 // pred_check
      _
    $region50: #{transformer_forward.37} parent=5 // pred_check_branch
      %319 = sbr.rel (%p316) target = $region52
    $region51: #{transformer_forward.37} parent=5 // pred_region
      %s320 = ssub.s32 %s14, 1
      %p321 = scmp.lt.s32.totalorder %s23, 1
      %s322 = scalar_select %p321, %s23, 1
      %p323 = scmp.lt.s32.totalorder %s24, 0
      %s324 = scalar_select %p323, %s24, 0
      %s325 = sadd.s32 %s324, %s322
      %s326 = smul.addr %s325, 8
      %s327 = scalar_lea.vmem %s0, %s326
      %p328 = pneg %p54
      %p329 = pneg %p51
      %p330 = scmp.lt.s32.totalorder %s23, 1
      %s331 = scalar_select %p330, %s23, 1
      %s332 = smul.addr %s331, 2
      %s333 = smul.addr %s332, 8
      %s334 = scalar_lea.vmem %s1, %s333
      %p335 = pneg %p80
      %p336 = pneg %p77
      %p337 = scmp.lt.s32.totalorder %s23, 1
      %s338 = scalar_select %p337, %s23, 1
      %s339 = smul.addr %s338, 2
      %s340 = sadd.s32 1, %s339
      %s341 = smul.addr %s340, 8
      %s342 = scalar_lea.vmem %s2, %s341
      %p343 = pneg %p106
      %p344 = pneg %p103
      %p345 = pneg %p127
      %p346 = pneg %p124
      %p347 = pneg %p148
      %p348 = pneg %p145
      %p349 = scmp.lt.s32.totalorder %s23, 1
      %s350 = scalar_select %p349, %s23, 1
      %p351 = scmp.lt.s32.totalorder %s24, 0
      %s352 = scalar_select %p351, %s24, 0
      %s353 = sadd.s32 %s352, %s350
      %s354 = smul.addr %s353, 8
      %s355 = scalar_lea.vmem %s5, %s354
      %p356 = pneg %p176
      %p357 = pneg %p173
      %p358 = pneg %p197
      %p359 = pneg %p194
      %p360 = pneg %p218
      %p361 = pneg %p215
      %p362 = pneg %p246
      %p363 = pneg %p243
      %p364 = scmp.lt.s32.totalorder %s23, 1
      %s365 = scalar_select %p364, %s23, 1
      %p366 = scmp.lt.s32.totalorder %s24, 0
      %s367 = scalar_select %p366, %s24, 0
      %s368 = sadd.s32 %s367, %s365
      %s369 = smul.addr %s368, 8
      %s370 = scalar_lea.vmem %s8, %s369
      %p371 = scmp.lt.s32.totalorder %s23, 1
      %s372 = scalar_select %p371, %s23, 1
      %p373 = scmp.lt.s32.totalorder %s24, 0
      %s374 = scalar_select %p373, %s24, 0
      %s375 = sadd.s32 %s374, %s372
      %s376 = smul.addr %s375, 8
      %s377 = scalar_lea.vmem %s0, %s376
      %p378 = scmp.lt.s32.totalorder %s23, 1
      %s379 = scalar_select %p378, %s23, 1
      %s380 = smul.addr %s379, 2
      %s381 = smul.addr %s380, 8
      %s382 = scalar_lea.vmem %s1, %s381
      %p383 = scmp.lt.s32.totalorder %s23, 1
      %s384 = scalar_select %p383, %s23, 1
      %s385 = smul.addr %s384, 2
      %s386 = sadd.s32 1, %s385
      %s387 = smul.addr %s386, 8
      %s388 = scalar_lea.vmem %s2, %s387
      %p389 = scmp.lt.s32.totalorder %s23, 1
      %s390 = scalar_select %p389, %s23, 1
      %p391 = scmp.lt.s32.totalorder %s24, 0
      %s392 = scalar_select %p391, %s24, 0
      %s393 = sadd.s32 %s392, %s390
      %s394 = smul.addr %s393, 8
      %s395 = scalar_lea.vmem %s5, %s394
      %p396 = scmp.lt.s32.totalorder %s23, 1
      %s397 = scalar_select %p396, %s23, 1
      %p398 = scmp.lt.s32.totalorder %s24, 0
      %s399 = scalar_select %p398, %s24, 0
      %s400 = sadd.s32 %s399, %s397
      %s401 = smul.addr %s400, 8
      %s402 = scalar_lea.vmem %s8, %s401
      %v404 = vld [vmem:[%s377] sm:$0xff]
      %v405 = vld [vmem:[%s382] sm:$0xff]
      %v406 = vpack.c.bf16 %v405, %v405
      %v407 = vld [vmem:[%s388] sm:$0xff]
      %v408 = vpack.c.bf16 %v407, %v407
      %v409 = vmul.f32 %v404, 0.17677669
      %v410 = vpack.c.bf16 %v409, %v409
      %vm411 = vcmask 261120
      %v413 = vsel %vm411, %v410, 0
      %v416 = vsel %vm411, %v406, 0
      %418 = vmatprep.subr.bf16.mxu0 0
      %419 = vmatpush1.bf16.xpose.msra.mxu0 %v416
      %420 = vmatprep.subr.bf16.mxu0 0
      %421 = vmatpush1.bf16.xpose.msra.mxu0 0
      %422 = vmatprep.subr.bf16.mxu0 0
      %423 = vmatpush1.bf16.xpose.msra.mxu0 0
      %424 = vmatprep.subr.bf16.mxu0 0
      %425 = vmatpush1.bf16.xpose.msra.mxu0 0
      %426 = vmatprep.subr.bf16.mxu0 0
      %427 = vmatpush1.bf16.xpose.msra.mxu0 0
      %428 = vmatprep.subr.bf16.mxu0 0
      %429 = vmatpush1.bf16.xpose.msra.mxu0 0
      %430 = vmatprep.subr.bf16.mxu0 0
      %431 = vmatpush1.bf16.xpose.msra.mxu0 0
      %432 = vmatprep.subr.bf16.mxu0 0
      %433 = vmatpush1.bf16.xpose.msra.mxu0 0
      %434 = vmatprep.subr.bf16.mxu0 0
      %435 = vmatpush1.bf16.xpose.msra.mxu0 0
      %436 = vmatprep.subr.bf16.mxu0 0
      %437 = vmatpush1.bf16.xpose.msra.mxu0 0
      %438 = vmatprep.subr.bf16.mxu0 0
      %439 = vmatpush1.bf16.xpose.msra.mxu0 0
      %440 = vmatprep.subr.bf16.mxu0 0
      %441 = vmatpush1.bf16.xpose.msra.mxu0 0
      %442 = vmatprep.subr.bf16.mxu0 0
      %443 = vmatpush1.bf16.xpose.msra.mxu0 0
      %444 = vmatprep.subr.bf16.mxu0 0
      %445 = vmatpush1.bf16.xpose.msra.mxu0 0
      %446 = vmatprep.subr.bf16.mxu0 0
      %447 = vmatpush1.bf16.xpose.msra.mxu0 0
      %448 = vmatprep.subr.bf16.mxu0 0
      %449 = vmatpush1.bf16.xpose.msra.mxu0 0
      %450 = vmatprep.mubr.bf16.mxu0 0
      %451 = vmatmul.mubr.bf16.gmra.mrb[0].mxu0 %v413
      %v452 = vpop.f32.mrb[0].mxu0
      %v453 = vadd.f32 0.0, %v452
      %v454 = vpop.f32.mrb[0].mxu0
      %v455 = vpop.f32.mrb[0].mxu0
      %v456 = vpop.f32.mrb[0].mxu0
      %457 = vdwg.mxu0
      %vm458 = vcmask 64512
      %v459 = vsel %vm458, %v453, -inf
      %460 = vmax.xlane.f32.xlu0 %v459
      %v461 = vpop.xlane.xlu0 %460
      %v462 = vsub.f32 %v453, %v461
      %v463 = vmul.f32 %v462, 1.442695
      %v464 = vpow.pop %v463
      %v465 = vsel %vm458, %v464, 0.0
      %466 = vadd.xlane.f32.xlu0 %v465
      %v467 = vpop.xlane.xlu0 %466
      %v468 = vpack.c.bf16 %v464, %v464
      %v470 = vsel %vm458, %v468, 0
      %vm472 = vcmask 1043456
      %v474 = vsel %vm472, %v408, 0
      %476 = vmatprep.subr.bf16.mxu0 0
      %477 = vmatpush1.bf16.msra.mxu0 %v474
      %478 = vmatprep.subr.bf16.mxu0 0
      %479 = vmatpush1.bf16.msra.mxu0 0
      %480 = vmatprep.subr.bf16.mxu0 0
      %481 = vmatpush1.bf16.msra.mxu0 0
      %482 = vmatprep.subr.bf16.mxu0 0
      %483 = vmatpush1.bf16.msra.mxu0 0
      %484 = vmatprep.subr.bf16.mxu0 0
      %485 = vmatpush1.bf16.msra.mxu0 0
      %486 = vmatprep.subr.bf16.mxu0 0
      %487 = vmatpush1.bf16.msra.mxu0 0
      %488 = vmatprep.subr.bf16.mxu0 0
      %489 = vmatpush1.bf16.msra.mxu0 0
      %490 = vmatprep.subr.bf16.mxu0 0
      %491 = vmatpush1.bf16.msra.mxu0 0
      %492 = vmatprep.subr.bf16.mxu0 0
      %493 = vmatpush1.bf16.msra.mxu0 0
      %494 = vmatprep.subr.bf16.mxu0 0
      %495 = vmatpush1.bf16.msra.mxu0 0
      %496 = vmatprep.subr.bf16.mxu0 0
      %497 = vmatpush1.bf16.msra.mxu0 0
      %498 = vmatprep.subr.bf16.mxu0 0
      %499 = vmatpush1.bf16.msra.mxu0 0
      %500 = vmatprep.subr.bf16.mxu0 0
      %501 = vmatpush1.bf16.msra.mxu0 0
      %502 = vmatprep.subr.bf16.mxu0 0
      %503 = vmatpush1.bf16.msra.mxu0 0
      %504 = vmatprep.subr.bf16.mxu0 0
      %505 = vmatpush1.bf16.msra.mxu0 0
      %506 = vmatprep.subr.bf16.mxu0 0
      %507 = vmatpush1.bf16.msra.mxu0 0
      %508 = vmatprep.mubr.bf16.mxu0 0
      %509 = vmatmul.mubr.bf16.gmra.mrb[0].mxu0 %v470
      %v510 = vpop.f32.mrb[0].mxu0
      %v511 = vadd.f32 0.0, %v510
      %v512 = vpop.f32.mrb[0].mxu0
      %v513 = vpop.f32.mrb[0].mxu0
      %v514 = vpop.f32.mrb[0].mxu0
      %515 = vdwg.mxu0
      %v516 = vrcp.pop %v467
      %v517 = vmul.f32 %v511, %v516
      %v518 = vpack.c.bf16 %v517, %v517
      %vm519 = vcmask 257024
      %520 = vst.msk [vmem:[#allocation2] sm:$0xf] %vm519, %v518
      %522 = vrot.lane.b32.xlu0 %v410, 96
      %v523 = vpop.permute.xlu0 %522
      %525 = vrot.lane.b32.xlu0 %v406, 96
      %v526 = vpop.permute.xlu0 %525
      %v528 = vsel %vm411, %v523, 0
      %v531 = vsel %vm411, %v526, 0
      %533 = vmatprep.subr.bf16.mxu0 0
      %534 = vmatpush1.bf16.xpose.msra.mxu0 %v531
      %535 = vmatprep.subr.bf16.mxu0 0
      %536 = vmatpush1.bf16.xpose.msra.mxu0 0
      %537 = vmatprep.subr.bf16.mxu0 0
      %538 = vmatpush1.bf16.xpose.msra.mxu0 0
      %539 = vmatprep.subr.bf16.mxu0 0
      %540 = vmatpush1.bf16.xpose.msra.mxu0 0
      %541 = vmatprep.subr.bf16.mxu0 0
      %542 = vmatpush1.bf16.xpose.msra.mxu0 0
      %543 = vmatprep.subr.bf16.mxu0 0
      %544 = vmatpush1.bf16.xpose.msra.mxu0 0
      %545 = vmatprep.subr.bf16.mxu0 0
      %546 = vmatpush1.bf16.xpose.msra.mxu0 0
      %547 = vmatprep.subr.bf16.mxu0 0
      %548 = vmatpush1.bf16.xpose.msra.mxu0 0
      %549 = vmatprep.subr.bf16.mxu0 0
      %550 = vmatpush1.bf16.xpose.msra.mxu0 0
      %551 = vmatprep.subr.bf16.mxu0 0
      %552 = vmatpush1.bf16.xpose.msra.mxu0 0
      %553 = vmatprep.subr.bf16.mxu0 0
      %554 = vmatpush1.bf16.xpose.msra.mxu0 0
      %555 = vmatprep.subr.bf16.mxu0 0
      %556 = vmatpush1.bf16.xpose.msra.mxu0 0
      %557 = vmatprep.subr.bf16.mxu0 0
      %558 = vmatpush1.bf16.xpose.msra.mxu0 0
      %559 = vmatprep.subr.bf16.mxu0 0
      %560 = vmatpush1.bf16.xpose.msra.mxu0 0
      %561 = vmatprep.subr.bf16.mxu0 0
      %562 = vmatpush1.bf16.xpose.msra.mxu0 0
      %563 = vmatprep.subr.bf16.mxu0 0
      %564 = vmatpush1.bf16.xpose.msra.mxu0 0
      %565 = vmatprep.mubr.bf16.mxu0 0
      %566 = vmatmul.mubr.bf16.gmra.mrb[0].mxu0 %v528
      %v567 = vpop.f32.mrb[0].mxu0
      %v568 = vadd.f32 0.0, %v567
      %v569 = vpop.f32.mrb[0].mxu0
      %v570 = vpop.f32.mrb[0].mxu0
      %v571 = vpop.f32.mrb[0].mxu0
      %572 = vdwg.mxu0
      %v573 = vsel %vm458, %v568, -inf
      %574 = vmax.xlane.f32.xlu0 %v573
      %v575 = vpop.xlane.xlu0 %574
      %v576 = vsub.f32 %v568, %v575
      %v577 = vmul.f32 %v576, 1.442695
      %v578 = vpow.pop %v577
      %v579 = vsel %vm458, %v578, 0.0
      %580 = vadd.xlane.f32.xlu0 %v579
      %v581 = vpop.xlane.xlu0 %580
      %v582 = vpack.c.bf16 %v578, %v578
      %584 = vrot.lane.b32.xlu0 %v408, 96
      %v585 = vpop.permute.xlu0 %584
      %v587 = vsel %vm458, %v582, 0
      %v590 = vsel %vm472, %v585, 0
      %592 = vmatprep.subr.bf16.mxu0 0
      %593 = vmatpush1.bf16.msra.mxu0 %v590
      %594 = vmatprep.subr.bf16.mxu0 0
      %595 = vmatpush1.bf16.msra.mxu0 0
      %596 = vmatprep.subr.bf16.mxu0 0
      %597 = vmatpush1.bf16.msra.mxu0 0
      %598 = vmatprep.subr.bf16.mxu0 0
      %599 = vmatpush1.bf16.msra.mxu0 0
      %600 = vmatprep.subr.bf16.mxu0 0
      %601 = vmatpush1.bf16.msra.mxu0 0
      %602 = vmatprep.subr.bf16.mxu0 0
      %603 = vmatpush1.bf16.msra.mxu0 0
      %604 = vmatprep.subr.bf16.mxu0 0
      %605 = vmatpush1.bf16.msra.mxu0 0
      %606 = vmatprep.subr.bf16.mxu0 0
      %607 = vmatpush1.bf16.msra.mxu0 0
      %608 = vmatprep.subr.bf16.mxu0 0
      %609 = vmatpush1.bf16.msra.mxu0 0
      %610 = vmatprep.subr.bf16.mxu0 0
      %611 = vmatpush1.bf16.msra.mxu0 0
      %612 = vmatprep.subr.bf16.mxu0 0
      %613 = vmatpush1.bf16.msra.mxu0 0
      %614 = vmatprep.subr.bf16.mxu0 0
      %615 = vmatpush1.bf16.msra.mxu0 0
      %616 = vmatprep.subr.bf16.mxu0 0
      %617 = vmatpush1.bf16.msra.mxu0 0
      %618 = vmatprep.subr.bf16.mxu0 0
      %619 = vmatpush1.bf16.msra.mxu0 0
      %620 = vmatprep.subr.bf16.mxu0 0
      %621 = vmatpush1.bf16.msra.mxu0 0
      %622 = vmatprep.subr.bf16.mxu0 0
      %623 = vmatpush1.bf16.msra.mxu0 0
      %624 = vmatprep.mubr.bf16.mxu0 0
      %625 = vmatmul.mubr.bf16.gmra.mrb[0].mxu0 %v587
      %v626 = vpop.f32.mrb[0].mxu0
      %v627 = vadd.f32 0.0, %v626
      %v628 = vpop.f32.mrb[0].mxu0
      %v629 = vpop.f32.mrb[0].mxu0
      %v630 = vpop.f32.mrb[0].mxu0
      %631 = vdwg.mxu0
      %v632 = vrcp.pop %v581
      %v633 = vmul.f32 %v627, %v632
      %v634 = vpack.c.bf16 %v633, %v633
      %v636 = vunpack.c.l.b16 %v634
      %v637 = vpack.c.b16 %v636, %v636
      %638 = vrot.lane.b32.xlu0 %v637, 32
      %v639 = vpop.permute.xlu0 %638
      %vm641 = vcmask 519424
      %642 = vst.msk [vmem:[#allocation2] sm:$0xf] %vm641, %v639
      %643 = vrot.lane.b32.xlu0 %v410, 64
      %v644 = vpop.permute.xlu0 %643
      %645 = vrot.lane.b32.xlu0 %v406, 64
      %v646 = vpop.permute.xlu0 %645
      %v648 = vsel %vm411, %v644, 0
      %v651 = vsel %vm411, %v646, 0
      %653 = vmatprep.subr.bf16.mxu0 0
      %654 = vmatpush1.bf16.xpose.msra.mxu0 %v651
      %655 = vmatprep.subr.bf16.mxu0 0
      %656 = vmatpush1.bf16.xpose.msra.mxu0 0
      %657 = vmatprep.subr.bf16.mxu0 0
      %658 = vmatpush1.bf16.xpose.msra.mxu0 0
      %659 = vmatprep.subr.bf16.mxu0 0
      %660 = vmatpush1.bf16.xpose.msra.mxu0 0
      %661 = vmatprep.subr.bf16.mxu0 0
      %662 = vmatpush1.bf16.xpose.msra.mxu0 0
      %663 = vmatprep.subr.bf16.mxu0 0
      %664 = vmatpush1.bf16.xpose.msra.mxu0 0
      %665 = vmatprep.subr.bf16.mxu0 0
      %666 = vmatpush1.bf16.xpose.msra.mxu0 0
      %667 = vmatprep.subr.bf16.mxu0 0
      %668 = vmatpush1.bf16.xpose.msra.mxu0 0
      %669 = vmatprep.subr.bf16.mxu0 0
      %670 = vmatpush1.bf16.xpose.msra.mxu0 0
      %671 = vmatprep.subr.bf16.mxu0 0
      %672 = vmatpush1.bf16.xpose.msra.mxu0 0
      %673 = vmatprep.subr.bf16.mxu0 0
      %674 = vmatpush1.bf16.xpose.msra.mxu0 0
      %675 = vmatprep.subr.bf16.mxu0 0
      %676 = vmatpush1.bf16.xpose.msra.mxu0 0
      %677 = vmatprep.subr.bf16.mxu0 0
      %678 = vmatpush1.bf16.xpose.msra.mxu0 0
      %679 = vmatprep.subr.bf16.mxu0 0
      %680 = vmatpush1.bf16.xpose.msra.mxu0 0
      %681 = vmatprep.subr.bf16.mxu0 0
      %682 = vmatpush1.bf16.xpose.msra.mxu0 0
      %683 = vmatprep.subr.bf16.mxu0 0
      %684 = vmatpush1.bf16.xpose.msra.mxu0 0
      %685 = vmatprep.mubr.bf16.mxu0 0
      %686 = vmatmul.mubr.bf16.gmra.mrb[0].mxu0 %v648
      %v687 = vpop.f32.mrb[0].mxu0
      %v688 = vadd.f32 0.0, %v687
      %v689 = vpop.f32.mrb[0].mxu0
      %v690 = vpop.f32.mrb[0].mxu0
      %v691 = vpop.f32.mrb[0].mxu0
      %692 = vdwg.mxu0
      %v693 = vsel %vm458, %v688, -inf
      %694 = vmax.xlane.f32.xlu0 %v693
      %v695 = vpop.xlane.xlu0 %694
      %v696 = vsub.f32 %v688, %v695
      %v697 = vmul.f32 %v696, 1.442695
      %v698 = vpow.pop %v697
      %v699 = vsel %vm458, %v698, 0.0
      %700 = vadd.xlane.f32.xlu0 %v699
      %v701 = vpop.xlane.xlu0 %700
      %v702 = vpack.c.bf16 %v698, %v698
      %703 = vrot.lane.b32.xlu0 %v408, 64
      %v704 = vpop.permute.xlu0 %703
      %v706 = vsel %vm458, %v702, 0
      %v709 = vsel %vm472, %v704, 0
      %711 = vmatprep.subr.bf16.mxu0 0
      %712 = vmatpush1.bf16.msra.mxu0 %v709
      %713 = vmatprep.subr.bf16.mxu0 0
      %714 = vmatpush1.bf16.msra.mxu0 0
      %715 = vmatprep.subr.bf16.mxu0 0
      %716 = vmatpush1.bf16.msra.mxu0 0
      %717 = vmatprep.subr.bf16.mxu0 0
      %718 = vmatpush1.bf16.msra.mxu0 0
      %719 = vmatprep.subr.bf16.mxu0 0
      %720 = vmatpush1.bf16.msra.mxu0 0
      %721 = vmatprep.subr.bf16.mxu0 0
      %722 = vmatpush1.bf16.msra.mxu0 0
      %723 = vmatprep.subr.bf16.mxu0 0
      %724 = vmatpush1.bf16.msra.mxu0 0
      %725 = vmatprep.subr.bf16.mxu0 0
      %726 = vmatpush1.bf16.msra.mxu0 0
      %727 = vmatprep.subr.bf16.mxu0 0
      %728 = vmatpush1.bf16.msra.mxu0 0
      %729 = vmatprep.subr.bf16.mxu0 0
      %730 = vmatpush1.bf16.msra.mxu0 0
      %731 = vmatprep.subr.bf16.mxu0 0
      %732 = vmatpush1.bf16.msra.mxu0 0
      %733 = vmatprep.subr.bf16.mxu0 0
      %734 = vmatpush1.bf16.msra.mxu0 0
      %735 = vmatprep.subr.bf16.mxu0 0
      %736 = vmatpush1.bf16.msra.mxu0 0
      %737 = vmatprep.subr.bf16.mxu0 0
      %738 = vmatpush1.bf16.msra.mxu0 0
      %739 = vmatprep.subr.bf16.mxu0 0
      %740 = vmatpush1.bf16.msra.mxu0 0
      %741 = vmatprep.subr.bf16.mxu0 0
      %742 = vmatpush1.bf16.msra.mxu0 0
      %743 = vmatprep.mubr.bf16.mxu0 0
      %744 = vmatmul.mubr.bf16.gmra.mrb[0].mxu0 %v706
      %v745 = vpop.f32.mrb[0].mxu0
      %v746 = vadd.f32 0.0, %v745
      %v747 = vpop.f32.mrb[0].mxu0
      %v748 = vpop.f32.mrb[0].mxu0
      %v749 = vpop.f32.mrb[0].mxu0
      %750 = vdwg.mxu0
      %v751 = vrcp.pop %v701
      %v752 = vmul.f32 %v746, %v751
      %v753 = vpack.c.bf16 %v752, %v752
      %v755 = vunpack.c.l.b16 %v753
      %v756 = vpack.c.b16 %v755, %v755
      %757 = vrot.lane.b32.xlu0 %v756, 64
      %v758 = vpop.permute.xlu0 %757
      %vm760 = vcmask 781824
      %761 = vst.msk [vmem:[#allocation2] sm:$0xf] %vm760, %v758
      %762 = vrot.lane.b32.xlu0 %v410, 32
      %v763 = vpop.permute.xlu0 %762
      %764 = vrot.lane.b32.xlu0 %v406, 32
      %v765 = vpop.permute.xlu0 %764
      %v767 = vsel %vm411, %v763, 0
      %v770 = vsel %vm411, %v765, 0
      %772 = vmatprep.subr.bf16.mxu0 0
      %773 = vmatpush1.bf16.xpose.msra.mxu0 %v770
      %774 = vmatprep.subr.bf16.mxu0 0
      %775 = vmatpush1.bf16.xpose.msra.mxu0 0
      %776 = vmatprep.subr.bf16.mxu0 0
      %777 = vmatpush1.bf16.xpose.msra.mxu0 0
      %778 = vmatprep.subr.bf16.mxu0 0
      %779 = vmatpush1.bf16.xpose.msra.mxu0 0
      %780 = vmatprep.subr.bf16.mxu0 0
      %781 = vmatpush1.bf16.xpose.msra.mxu0 0
      %782 = vmatprep.subr.bf16.mxu0 0
      %783 = vmatpush1.bf16.xpose.msra.mxu0 0
      %784 = vmatprep.subr.bf16.mxu0 0
      %785 = vmatpush1.bf16.xpose.msra.mxu0 0
      %786 = vmatprep.subr.bf16.mxu0 0
      %787 = vmatpush1.bf16.xpose.msra.mxu0 0
      %788 = vmatprep.subr.bf16.mxu0 0
      %789 = vmatpush1.bf16.xpose.msra.mxu0 0
      %790 = vmatprep.subr.bf16.mxu0 0
      %791 = vmatpush1.bf16.xpose.msra.mxu0 0
      %792 = vmatprep.subr.bf16.mxu0 0
      %793 = vmatpush1.bf16.xpose.msra.mxu0 0
      %794 = vmatprep.subr.bf16.mxu0 0
      %795 = vmatpush1.bf16.xpose.msra.mxu0 0
      %796 = vmatprep.subr.bf16.mxu0 0
      %797 = vmatpush1.bf16.xpose.msra.mxu0 0
      %798 = vmatprep.subr.bf16.mxu0 0
      %799 = vmatpush1.bf16.xpose.msra.mxu0 0
      %800 = vmatprep.subr.bf16.mxu0 0
      %801 = vmatpush1.bf16.xpose.msra.mxu0 0
      %802 = vmatprep.subr.bf16.mxu0 0
      %803 = vmatpush1.bf16.xpose.msra.mxu0 0
      %804 = vmatprep.mubr.bf16.mxu0 0
      %805 = vmatmul.mubr.bf16.gmra.mrb[0].mxu0 %v767
      %v806 = vpop.f32.mrb[0].mxu0
      %v807 = vadd.f32 0.0, %v806
      %v808 = vpop.f32.mrb[0].mxu0
      %v809 = vpop.f32.mrb[0].mxu0
      %v810 = vpop.f32.mrb[0].mxu0
      %811 = vdwg.mxu0
      %v812 = vsel %vm458, %v807, -inf
      %813 = vmax.xlane.f32.xlu0 %v812
      %v814 = vpop.xlane.xlu0 %813
      %v815 = vsub.f32 %v807, %v814
      %v816 = vmul.f32 %v815, 1.442695
      %v817 = vpow.pop %v816
      %v818 = vsel %vm458, %v817, 0.0
      %819 = vadd.xlane.f32.xlu0 %v818
      %v820 = vpop.xlane.xlu0 %819
      %v821 = vpack.c.bf16 %v817, %v817
      %822 = vrot.lane.b32.xlu0 %v408, 32
      %v823 = vpop.permute.xlu0 %822
      %v825 = vsel %vm458, %v821, 0
      %v828 = vsel %vm472, %v823, 0
      %830 = vmatprep.subr.bf16.mxu0 0
      %831 = vmatpush1.bf16.msra.mxu0 %v828
      %832 = vmatprep.subr.bf16.mxu0 0
      %833 = vmatpush1.bf16.msra.mxu0 0
      %834 = vmatprep.subr.bf16.mxu0 0
      %835 = vmatpush1.bf16.msra.mxu0 0
      %836 = vmatprep.subr.bf16.mxu0 0
      %837 = vmatpush1.bf16.msra.mxu0 0
      %838 = vmatprep.subr.bf16.mxu0 0
      %839 = vmatpush1.bf16.msra.mxu0 0
      %840 = vmatprep.subr.bf16.mxu0 0
      %841 = vmatpush1.bf16.msra.mxu0 0
      %842 = vmatprep.subr.bf16.mxu0 0
      %843 = vmatpush1.bf16.msra.mxu0 0
      %844 = vmatprep.subr.bf16.mxu0 0
      %845 = vmatpush1.bf16.msra.mxu0 0
      %846 = vmatprep.subr.bf16.mxu0 0
      %847 = vmatpush1.bf16.msra.mxu0 0
      %848 = vmatprep.subr.bf16.mxu0 0
      %849 = vmatpush1.bf16.msra.mxu0 0
      %850 = vmatprep.subr.bf16.mxu0 0
      %851 = vmatpush1.bf16.msra.mxu0 0
      %852 = vmatprep.subr.bf16.mxu0 0
      %853 = vmatpush1.bf16.msra.mxu0 0
      %854 = vmatprep.subr.bf16.mxu0 0
      %855 = vmatpush1.bf16.msra.mxu0 0
      %856 = vmatprep.subr.bf16.mxu0 0
      %857 = vmatpush1.bf16.msra.mxu0 0
      %858 = vmatprep.subr.bf16.mxu0 0
      %859 = vmatpush1.bf16.msra.mxu0 0
      %860 = vmatprep.subr.bf16.mxu0 0
      %861 = vmatpush1.bf16.msra.mxu0 0
      %862 = vmatprep.mubr.bf16.mxu0 0
      %863 = vmatmul.mubr.bf16.gmra.mrb[0].mxu0 %v825
      %v864 = vpop.f32.mrb[0].mxu0
      %v865 = vadd.f32 0.0, %v864
      %v866 = vpop.f32.mrb[0].mxu0
      %v867 = vpop.f32.mrb[0].mxu0
      %v868 = vpop.f32.mrb[0].mxu0
      %869 = vdwg.mxu0
      %v870 = vrcp.pop %v820
      %v871 = vmul.f32 %v865, %v870
      %v872 = vpack.c.bf16 %v871, %v871
      %v874 = vunpack.c.l.b16 %v872
      %v875 = vpack.c.b16 %v874, %v874
      %876 = vrot.lane.b32.xlu0 %v875, 96
      %v877 = vpop.permute.xlu0 %876
      %vm879 = vcmask 1044224
      %880 = vst.msk [vmem:[#allocation2] sm:$0xf] %vm879, %v877
      %v881 = vld [vmem:[#allocation2] sm:$0xf]
      %v882 = vld [vmem:[%s3] sm:$0xff]
      %v883 = vld [vmem:[%s3 + $0x8] sm:$0xff]
      %v884 = vld [vmem:[%s3 + $0x10] sm:$0xff]
      %v885 = vld [vmem:[%s3 + $0x18] sm:$0xff]
      %v886 = vld [vmem:[%s3 + $0x20] sm:$0xff]
      %v887 = vld [vmem:[%s3 + $0x28] sm:$0xff]
      %v888 = vld [vmem:[%s3 + $0x30] sm:$0xff]
      %v889 = vld [vmem:[%s3 + $0x38] sm:$0xff]
      %v890 = vld [vmem:[%s3 + $0x40] sm:$0xff]
      %v891 = vld [vmem:[%s3 + $0x48] sm:$0xff]
      %v892 = vld [vmem:[%s3 + $0x50] sm:$0xff]
      %v893 = vld [vmem:[%s3 + $0x58] sm:$0xff]
      %v894 = vld [vmem:[%s3 + $0x60] sm:$0xff]
      %v895 = vld [vmem:[%s3 + $0x68] sm:$0xff]
      %v896 = vld [vmem:[%s3 + $0x70] sm:$0xff]
      %v897 = vld [vmem:[%s3 + $0x78] sm:$0xff]
      %v898 = vpack.c.bf16 %v883, %v882
      %v899 = vpack.c.bf16 %v885, %v884
      %v900 = vpack.c.bf16 %v887, %v886
      %v901 = vpack.c.bf16 %v889, %v888
      %v902 = vpack.c.bf16 %v891, %v890
      %v903 = vpack.c.bf16 %v893, %v892
      %v904 = vpack.c.bf16 %v895, %v894
      %v905 = vpack.c.bf16 %v897, %v896
      %v906 = vld [vmem:[%s4] sm:$0x1]
      %v908 = vlaneseq
      %v909 = vshrl.u32 %v908, 7
      %v910 = vsub.s32 0, %v909
      %v911 = vrot.slane %v906, %v910
      %913 = vmatprep.subr.bf16.mxu0 0
      %914 = vmatpush1.bf16.msra.mxu0 %v898
      %915 = vmatprep.subr.bf16.mxu0 0
      %916 = vmatpush1.bf16.msra.mxu0 %v899
      %917 = vmatprep.subr.bf16.mxu0 0
      %918 = vmatpush1.bf16.msra.mxu0 %v900
      %919 = vmatprep.subr.bf16.mxu0 0
      %920 = vmatpush1.bf16.msra.mxu0 %v901
      %921 = vmatprep.subr.bf16.mxu0 0
      %922 = vmatpush1.bf16.msra.mxu0 %v902
      %923 = vmatprep.subr.bf16.mxu0 0
      %924 = vmatpush1.bf16.msra.mxu0 %v903
      %925 = vmatprep.subr.bf16.mxu0 0
      %926 = vmatpush1.bf16.msra.mxu0 %v904
      %927 = vmatprep.subr.bf16.mxu0 0
      %928 = vmatpush1.bf16.msra.mxu0 %v905
      %929 = vmatprep.subr.bf16.mxu0 0
      %930 = vmatpush1.bf16.msra.mxu0 0
      %931 = vmatprep.subr.bf16.mxu0 0
      %932 = vmatpush1.bf16.msra.mxu0 0
      %933 = vmatprep.subr.bf16.mxu0 0
      %934 = vmatpush1.bf16.msra.mxu0 0
      %935 = vmatprep.subr.bf16.mxu0 0
      %936 = vmatpush1.bf16.msra.mxu0 0
      %937 = vmatprep.subr.bf16.mxu0 0
      %938 = vmatpush1.bf16.msra.mxu0 0
      %939 = vmatprep.subr.bf16.mxu0 0
      %940 = vmatpush1.bf16.msra.mxu0 0
      %941 = vmatprep.subr.bf16.mxu0 0
      %942 = vmatpush1.bf16.msra.mxu0 0
      %943 = vmatprep.subr.bf16.mxu0 0
      %944 = vmatpush1.bf16.msra.mxu0 0
      %945 = vmatprep.mubr.bf16.mxu0 0
      %946 = vmatmul.mubr.bf16.gmra.mrb[0].mxu0 %v881
      %v947 = vpop.f32.mrb[0].mxu0
      %v948 = vadd.f32 %v911, %v947
      %v949 = vpop.f32.mrb[0].mxu0
      %v950 = vpop.f32.mrb[0].mxu0
      %v951 = vpop.f32.mrb[0].mxu0
      %952 = vdwg.mxu0
      %v953 = vld [vmem:[%s395] sm:$0xff]
      %v954 = vadd.f32 %v948, %v953
      %955 = vadd.xlane.f32.xlu0 %v954
      %v956 = vpop.xlane.xlu0 %955
      %v957 = vrcp.pop 128.0
      %v958 = vmul.f32 %v956, %v957
      %v959 = vsub.f32 %v954, %v958
      %v960 = vmul.f32 %v959, %v959
      %961 = vadd.xlane.f32.xlu0 %v960
      %v962 = vpop.xlane.xlu0 %961
      %v963 = vmul.f32 %v962, %v957
      %v964 = vadd.f32 %v963, 1e-05
      %v965 = vrsqrt.pop %v964
      %v966 = vmul.f32 %v959, %v965
      %v967 = vld [vmem:[%s6] sm:$0x1]
      %v969 = vlaneseq
      %v970 = vshrl.u32 %v969, 7
      %v971 = vsub.s32 0, %v970
      %v972 = vrot.slane %v967, %v971
      %v974 = vmul.f32 %v966, %v972
      %v975 = vld [vmem:[%s7] sm:$0x1]
      %v977 = vlaneseq
      %v978 = vshrl.u32 %v977, 7
      %v979 = vsub.s32 0, %v978
      %v980 = vrot.slane %v975, %v979
      %v982 = vadd.f32 %v974, %v980
      %983 = vst [vmem:[%s402] sm:$0xff] %v982
      %p984 = scmp.lt.s32.totalorder %s23, 1
      %s985 = scalar_select %p984, %s23, 1
      %p986 = scmp.lt.s32.totalorder %s24, 0
      %s987 = scalar_select %p986, %s24, 0
      %s988 = sadd.s32 %s987, %s985
      %s989 = smul.addr %s988, 8
      %s990 = scalar_lea.vmem %s8, %s989
      // Predicated region
      $region53: #{transformer_forward.37} parent=51 // pred_check
        %p991 = pneg %p243
      $region54: #{transformer_forward.37} parent=51 // pred_check_branch
        %993 = sbr.rel (%p991) target = $region56
      $region55: #{transformer_forward.37} parent=51 // pred_region
        _
      $region56: #{transformer_forward.37} parent=51 // pred_fallthru
        _
    $region52: #{transformer_forward.37} parent=5 // pred_fallthru
      _
    %p994 = scmp.le.s32.totalorder 2, %s14
    // Predicated region
    $region57: #{transformer_forward.37} parent=5 // pred_check
      %p995 = pneg %p994
    $region58: #{transformer_forward.37} parent=5 // pred_check_branch
      %997 = sbr.rel (%p995) target = $region60
    $region59: #{transformer_forward.37} parent=5 // pred_region
      %s998 = ssub.s32 %s14, 2
      // Predicated region
      $region61: #{transformer_forward.37} parent=59 // pred_check
        %p999 = pneg %p249
      $region62: #{transformer_forward.37} parent=59 // pred_check_branch
        %1001 = sbr.rel (%p999) target = $region64
      $region63: #{transformer_forward.37} parent=59 // pred_region
        %p1002 = scmp.lt.s32.totalorder %s25, 1
        %s1003 = scalar_select %p1002, %s25, 1
        %p1004 = scmp.lt.s32.totalorder %s26, 0
        %s1005 = scalar_select %p1004, %s26, 0
        %s1006 = sadd.s32 %s1005, %s1003
        %s1007 = smul.addr %s1006, 8
        %s1008 = scalar_lea.vmem %s8, %s1007
      $region64: #{transformer_forward.37} parent=59 // pred_fallthru
        _
    $region60: #{transformer_forward.37} parent=5 // pred_fallthru
      _
  $region6: #{transformer_forward.37} parent=0 // loop_footer
    %s18 = sadd.s32 1, %s14
  $region7: #{transformer_forward.37} parent=0 // loop_footer_branch
    %13 = sbr.rel target = $region3
  $region8: #{transformer_forward.37} parent=0 // loop_exit
    _

</llo_original>
